<compile_context>
chip_gen: v7x
topology: tpu7x:2x2x1
jax: 0.10.0
libtpu: 0.0.40
codegen_flags: <defaults>
</compile_context>

<pallas_src>
import numpy as np
import jax
import jax.numpy as jnp
from jax.experimental import pallas as pl
from jax.experimental.pallas import tpu as pltpu


# ----------------------------------------------------------------------------
# Wrapper + fused kernel (one grid step = Bt samples through the whole net)
# ----------------------------------------------------------------------------
def wdcnn1_forward(x_ncw, kp, *, block_batch=None):
    """x_ncw: (B, 1, L) float32 with L % 8 == 0 and L >= 504.  Returns (B, 109)."""
    B, cin, L = x_ncw.shape
    assert cin == 1 and L % 8 == 0
    Lout1 = L // 8 + 1                      # conv1 output length (k=64, s=8, p=32)
    Le1 = (Lout1 // 2) * 2                  # rows actually consumed by MaxPool(2,2)
    assert Le1 >= 64 and Le1 % 64 == 0, \
        "per-sample lengths must stay even through all six pools (e.g. L = 512*k)"

    C = 64
    mm_dtype = kp["w1"].dtype               # f32 (default) or bf16 matmul operands
    Bt = block_batch if block_batch is not None else min(B, 64)
    nT = -(-B // Bt)                        # cdiv
    Bp = nT * Bt

    # ---- conv1 im2col (reshape-based sliding-window gather; exact in f32) ----
    # xcol[b, r, t] == xpad[b, 8r + t], t in [0, 64); only the Le1 rows that the
    # first MaxPool consumes are materialized, flattened per batch tile.
    xp = jnp.pad(x_ncw[:, 0, :], ((0, Bp - B), (32, 32)))          # (Bp, L+64)
    xv = xp.reshape(Bp, (L + 64) // 8, 8)                          # (Bp, rows, 8)
    xcol = jnp.concatenate([xv[:, j:j + Le1, :] for j in range(8)], axis=-1)
    xcol = xcol.reshape(nT, Bt * Le1, C).astype(mm_dtype)          # (nT, Bt*Le1, 64)

    ACC_ROWS = ((Bt * Le1 + 7) // 8) * 8                 # conv-output staging
    HB_ROWS = ((Bt * (Le1 // 2) + 2 + 7) // 8) * 8       # pooled act. + guard rows

    def kernel(xcol_ref, w1_ref, b1_ref, wc_ref, bc_ref, wd_ref, bd_ref,
               out_ref, accbuf, hbuf):
        f32 = jnp.float32
        zrow = jnp.zeros((1, C), f32)

        # ---- conv1: one batch-flat matmul + bias ----
        a = jnp.dot(xcol_ref[0], w1_ref[...], preferred_element_type=f32)
        a = a + b1_ref[...]                                        # (Bt*Le1, 64)
        accbuf[pl.ds(0, Bt * Le1), :] = a                          # single dense store

        # ---- MaxPool(2,2)+ReLU for all Bt samples at once ----
        # per-sample blocks are contiguous with even length, so global stride-2
        # reads never mix samples.
        Lp = Le1 // 2
        m = Bt * Lp
        h = jnp.maximum(jnp.maximum(accbuf[pl.ds(0, m, stride=2), :],
                                    accbuf[pl.ds(1, m, stride=2), :]), 0.0)

        hbuf[0:1, :] = zrow               # left guard row; never overwritten in loop

        # ---- conv2..conv6: guard-row taps + three K=64 tap matmuls each ----
        for i in range(5):
            # taps: h stored once at offset 1; rows 0 / m+1 are zero guards.
            hbuf[pl.ds(1, m), :] = h
            hbuf[pl.ds(m + 1, 1), :] = zrow
            row = jax.lax.broadcasted_iota(jnp.int32, (m, C), 0)
            loc = row % Lp                                   # position within sample
            left = jnp.where(loc == 0, 0.0, hbuf[pl.ds(0, m), :])      # x[l-1]
            right = jnp.where(loc == Lp - 1, 0.0, hbuf[pl.ds(2, m), :])  # x[l+1]
            acc = (jnp.dot(left.astype(mm_dtype), wc_ref[i, 0],
                           preferred_element_type=f32)
                   + jnp.dot(h.astype(mm_dtype), wc_ref[i, 1],
                             preferred_element_type=f32)
                   + jnp.dot(right.astype(mm_dtype), wc_ref[i, 2],
                             preferred_element_type=f32)
                   + bc_ref[i])                                         # (m, 64)
            # MaxPool(2,2)+ReLU, batch-flat again
            accbuf[pl.ds(0, m), :] = acc
            Lp = Lp // 2
            m = Bt * Lp
            h = jnp.maximum(jnp.maximum(accbuf[pl.ds(0, m, stride=2), :],
                                        accbuf[pl.ds(1, m, stride=2), :]), 0.0)

        # ---- global average pool + dense (lane-dense 128-wide store) ----
        if Lp == 1:
            g = h                                                   # (Bt, 64)
        else:
            hbuf[pl.ds(0, m), :] = h
            g = hbuf[pl.ds(0, Bt, stride=Lp), :]
            for j in range(1, Lp):
                g = g + hbuf[pl.ds(j, Bt, stride=Lp), :]
            g = g * jnp.float32(1.0 / Lp)
        logits = jnp.dot(g.astype(mm_dtype), wd_ref[...],
                         preferred_element_type=jnp.float32) + bd_ref[...]
        out_ref[0] = logits.astype(out_ref.dtype)

    out = pl.pallas_call(
        kernel,
        out_shape=jax.ShapeDtypeStruct((nT, Bt, 128), jnp.float32),
        grid_spec=pltpu.PrefetchScalarGridSpec(
            num_scalar_prefetch=0,
            grid=(nT,),
            in_specs=[
                pl.BlockSpec((1, Bt * Le1, C), lambda t: (t, 0, 0)),     # xcol
                pl.BlockSpec(kp["w1"].shape, lambda t: (0, 0)),          # conv1 W
                pl.BlockSpec(kp["b1"].shape, lambda t: (0, 0)),          # conv1 b
                pl.BlockSpec(kp["wc"].shape, lambda t: (0, 0, 0, 0)),    # conv2..6 W
                pl.BlockSpec(kp["bc"].shape, lambda t: (0, 0, 0)),       # conv2..6 b
                pl.BlockSpec(kp["wd"].shape, lambda t: (0, 0)),          # dense W
                pl.BlockSpec(kp["bd"].shape, lambda t: (0, 0)),          # dense b
            ],
            out_specs=pl.BlockSpec((1, Bt, 128), lambda t: (t, 0, 0)),
            scratch_shapes=[
                pltpu.VMEM((ACC_ROWS, C), jnp.float32),   # conv-output staging (pool)
                pltpu.VMEM((HB_ROWS, C), jnp.float32),    # pooled act. + guard rows
            ],
        ),
        compiler_params=pltpu.CompilerParams(
            dimension_semantics=("parallel",)),
    )(xcol, kp["w1"], kp["b1"], kp["wc"], kp["bc"], kp["wd"], kp["bd"])
    return out.reshape(Bp, 128)[:B, :109]


# ----------------------------------------------------------------------------
# Parameter init (PyTorch-style uniform(+-1/sqrt(fan_in))) and kernel packing
# ----------------------------------------------------------------------------
def init_params(key):
    def u(k, shape, fan_in):
        bound = 1.0 / np.sqrt(fan_in)
        return jax.random.uniform(k, shape, jnp.float32, -bound, bound)

    keys = jax.random.split(key, 14)
    conv_shapes = [(16, 1, 64), (32, 16, 3), (64, 32, 3),
                   (64, 64, 3), (64, 64, 3), (64, 64, 3)]
    tp = {}
    for idx, (co, ci, k) in enumerate(conv_shapes, start=1):
        fan = ci * k
        tp[f"w{idx}"] = u(keys[2 * (idx - 1)], (co, ci, k), fan)   # (Cout, Cin, K)
        tp[f"b{idx}"] = u(keys[2 * (idx - 1) + 1], (co,), fan)
    tp["wd"] = u(keys[12], (109, 64), 64)
    tp["bd"] = u(keys[13], (109,), 64)
    return tp


def pack_params(tp, dtype=jnp.float32):
    """PyTorch-layout params -> lane-padded per-tap kernel layout.
    dtype=jnp.bfloat16 enables bf16 MXU operands (f32 accumulation stays)."""
    kp = {}
    # conv1: (16,1,64) -> (64 taps, 64 Cout-padded): row t = tap t.
    w1 = np.zeros((64, 64), np.float32)
    w1[:, :16] = np.asarray(tp["w1"])[:, 0, :].T
    b1 = np.zeros((1, 64), np.float32)
    b1[0, :16] = np.asarray(tp["b1"])
    # conv2..6: (Co,Ci,3) -> (5 layers, 3 taps, Cin->64, Cout->64).
    wc = np.zeros((5, 3, 64, 64), np.float32)
    bc = np.zeros((5, 1, 64), np.float32)
    for i in range(2, 7):
        W = np.asarray(tp[f"w{i}"])
        co, ci, kk = W.shape
        for k in range(kk):
            wc[i - 2, k, :ci, :co] = W[:, :, k].T
        bc[i - 2, 0, :co] = np.asarray(tp[f"b{i}"])
    # dense: (109,64) -> (64,128) lane-padded so the final store is lane-dense.
    wd = np.zeros((64, 128), np.float32)
    wd[:, :109] = np.asarray(tp["wd"]).T
    bd = np.zeros((1, 128), np.float32)
    bd[0, :109] = np.asarray(tp["bd"])

    kp["w1"] = jnp.asarray(w1, dtype)
    kp["b1"] = jnp.asarray(b1)                 # biases stay f32 (added to f32 accum)
    kp["wc"] = jnp.asarray(wc, dtype)
    kp["bc"] = jnp.asarray(bc)
    kp["wd"] = jnp.asarray(wd, dtype)
    kp["bd"] = jnp.asarray(bd)
    return kp


# ----------------------------------------------------------------------------
# Pure-JAX f32 reference (mirrors the PyTorch module) for verification
# ----------------------------------------------------------------------------
def ref_forward(x_ncw, tp):
    prec = jax.lax.Precision.HIGHEST
    def block(x, W, bvec, stride, pad):
        y = jax.lax.conv_general_dilated(
            x, W, window_strides=(stride,), padding=[(pad, pad)],
            dimension_numbers=("NCH", "OIH", "NCH"), precision=prec)
        y = y + bvec[None, :, None]
        Lout = y.shape[2]
        Le = (Lout // 2) * 2
        y = y[:, :, :Le].reshape(y.shape[0], y.shape[1], Le // 2, 2).max(axis=-1)
        return jnp.maximum(y, 0.0)

    h = block(x_ncw, tp["w1"], tp["b1"], 8, 32)
    for i in range(2, 7):
        h = block(h, tp[f"w{i}"], tp[f"b{i}"], 1, 1)
    g = jnp.mean(h, axis=2)                                    # (B, 64)
    return jnp.dot(g, tp["wd"].T, precision=prec) + tp["bd"][None, :]


# ----------------------------------------------------------------------------
if __name__ == "__main__":
    key = jax.random.PRNGKey(0)
    kp_key, kx = jax.random.split(key)
    torch_params = init_params(kp_key)
    kparams = pack_params(torch_params)       # pass dtype=jnp.bfloat16 for v6e/v7x MXU rate

    # L=512: lengths 512 -> conv1 65 -> pool 32 -> 16 -> 8 -> 4 -> 2 -> 1.
    x = jax.random.normal(kx, (2, 1, 512), jnp.float32)        # (batch, channels=1, length)

    fwd = jax.jit(wdcnn1_forward)
    out = jax.block_until_ready(fwd(x, kparams))
    assert out.shape == (2, 109)

    ref = ref_forward(x, torch_params)
    np.testing.assert_allclose(np.asarray(out), np.asarray(ref), rtol=1e-3, atol=1e-3)

    print("KERNEL_OK")
</pallas_src>

<mosaic_0001>
module attributes {stable_mosaic.version = 11 : i64} {
  func.func @kernel(%arg0: i32, %arg1: memref<1x128x64xf32, #tpu.memory_space<vmem>>, %arg2: memref<64x64xf32, #tpu.memory_space<vmem>>, %arg3: memref<1x64xf32, #tpu.memory_space<vmem>>, %arg4: memref<5x3x64x64xf32, #tpu.memory_space<vmem>>, %arg5: memref<5x1x64xf32, #tpu.memory_space<vmem>>, %arg6: memref<64x128xf32, #tpu.memory_space<vmem>>, %arg7: memref<1x128xf32, #tpu.memory_space<vmem>>, %arg8: memref<1x2x128xf32, #tpu.memory_space<vmem>>, %arg9: memref<128x64xf32, #tpu.memory_space<vmem>>, %arg10: memref<72x64xf32, #tpu.memory_space<vmem>>) attributes {dimension_semantics = [#tpu.dimension_semantics<parallel>], iteration_bounds = array<i64: 1>, scalar_prefetch = 0 : i64, scratch_operands = 2 : i64, tpu.core_type = #tpu.core_type<tc>, window_params = [{transform_indices = @transform_0, window_bounds = array<i64: 1, 128, 64>}, {pipeline_mode = #tpu.pipeline_mode<synchronous>, transform_indices = @transform_1, window_bounds = array<i64: 64, 64>}, {pipeline_mode = #tpu.pipeline_mode<synchronous>, transform_indices = @transform_2, window_bounds = array<i64: 1, 64>}, {pipeline_mode = #tpu.pipeline_mode<synchronous>, transform_indices = @transform_3, window_bounds = array<i64: 5, 3, 64, 64>}, {pipeline_mode = #tpu.pipeline_mode<synchronous>, transform_indices = @transform_4, window_bounds = array<i64: 5, 1, 64>}, {pipeline_mode = #tpu.pipeline_mode<synchronous>, transform_indices = @transform_5, window_bounds = array<i64: 64, 128>}, {pipeline_mode = #tpu.pipeline_mode<synchronous>, transform_indices = @transform_6, window_bounds = array<i64: 1, 128>}, {transform_indices = @transform_7, window_bounds = array<i64: 1, 2, 128>}]} {
    %cst = arith.constant 0.000000e+00 : f32
    %0 = vector.broadcast %cst : f32 to vector<1x64xf32>
    %c0 = arith.constant 0 : index
    %c0_0 = arith.constant 0 : index
    %c0_1 = arith.constant 0 : index
    %1 = vector.load %arg1[%c0, %c0_0, %c0_1] : memref<1x128x64xf32, #tpu.memory_space<vmem>>, vector<1x128x64xf32>
    %2 = vector.shape_cast %1 : vector<1x128x64xf32> to vector<128x64xf32>
    %c0_2 = arith.constant 0 : index
    %c0_3 = arith.constant 0 : index
    %3 = vector.load %arg2[%c0_2, %c0_3] : memref<64x64xf32, #tpu.memory_space<vmem>>, vector<64x64xf32>
    %cst_4 = arith.constant dense<0.000000e+00> : vector<128x64xf32>
    %4 = tpu.matmul %2, %3, %cst_4 {dimension_numbers = #tpu.dot_dimension_numbers<[1], [0], [0], [1], [0, 0, 1, 1], [], []>} : vector<128x64xf32>, vector<64x64xf32>, vector<128x64xf32> -> vector<128x64xf32>
    %c0_5 = arith.constant 0 : index
    %c0_6 = arith.constant 0 : index
    %5 = vector.load %arg3[%c0_5, %c0_6] : memref<1x64xf32, #tpu.memory_space<vmem>>, vector<1x64xf32>
    %6 = vector.broadcast %5 : vector<1x64xf32> to vector<128x64xf32>
    %7 = arith.addf %4, %6 : vector<128x64xf32>
    %c0_7 = arith.constant 0 : index
    %c0_8 = arith.constant 0 : index
    %8 = vector.load %arg9[%c0_7, %c0_8] : memref<128x64xf32, #tpu.memory_space<vmem>>, vector<128x64xf32>
    tpu.vector_store %arg9[%c0_7, %c0_8], %7 {strides = array<i32>} : memref<128x64xf32, #tpu.memory_space<vmem>>, vector<128x64xf32>,
    %c0_9 = arith.constant 0 : index
    %c0_10 = arith.constant 0 : index
    %9 = tpu.strided_load %arg9[%c0_9, %c0_10] {strides = array<i32: 2, 1>} : memref<128x64xf32, #tpu.memory_space<vmem>>, vector<64x64xf32>
    %c1 = arith.constant 1 : index
    %c0_11 = arith.constant 0 : index
    %10 = tpu.strided_load %arg9[%c1, %c0_11] {strides = array<i32: 2, 1>} : memref<128x64xf32, #tpu.memory_space<vmem>>, vector<64x64xf32>
    %11 = arith.maximumf %9, %10 : vector<64x64xf32>
    %cst_12 = arith.constant 0.000000e+00 : f32
    %12 = vector.broadcast %cst_12 : f32 to vector<64x64xf32>
    %13 = arith.maximumf %11, %12 : vector<64x64xf32>
    %c0_13 = arith.constant 0 : index
    %c0_14 = arith.constant 0 : index
    %14 = vector.load %arg10[%c0_13, %c0_14] : memref<72x64xf32, #tpu.memory_space<vmem>>, vector<1x64xf32>
    tpu.vector_store %arg10[%c0_13, %c0_14], %0 {strides = array<i32>} : memref<72x64xf32, #tpu.memory_space<vmem>>, vector<1x64xf32>,
    %c1_15 = arith.constant 1 : index
    %c0_16 = arith.constant 0 : index
    %15 = vector.load %arg10[%c1_15, %c0_16] : memref<72x64xf32, #tpu.memory_space<vmem>>, vector<64x64xf32>
    tpu.vector_store %arg10[%c1_15, %c0_16], %13 {strides = array<i32>} : memref<72x64xf32, #tpu.memory_space<vmem>>, vector<64x64xf32>,
    %c65 = arith.constant 65 : index
    %c0_17 = arith.constant 0 : index
    %16 = vector.load %arg10[%c65, %c0_17] : memref<72x64xf32, #tpu.memory_space<vmem>>, vector<1x64xf32>
    tpu.vector_store %arg10[%c65, %c0_17], %0 {strides = array<i32>} : memref<72x64xf32, #tpu.memory_space<vmem>>, vector<1x64xf32>,
    %17 = tpu.iota {dimensions = array<i32: 0>} : vector<64x64xi32>
    %c32_i32 = arith.constant 32 : i32
    %c0_i32 = arith.constant 0 : i32
    %18 = arith.cmpi eq, %c32_i32, %c0_i32 : i32
    %c1_i32 = arith.constant 1 : i32
    %19 = arith.select %18, %c1_i32, %c32_i32 : i32
    %20 = vector.broadcast %19 : i32 to vector<64x64xi32>
    %21 = arith.remsi %17, %20 : vector<64x64xi32>
    %c0_i32_18 = arith.constant 0 : i32
    %22 = vector.broadcast %c0_i32_18 : i32 to vector<64x64xi32>
    %23 = arith.cmpi ne, %21, %22 : vector<64x64xi32>
    %c0_i32_19 = arith.constant 0 : i32
    %24 = vector.broadcast %c0_i32_19 : i32 to vector<64x64xi32>
    %25 = arith.cmpi slt, %21, %24 : vector<64x64xi32>
    %c0_i32_20 = arith.constant 0 : i32
    %26 = arith.cmpi slt, %19, %c0_i32_20 : i32
    %27 = vector.broadcast %26 : i1 to vector<64x64xi1>
    %28 = vector.broadcast %27 : vector<64x64xi1> to vector<64x64xi1>
    %29 = arith.xori %25, %28 : vector<64x64xi1>
    %30 = arith.andi %29, %23 : vector<64x64xi1>
    %31 = vector.broadcast %19 : i32 to vector<64x64xi32>
    %32 = arith.addi %21, %31 : vector<64x64xi32>
    %33 = arith.select %30, %32, %21 : vector<64x64xi1>, vector<64x64xi32>
    %c0_i32_21 = arith.constant 0 : i32
    %34 = vector.broadcast %c0_i32_21 : i32 to vector<64x64xi32>
    %35 = arith.cmpi eq, %33, %34 : vector<64x64xi32>
    %c0_22 = arith.constant 0 : index
    %c0_23 = arith.constant 0 : index
    %36 = vector.load %arg10[%c0_22, %c0_23] : memref<72x64xf32, #tpu.memory_space<vmem>>, vector<64x64xf32>
    %cst_24 = arith.constant 0.000000e+00 : f32
    %37 = vector.broadcast %cst_24 : f32 to vector<64x64xf32>
    %38 = arith.select %35, %37, %36 : vector<64x64xi1>, vector<64x64xf32>
    %c31_i32 = arith.constant 31 : i32
    %39 = vector.broadcast %c31_i32 : i32 to vector<64x64xi32>
    %40 = arith.cmpi eq, %33, %39 : vector<64x64xi32>
    %c2 = arith.constant 2 : index
    %c0_25 = arith.constant 0 : index
    %41 = vector.load %arg10[%c2, %c0_25] : memref<72x64xf32, #tpu.memory_space<vmem>>, vector<64x64xf32>
    %cst_26 = arith.constant 0.000000e+00 : f32
    %42 = vector.broadcast %cst_26 : f32 to vector<64x64xf32>
    %43 = arith.select %40, %42, %41 : vector<64x64xi1>, vector<64x64xf32>
    %c0_27 = arith.constant 0 : index
    %c0_28 = arith.constant 0 : index
    %c0_29 = arith.constant 0 : index
    %c0_30 = arith.constant 0 : index
    %44 = vector.load %arg4[%c0_27, %c0_28, %c0_29, %c0_30] : memref<5x3x64x64xf32, #tpu.memory_space<vmem>>, vector<1x1x64x64xf32>
    %45 = vector.shape_cast %44 : vector<1x1x64x64xf32> to vector<64x64xf32>
    %cst_31 = arith.constant dense<0.000000e+00> : vector<64x64xf32>
    %46 = tpu.matmul %38, %45, %cst_31 {dimension_numbers = #tpu.dot_dimension_numbers<[1], [0], [0], [1], [0, 0, 1, 1], [], []>} : vector<64x64xf32>, vector<64x64xf32>, vector<64x64xf32> -> vector<64x64xf32>
    %c0_32 = arith.constant 0 : index
    %c1_33 = arith.constant 1 : index
    %c0_34 = arith.constant 0 : index
    %c0_35 = arith.constant 0 : index
    %47 = vector.load %arg4[%c0_32, %c1_33, %c0_34, %c0_35] : memref<5x3x64x64xf32, #tpu.memory_space<vmem>>, vector<1x1x64x64xf32>
    %48 = vector.shape_cast %47 : vector<1x1x64x64xf32> to vector<64x64xf32>
    %cst_36 = arith.constant dense<0.000000e+00> : vector<64x64xf32>
    %49 = tpu.matmul %13, %48, %cst_36 {dimension_numbers = #tpu.dot_dimension_numbers<[1], [0], [0], [1], [0, 0, 1, 1], [], []>} : vector<64x64xf32>, vector<64x64xf32>, vector<64x64xf32> -> vector<64x64xf32>
    %50 = arith.addf %46, %49 : vector<64x64xf32>
    %c0_37 = arith.constant 0 : index
    %c2_38 = arith.constant 2 : index
    %c0_39 = arith.constant 0 : index
    %c0_40 = arith.constant 0 : index
    %51 = vector.load %arg4[%c0_37, %c2_38, %c0_39, %c0_40] : memref<5x3x64x64xf32, #tpu.memory_space<vmem>>, vector<1x1x64x64xf32>
    %52 = vector.shape_cast %51 : vector<1x1x64x64xf32> to vector<64x64xf32>
    %cst_41 = arith.constant dense<0.000000e+00> : vector<64x64xf32>
    %53 = tpu.matmul %43, %52, %cst_41 {dimension_numbers = #tpu.dot_dimension_numbers<[1], [0], [0], [1], [0, 0, 1, 1], [], []>} : vector<64x64xf32>, vector<64x64xf32>, vector<64x64xf32> -> vector<64x64xf32>
    %54 = arith.addf %50, %53 : vector<64x64xf32>
    %c0_42 = arith.constant 0 : index
    %c0_43 = arith.constant 0 : index
    %c0_44 = arith.constant 0 : index
    %55 = vector.load %arg5[%c0_42, %c0_43, %c0_44] : memref<5x1x64xf32, #tpu.memory_space<vmem>>, vector<1x1x64xf32>
    %56 = vector.shape_cast %55 : vector<1x1x64xf32> to vector<1x64xf32>
    %57 = vector.broadcast %56 : vector<1x64xf32> to vector<64x64xf32>
    %58 = arith.addf %54, %57 : vector<64x64xf32>
    %c0_45 = arith.constant 0 : index
    %c0_46 = arith.constant 0 : index
    %59 = vector.load %arg9[%c0_45, %c0_46] : memref<128x64xf32, #tpu.memory_space<vmem>>, vector<64x64xf32>
    tpu.vector_store %arg9[%c0_45, %c0_46], %58 {strides = array<i32>} : memref<128x64xf32, #tpu.memory_space<vmem>>, vector<64x64xf32>,
    %c0_47 = arith.constant 0 : index
    %c0_48 = arith.constant 0 : index
    %60 = tpu.strided_load %arg9[%c0_47, %c0_48] {strides = array<i32: 2, 1>} : memref<128x64xf32, #tpu.memory_space<vmem>>, vector<32x64xf32>
    %c1_49 = arith.constant 1 : index
    %c0_50 = arith.constant 0 : index
    %61 = tpu.strided_load %arg9[%c1_49, %c0_50] {strides = array<i32: 2, 1>} : memref<128x64xf32, #tpu.memory_space<vmem>>, vector<32x64xf32>
    %62 = arith.maximumf %60, %61 : vector<32x64xf32>
    %cst_51 = arith.constant 0.000000e+00 : f32
    %63 = vector.broadcast %cst_51 : f32 to vector<32x64xf32>
    %64 = arith.maximumf %62, %63 : vector<32x64xf32>
    %c1_52 = arith.constant 1 : index
    %c0_53 = arith.constant 0 : index
    %65 = vector.load %arg10[%c1_52, %c0_53] : memref<72x64xf32, #tpu.memory_space<vmem>>, vector<32x64xf32>
    tpu.vector_store %arg10[%c1_52, %c0_53], %64 {strides = array<i32>} : memref<72x64xf32, #tpu.memory_space<vmem>>, vector<32x64xf32>,
    %c33 = arith.constant 33 : index
    %c0_54 = arith.constant 0 : index
    %66 = vector.load %arg10[%c33, %c0_54] : memref<72x64xf32, #tpu.memory_space<vmem>>, vector<1x64xf32>
    tpu.vector_store %arg10[%c33, %c0_54], %0 {strides = array<i32>} : memref<72x64xf32, #tpu.memory_space<vmem>>, vector<1x64xf32>,
    %67 = tpu.iota {dimensions = array<i32: 0>} : vector<32x64xi32>
    %c16_i32 = arith.constant 16 : i32
    %c0_i32_55 = arith.constant 0 : i32
    %68 = arith.cmpi eq, %c16_i32, %c0_i32_55 : i32
    %c1_i32_56 = arith.constant 1 : i32
    %69 = arith.select %68, %c1_i32_56, %c16_i32 : i32
    %70 = vector.broadcast %69 : i32 to vector<32x64xi32>
    %71 = arith.remsi %67, %70 : vector<32x64xi32>
    %c0_i32_57 = arith.constant 0 : i32
    %72 = vector.broadcast %c0_i32_57 : i32 to vector<32x64xi32>
    %73 = arith.cmpi ne, %71, %72 : vector<32x64xi32>
    %c0_i32_58 = arith.constant 0 : i32
    %74 = vector.broadcast %c0_i32_58 : i32 to vector<32x64xi32>
    %75 = arith.cmpi slt, %71, %74 : vector<32x64xi32>
    %c0_i32_59 = arith.constant 0 : i32
    %76 = arith.cmpi slt, %69, %c0_i32_59 : i32
    %77 = vector.broadcast %76 : i1 to vector<32x64xi1>
    %78 = vector.broadcast %77 : vector<32x64xi1> to vector<32x64xi1>
    %79 = arith.xori %75, %78 : vector<32x64xi1>
    %80 = arith.andi %79, %73 : vector<32x64xi1>
    %81 = vector.broadcast %69 : i32 to vector<32x64xi32>
    %82 = arith.addi %71, %81 : vector<32x64xi32>
    %83 = arith.select %80, %82, %71 : vector<32x64xi1>, vector<32x64xi32>
    %c0_i32_60 = arith.constant 0 : i32
    %84 = vector.broadcast %c0_i32_60 : i32 to vector<32x64xi32>
    %85 = arith.cmpi eq, %83, %84 : vector<32x64xi32>
    %c0_61 = arith.constant 0 : index
    %c0_62 = arith.constant 0 : index
    %86 = vector.load %arg10[%c0_61, %c0_62] : memref<72x64xf32, #tpu.memory_space<vmem>>, vector<32x64xf32>
    %cst_63 = arith.constant 0.000000e+00 : f32
    %87 = vector.broadcast %cst_63 : f32 to vector<32x64xf32>
    %88 = arith.select %85, %87, %86 : vector<32x64xi1>, vector<32x64xf32>
    %c15_i32 = arith.constant 15 : i32
    %89 = vector.broadcast %c15_i32 : i32 to vector<32x64xi32>
    %90 = arith.cmpi eq, %83, %89 : vector<32x64xi32>
    %c2_64 = arith.constant 2 : index
    %c0_65 = arith.constant 0 : index
    %91 = vector.load %arg10[%c2_64, %c0_65] : memref<72x64xf32, #tpu.memory_space<vmem>>, vector<32x64xf32>
    %cst_66 = arith.constant 0.000000e+00 : f32
    %92 = vector.broadcast %cst_66 : f32 to vector<32x64xf32>
    %93 = arith.select %90, %92, %91 : vector<32x64xi1>, vector<32x64xf32>
    %c1_67 = arith.constant 1 : index
    %c0_68 = arith.constant 0 : index
    %c0_69 = arith.constant 0 : index
    %c0_70 = arith.constant 0 : index
    %94 = vector.load %arg4[%c1_67, %c0_68, %c0_69, %c0_70] : memref<5x3x64x64xf32, #tpu.memory_space<vmem>>, vector<1x1x64x64xf32>
    %95 = vector.shape_cast %94 : vector<1x1x64x64xf32> to vector<64x64xf32>
    %cst_71 = arith.constant dense<0.000000e+00> : vector<32x64xf32>
    %96 = tpu.matmul %88, %95, %cst_71 {dimension_numbers = #tpu.dot_dimension_numbers<[1], [0], [0], [1], [0, 0, 1, 1], [], []>} : vector<32x64xf32>, vector<64x64xf32>, vector<32x64xf32> -> vector<32x64xf32>
    %c1_72 = arith.constant 1 : index
    %c1_73 = arith.constant 1 : index
    %c0_74 = arith.constant 0 : index
    %c0_75 = arith.constant 0 : index
    %97 = vector.load %arg4[%c1_72, %c1_73, %c0_74, %c0_75] : memref<5x3x64x64xf32, #tpu.memory_space<vmem>>, vector<1x1x64x64xf32>
    %98 = vector.shape_cast %97 : vector<1x1x64x64xf32> to vector<64x64xf32>
    %cst_76 = arith.constant dense<0.000000e+00> : vector<32x64xf32>
    %99 = tpu.matmul %64, %98, %cst_76 {dimension_numbers = #tpu.dot_dimension_numbers<[1], [0], [0], [1], [0, 0, 1, 1], [], []>} : vector<32x64xf32>, vector<64x64xf32>, vector<32x64xf32> -> vector<32x64xf32>
    %100 = arith.addf %96, %99 : vector<32x64xf32>
    %c1_77 = arith.constant 1 : index
    %c2_78 = arith.constant 2 : index
    %c0_79 = arith.constant 0 : index
    %c0_80 = arith.constant 0 : index
    %101 = vector.load %arg4[%c1_77, %c2_78, %c0_79, %c0_80] : memref<5x3x64x64xf32, #tpu.memory_space<vmem>>, vector<1x1x64x64xf32>
    %102 = vector.shape_cast %101 : vector<1x1x64x64xf32> to vector<64x64xf32>
    %cst_81 = arith.constant dense<0.000000e+00> : vector<32x64xf32>
    %103 = tpu.matmul %93, %102, %cst_81 {dimension_numbers = #tpu.dot_dimension_numbers<[1], [0], [0], [1], [0, 0, 1, 1], [], []>} : vector<32x64xf32>, vector<64x64xf32>, vector<32x64xf32> -> vector<32x64xf32>
    %104 = arith.addf %100, %103 : vector<32x64xf32>
    %c1_82 = arith.constant 1 : index
    %c0_83 = arith.constant 0 : index
    %c0_84 = arith.constant 0 : index
    %105 = vector.load %arg5[%c1_82, %c0_83, %c0_84] : memref<5x1x64xf32, #tpu.memory_space<vmem>>, vector<1x1x64xf32>
    %106 = vector.shape_cast %105 : vector<1x1x64xf32> to vector<1x64xf32>
    %107 = vector.broadcast %106 : vector<1x64xf32> to vector<32x64xf32>
    %108 = arith.addf %104, %107 : vector<32x64xf32>
    %c0_85 = arith.constant 0 : index
    %c0_86 = arith.constant 0 : index
    %109 = vector.load %arg9[%c0_85, %c0_86] : memref<128x64xf32, #tpu.memory_space<vmem>>, vector<32x64xf32>
    tpu.vector_store %arg9[%c0_85, %c0_86], %108 {strides = array<i32>} : memref<128x64xf32, #tpu.memory_space<vmem>>, vector<32x64xf32>,
    %c0_87 = arith.constant 0 : index
    %c0_88 = arith.constant 0 : index
    %110 = tpu.strided_load %arg9[%c0_87, %c0_88] {strides = array<i32: 2, 1>} : memref<128x64xf32, #tpu.memory_space<vmem>>, vector<16x64xf32>
    %c1_89 = arith.constant 1 : index
    %c0_90 = arith.constant 0 : index
    %111 = tpu.strided_load %arg9[%c1_89, %c0_90] {strides = array<i32: 2, 1>} : memref<128x64xf32, #tpu.memory_space<vmem>>, vector<16x64xf32>
    %112 = arith.maximumf %110, %111 : vector<16x64xf32>
    %cst_91 = arith.constant 0.000000e+00 : f32
    %113 = vector.broadcast %cst_91 : f32 to vector<16x64xf32>
    %114 = arith.maximumf %112, %113 : vector<16x64xf32>
    %c1_92 = arith.constant 1 : index
    %c0_93 = arith.constant 0 : index
    %115 = vector.load %arg10[%c1_92, %c0_93] : memref<72x64xf32, #tpu.memory_space<vmem>>, vector<16x64xf32>
    tpu.vector_store %arg10[%c1_92, %c0_93], %114 {strides = array<i32>} : memref<72x64xf32, #tpu.memory_space<vmem>>, vector<16x64xf32>,
    %c17 = arith.constant 17 : index
    %c0_94 = arith.constant 0 : index
    %116 = vector.load %arg10[%c17, %c0_94] : memref<72x64xf32, #tpu.memory_space<vmem>>, vector<1x64xf32>
    tpu.vector_store %arg10[%c17, %c0_94], %0 {strides = array<i32>} : memref<72x64xf32, #tpu.memory_space<vmem>>, vector<1x64xf32>,
    %117 = tpu.iota {dimensions = array<i32: 0>} : vector<16x64xi32>
    %c8_i32 = arith.constant 8 : i32
    %c0_i32_95 = arith.constant 0 : i32
    %118 = arith.cmpi eq, %c8_i32, %c0_i32_95 : i32
    %c1_i32_96 = arith.constant 1 : i32
    %119 = arith.select %118, %c1_i32_96, %c8_i32 : i32
    %120 = vector.broadcast %119 : i32 to vector<16x64xi32>
    %121 = arith.remsi %117, %120 : vector<16x64xi32>
    %c0_i32_97 = arith.constant 0 : i32
    %122 = vector.broadcast %c0_i32_97 : i32 to vector<16x64xi32>
    %123 = arith.cmpi ne, %121, %122 : vector<16x64xi32>
    %c0_i32_98 = arith.constant 0 : i32
    %124 = vector.broadcast %c0_i32_98 : i32 to vector<16x64xi32>
    %125 = arith.cmpi slt, %121, %124 : vector<16x64xi32>
    %c0_i32_99 = arith.constant 0 : i32
    %126 = arith.cmpi slt, %119, %c0_i32_99 : i32
    %127 = vector.broadcast %126 : i1 to vector<16x64xi1>
    %128 = vector.broadcast %127 : vector<16x64xi1> to vector<16x64xi1>
    %129 = arith.xori %125, %128 : vector<16x64xi1>
    %130 = arith.andi %129, %123 : vector<16x64xi1>
    %131 = vector.broadcast %119 : i32 to vector<16x64xi32>
    %132 = arith.addi %121, %131 : vector<16x64xi32>
    %133 = arith.select %130, %132, %121 : vector<16x64xi1>, vector<16x64xi32>
    %c0_i32_100 = arith.constant 0 : i32
    %134 = vector.broadcast %c0_i32_100 : i32 to vector<16x64xi32>
    %135 = arith.cmpi eq, %133, %134 : vector<16x64xi32>
    %c0_101 = arith.constant 0 : index
    %c0_102 = arith.constant 0 : index
    %136 = vector.load %arg10[%c0_101, %c0_102] : memref<72x64xf32, #tpu.memory_space<vmem>>, vector<16x64xf32>
    %cst_103 = arith.constant 0.000000e+00 : f32
    %137 = vector.broadcast %cst_103 : f32 to vector<16x64xf32>
    %138 = arith.select %135, %137, %136 : vector<16x64xi1>, vector<16x64xf32>
    %c7_i32 = arith.constant 7 : i32
    %139 = vector.broadcast %c7_i32 : i32 to vector<16x64xi32>
    %140 = arith.cmpi eq, %133, %139 : vector<16x64xi32>
    %c2_104 = arith.constant 2 : index
    %c0_105 = arith.constant 0 : index
    %141 = vector.load %arg10[%c2_104, %c0_105] : memref<72x64xf32, #tpu.memory_space<vmem>>, vector<16x64xf32>
    %cst_106 = arith.constant 0.000000e+00 : f32
    %142 = vector.broadcast %cst_106 : f32 to vector<16x64xf32>
    %143 = arith.select %140, %142, %141 : vector<16x64xi1>, vector<16x64xf32>
    %c2_107 = arith.constant 2 : index
    %c0_108 = arith.constant 0 : index
    %c0_109 = arith.constant 0 : index
    %c0_110 = arith.constant 0 : index
    %144 = vector.load %arg4[%c2_107, %c0_108, %c0_109, %c0_110] : memref<5x3x64x64xf32, #tpu.memory_space<vmem>>, vector<1x1x64x64xf32>
    %145 = vector.shape_cast %144 : vector<1x1x64x64xf32> to vector<64x64xf32>
    %cst_111 = arith.constant dense<0.000000e+00> : vector<16x64xf32>
    %146 = tpu.matmul %138, %145, %cst_111 {dimension_numbers = #tpu.dot_dimension_numbers<[1], [0], [0], [1], [0, 0, 1, 1], [], []>} : vector<16x64xf32>, vector<64x64xf32>, vector<16x64xf32> -> vector<16x64xf32>
    %c2_112 = arith.constant 2 : index
    %c1_113 = arith.constant 1 : index
    %c0_114 = arith.constant 0 : index
    %c0_115 = arith.constant 0 : index
    %147 = vector.load %arg4[%c2_112, %c1_113, %c0_114, %c0_115] : memref<5x3x64x64xf32, #tpu.memory_space<vmem>>, vector<1x1x64x64xf32>
    %148 = vector.shape_cast %147 : vector<1x1x64x64xf32> to vector<64x64xf32>
    %cst_116 = arith.constant dense<0.000000e+00> : vector<16x64xf32>
    %149 = tpu.matmul %114, %148, %cst_116 {dimension_numbers = #tpu.dot_dimension_numbers<[1], [0], [0], [1], [0, 0, 1, 1], [], []>} : vector<16x64xf32>, vector<64x64xf32>, vector<16x64xf32> -> vector<16x64xf32>
    %150 = arith.addf %146, %149 : vector<16x64xf32>
    %c2_117 = arith.constant 2 : index
    %c2_118 = arith.constant 2 : index
    %c0_119 = arith.constant 0 : index
    %c0_120 = arith.constant 0 : index
    %151 = vector.load %arg4[%c2_117, %c2_118, %c0_119, %c0_120] : memref<5x3x64x64xf32, #tpu.memory_space<vmem>>, vector<1x1x64x64xf32>
    %152 = vector.shape_cast %151 : vector<1x1x64x64xf32> to vector<64x64xf32>
    %cst_121 = arith.constant dense<0.000000e+00> : vector<16x64xf32>
    %153 = tpu.matmul %143, %152, %cst_121 {dimension_numbers = #tpu.dot_dimension_numbers<[1], [0], [0], [1], [0, 0, 1, 1], [], []>} : vector<16x64xf32>, vector<64x64xf32>, vector<16x64xf32> -> vector<16x64xf32>
    %154 = arith.addf %150, %153 : vector<16x64xf32>
    %c2_122 = arith.constant 2 : index
    %c0_123 = arith.constant 0 : index
    %c0_124 = arith.constant 0 : index
    %155 = vector.load %arg5[%c2_122, %c0_123, %c0_124] : memref<5x1x64xf32, #tpu.memory_space<vmem>>, vector<1x1x64xf32>
    %156 = vector.shape_cast %155 : vector<1x1x64xf32> to vector<1x64xf32>
    %157 = vector.broadcast %156 : vector<1x64xf32> to vector<16x64xf32>
    %158 = arith.addf %154, %157 : vector<16x64xf32>
    %c0_125 = arith.constant 0 : index
    %c0_126 = arith.constant 0 : index
    %159 = vector.load %arg9[%c0_125, %c0_126] : memref<128x64xf32, #tpu.memory_space<vmem>>, vector<16x64xf32>
    tpu.vector_store %arg9[%c0_125, %c0_126], %158 {strides = array<i32>} : memref<128x64xf32, #tpu.memory_space<vmem>>, vector<16x64xf32>,
    %c0_127 = arith.constant 0 : index
    %c0_128 = arith.constant 0 : index
    %160 = tpu.strided_load %arg9[%c0_127, %c0_128] {strides = array<i32: 2, 1>} : memref<128x64xf32, #tpu.memory_space<vmem>>, vector<8x64xf32>
    %c1_129 = arith.constant 1 : index
    %c0_130 = arith.constant 0 : index
    %161 = tpu.strided_load %arg9[%c1_129, %c0_130] {strides = array<i32: 2, 1>} : memref<128x64xf32, #tpu.memory_space<vmem>>, vector<8x64xf32>
    %162 = arith.maximumf %160, %161 : vector<8x64xf32>
    %cst_131 = arith.constant 0.000000e+00 : f32
    %163 = vector.broadcast %cst_131 : f32 to vector<8x64xf32>
    %164 = arith.maximumf %162, %163 : vector<8x64xf32>
    %c1_132 = arith.constant 1 : index
    %c0_133 = arith.constant 0 : index
    %165 = vector.load %arg10[%c1_132, %c0_133] : memref<72x64xf32, #tpu.memory_space<vmem>>, vector<8x64xf32>
    tpu.vector_store %arg10[%c1_132, %c0_133], %164 {strides = array<i32>} : memref<72x64xf32, #tpu.memory_space<vmem>>, vector<8x64xf32>,
    %c9 = arith.constant 9 : index
    %c0_134 = arith.constant 0 : index
    %166 = vector.load %arg10[%c9, %c0_134] : memref<72x64xf32, #tpu.memory_space<vmem>>, vector<1x64xf32>
    tpu.vector_store %arg10[%c9, %c0_134], %0 {strides = array<i32>} : memref<72x64xf32, #tpu.memory_space<vmem>>, vector<1x64xf32>,
    %167 = tpu.iota {dimensions = array<i32: 0>} : vector<8x64xi32>
    %c4_i32 = arith.constant 4 : i32
    %c0_i32_135 = arith.constant 0 : i32
    %168 = arith.cmpi eq, %c4_i32, %c0_i32_135 : i32
    %c1_i32_136 = arith.constant 1 : i32
    %169 = arith.select %168, %c1_i32_136, %c4_i32 : i32
    %170 = vector.broadcast %169 : i32 to vector<8x64xi32>
    %171 = arith.remsi %167, %170 : vector<8x64xi32>
    %c0_i32_137 = arith.constant 0 : i32
    %172 = vector.broadcast %c0_i32_137 : i32 to vector<8x64xi32>
    %173 = arith.cmpi ne, %171, %172 : vector<8x64xi32>
    %c0_i32_138 = arith.constant 0 : i32
    %174 = vector.broadcast %c0_i32_138 : i32 to vector<8x64xi32>
    %175 = arith.cmpi slt, %171, %174 : vector<8x64xi32>
    %c0_i32_139 = arith.constant 0 : i32
    %176 = arith.cmpi slt, %169, %c0_i32_139 : i32
    %177 = vector.broadcast %176 : i1 to vector<8x64xi1>
    %178 = vector.broadcast %177 : vector<8x64xi1> to vector<8x64xi1>
    %179 = arith.xori %175, %178 : vector<8x64xi1>
    %180 = arith.andi %179, %173 : vector<8x64xi1>
    %181 = vector.broadcast %169 : i32 to vector<8x64xi32>
    %182 = arith.addi %171, %181 : vector<8x64xi32>
    %183 = arith.select %180, %182, %171 : vector<8x64xi1>, vector<8x64xi32>
    %c0_i32_140 = arith.constant 0 : i32
    %184 = vector.broadcast %c0_i32_140 : i32 to vector<8x64xi32>
    %185 = arith.cmpi eq, %183, %184 : vector<8x64xi32>
    %c0_141 = arith.constant 0 : index
    %c0_142 = arith.constant 0 : index
    %186 = vector.load %arg10[%c0_141, %c0_142] : memref<72x64xf32, #tpu.memory_space<vmem>>, vector<8x64xf32>
    %cst_143 = arith.constant 0.000000e+00 : f32
    %187 = vector.broadcast %cst_143 : f32 to vector<8x64xf32>
    %188 = arith.select %185, %187, %186 : vector<8x64xi1>, vector<8x64xf32>
    %c3_i32 = arith.constant 3 : i32
    %189 = vector.broadcast %c3_i32 : i32 to vector<8x64xi32>
    %190 = arith.cmpi eq, %183, %189 : vector<8x64xi32>
    %c2_144 = arith.constant 2 : index
    %c0_145 = arith.constant 0 : index
    %191 = vector.load %arg10[%c2_144, %c0_145] : memref<72x64xf32, #tpu.memory_space<vmem>>, vector<8x64xf32>
    %cst_146 = arith.constant 0.000000e+00 : f32
    %192 = vector.broadcast %cst_146 : f32 to vector<8x64xf32>
    %193 = arith.select %190, %192, %191 : vector<8x64xi1>, vector<8x64xf32>
    %c3 = arith.constant 3 : index
    %c0_147 = arith.constant 0 : index
    %c0_148 = arith.constant 0 : index
    %c0_149 = arith.constant 0 : index
    %194 = vector.load %arg4[%c3, %c0_147, %c0_148, %c0_149] : memref<5x3x64x64xf32, #tpu.memory_space<vmem>>, vector<1x1x64x64xf32>
    %195 = vector.shape_cast %194 : vector<1x1x64x64xf32> to vector<64x64xf32>
    %cst_150 = arith.constant dense<0.000000e+00> : vector<8x64xf32>
    %196 = tpu.matmul %188, %195, %cst_150 {dimension_numbers = #tpu.dot_dimension_numbers<[1], [0], [0], [1], [0, 0, 1, 1], [], []>} : vector<8x64xf32>, vector<64x64xf32>, vector<8x64xf32> -> vector<8x64xf32>
    %c3_151 = arith.constant 3 : index
    %c1_152 = arith.constant 1 : index
    %c0_153 = arith.constant 0 : index
    %c0_154 = arith.constant 0 : index
    %197 = vector.load %arg4[%c3_151, %c1_152, %c0_153, %c0_154] : memref<5x3x64x64xf32, #tpu.memory_space<vmem>>, vector<1x1x64x64xf32>
    %198 = vector.shape_cast %197 : vector<1x1x64x64xf32> to vector<64x64xf32>
    %cst_155 = arith.constant dense<0.000000e+00> : vector<8x64xf32>
    %199 = tpu.matmul %164, %198, %cst_155 {dimension_numbers = #tpu.dot_dimension_numbers<[1], [0], [0], [1], [0, 0, 1, 1], [], []>} : vector<8x64xf32>, vector<64x64xf32>, vector<8x64xf32> -> vector<8x64xf32>
    %200 = arith.addf %196, %199 : vector<8x64xf32>
    %c3_156 = arith.constant 3 : index
    %c2_157 = arith.constant 2 : index
    %c0_158 = arith.constant 0 : index
    %c0_159 = arith.constant 0 : index
    %201 = vector.load %arg4[%c3_156, %c2_157, %c0_158, %c0_159] : memref<5x3x64x64xf32, #tpu.memory_space<vmem>>, vector<1x1x64x64xf32>
    %202 = vector.shape_cast %201 : vector<1x1x64x64xf32> to vector<64x64xf32>
    %cst_160 = arith.constant dense<0.000000e+00> : vector<8x64xf32>
    %203 = tpu.matmul %193, %202, %cst_160 {dimension_numbers = #tpu.dot_dimension_numbers<[1], [0], [0], [1], [0, 0, 1, 1], [], []>} : vector<8x64xf32>, vector<64x64xf32>, vector<8x64xf32> -> vector<8x64xf32>
    %204 = arith.addf %200, %203 : vector<8x64xf32>
    %c3_161 = arith.constant 3 : index
    %c0_162 = arith.constant 0 : index
    %c0_163 = arith.constant 0 : index
    %205 = vector.load %arg5[%c3_161, %c0_162, %c0_163] : memref<5x1x64xf32, #tpu.memory_space<vmem>>, vector<1x1x64xf32>
    %206 = vector.shape_cast %205 : vector<1x1x64xf32> to vector<1x64xf32>
    %207 = vector.broadcast %206 : vector<1x64xf32> to vector<8x64xf32>
    %208 = arith.addf %204, %207 : vector<8x64xf32>
    %c0_164 = arith.constant 0 : index
    %c0_165 = arith.constant 0 : index
    %209 = vector.load %arg9[%c0_164, %c0_165] : memref<128x64xf32, #tpu.memory_space<vmem>>, vector<8x64xf32>
    tpu.vector_store %arg9[%c0_164, %c0_165], %208 {strides = array<i32>} : memref<128x64xf32, #tpu.memory_space<vmem>>, vector<8x64xf32>,
    %c0_166 = arith.constant 0 : index
    %c0_167 = arith.constant 0 : index
    %210 = tpu.strided_load %arg9[%c0_166, %c0_167] {strides = array<i32: 2, 1>} : memref<128x64xf32, #tpu.memory_space<vmem>>, vector<4x64xf32>
    %c1_168 = arith.constant 1 : index
    %c0_169 = arith.constant 0 : index
    %211 = tpu.strided_load %arg9[%c1_168, %c0_169] {strides = array<i32: 2, 1>} : memref<128x64xf32, #tpu.memory_space<vmem>>, vector<4x64xf32>
    %212 = arith.maximumf %210, %211 : vector<4x64xf32>
    %cst_170 = arith.constant 0.000000e+00 : f32
    %213 = vector.broadcast %cst_170 : f32 to vector<4x64xf32>
    %214 = arith.maximumf %212, %213 : vector<4x64xf32>
    %c1_171 = arith.constant 1 : index
    %c0_172 = arith.constant 0 : index
    %215 = vector.load %arg10[%c1_171, %c0_172] : memref<72x64xf32, #tpu.memory_space<vmem>>, vector<4x64xf32>
    tpu.vector_store %arg10[%c1_171, %c0_172], %214 {strides = array<i32>} : memref<72x64xf32, #tpu.memory_space<vmem>>, vector<4x64xf32>,
    %c5 = arith.constant 5 : index
    %c0_173 = arith.constant 0 : index
    %216 = vector.load %arg10[%c5, %c0_173] : memref<72x64xf32, #tpu.memory_space<vmem>>, vector<1x64xf32>
    tpu.vector_store %arg10[%c5, %c0_173], %0 {strides = array<i32>} : memref<72x64xf32, #tpu.memory_space<vmem>>, vector<1x64xf32>,
    %217 = tpu.iota {dimensions = array<i32: 0>} : vector<4x64xi32>
    %c2_i32 = arith.constant 2 : i32
    %c0_i32_174 = arith.constant 0 : i32
    %218 = arith.cmpi eq, %c2_i32, %c0_i32_174 : i32
    %c1_i32_175 = arith.constant 1 : i32
    %219 = arith.select %218, %c1_i32_175, %c2_i32 : i32
    %220 = vector.broadcast %219 : i32 to vector<4x64xi32>
    %221 = arith.remsi %217, %220 : vector<4x64xi32>
    %c0_i32_176 = arith.constant 0 : i32
    %222 = vector.broadcast %c0_i32_176 : i32 to vector<4x64xi32>
    %223 = arith.cmpi ne, %221, %222 : vector<4x64xi32>
    %c0_i32_177 = arith.constant 0 : i32
    %224 = vector.broadcast %c0_i32_177 : i32 to vector<4x64xi32>
    %225 = arith.cmpi slt, %221, %224 : vector<4x64xi32>
    %c0_i32_178 = arith.constant 0 : i32
    %226 = arith.cmpi slt, %219, %c0_i32_178 : i32
    %227 = vector.broadcast %226 : i1 to vector<4x64xi1>
    %228 = vector.broadcast %227 : vector<4x64xi1> to vector<4x64xi1>
    %229 = arith.xori %225, %228 : vector<4x64xi1>
    %230 = arith.andi %229, %223 : vector<4x64xi1>
    %231 = vector.broadcast %219 : i32 to vector<4x64xi32>
    %232 = arith.addi %221, %231 : vector<4x64xi32>
    %233 = arith.select %230, %232, %221 : vector<4x64xi1>, vector<4x64xi32>
    %c0_i32_179 = arith.constant 0 : i32
    %234 = vector.broadcast %c0_i32_179 : i32 to vector<4x64xi32>
    %235 = arith.cmpi eq, %233, %234 : vector<4x64xi32>
    %c0_180 = arith.constant 0 : index
    %c0_181 = arith.constant 0 : index
    %236 = vector.load %arg10[%c0_180, %c0_181] : memref<72x64xf32, #tpu.memory_space<vmem>>, vector<4x64xf32>
    %cst_182 = arith.constant 0.000000e+00 : f32
    %237 = vector.broadcast %cst_182 : f32 to vector<4x64xf32>
    %238 = arith.select %235, %237, %236 : vector<4x64xi1>, vector<4x64xf32>
    %c1_i32_183 = arith.constant 1 : i32
    %239 = vector.broadcast %c1_i32_183 : i32 to vector<4x64xi32>
    %240 = arith.cmpi eq, %233, %239 : vector<4x64xi32>
    %c2_184 = arith.constant 2 : index
    %c0_185 = arith.constant 0 : index
    %241 = vector.load %arg10[%c2_184, %c0_185] : memref<72x64xf32, #tpu.memory_space<vmem>>, vector<4x64xf32>
    %cst_186 = arith.constant 0.000000e+00 : f32
    %242 = vector.broadcast %cst_186 : f32 to vector<4x64xf32>
    %243 = arith.select %240, %242, %241 : vector<4x64xi1>, vector<4x64xf32>
    %c4 = arith.constant 4 : index
    %c0_187 = arith.constant 0 : index
    %c0_188 = arith.constant 0 : index
    %c0_189 = arith.constant 0 : index
    %244 = vector.load %arg4[%c4, %c0_187, %c0_188, %c0_189] : memref<5x3x64x64xf32, #tpu.memory_space<vmem>>, vector<1x1x64x64xf32>
    %245 = vector.shape_cast %244 : vector<1x1x64x64xf32> to vector<64x64xf32>
    %cst_190 = arith.constant dense<0.000000e+00> : vector<4x64xf32>
    %246 = tpu.matmul %238, %245, %cst_190 {dimension_numbers = #tpu.dot_dimension_numbers<[1], [0], [0], [1], [0, 0, 1, 1], [], []>} : vector<4x64xf32>, vector<64x64xf32>, vector<4x64xf32> -> vector<4x64xf32>
    %c4_191 = arith.constant 4 : index
    %c1_192 = arith.constant 1 : index
    %c0_193 = arith.constant 0 : index
    %c0_194 = arith.constant 0 : index
    %247 = vector.load %arg4[%c4_191, %c1_192, %c0_193, %c0_194] : memref<5x3x64x64xf32, #tpu.memory_space<vmem>>, vector<1x1x64x64xf32>
    %248 = vector.shape_cast %247 : vector<1x1x64x64xf32> to vector<64x64xf32>
    %cst_195 = arith.constant dense<0.000000e+00> : vector<4x64xf32>
    %249 = tpu.matmul %214, %248, %cst_195 {dimension_numbers = #tpu.dot_dimension_numbers<[1], [0], [0], [1], [0, 0, 1, 1], [], []>} : vector<4x64xf32>, vector<64x64xf32>, vector<4x64xf32> -> vector<4x64xf32>
    %250 = arith.addf %246, %249 : vector<4x64xf32>
    %c4_196 = arith.constant 4 : index
    %c2_197 = arith.constant 2 : index
    %c0_198 = arith.constant 0 : index
    %c0_199 = arith.constant 0 : index
    %251 = vector.load %arg4[%c4_196, %c2_197, %c0_198, %c0_199] : memref<5x3x64x64xf32, #tpu.memory_space<vmem>>, vector<1x1x64x64xf32>
    %252 = vector.shape_cast %251 : vector<1x1x64x64xf32> to vector<64x64xf32>
    %cst_200 = arith.constant dense<0.000000e+00> : vector<4x64xf32>
    %253 = tpu.matmul %243, %252, %cst_200 {dimension_numbers = #tpu.dot_dimension_numbers<[1], [0], [0], [1], [0, 0, 1, 1], [], []>} : vector<4x64xf32>, vector<64x64xf32>, vector<4x64xf32> -> vector<4x64xf32>
    %254 = arith.addf %250, %253 : vector<4x64xf32>
    %c4_201 = arith.constant 4 : index
    %c0_202 = arith.constant 0 : index
    %c0_203 = arith.constant 0 : index
    %255 = vector.load %arg5[%c4_201, %c0_202, %c0_203] : memref<5x1x64xf32, #tpu.memory_space<vmem>>, vector<1x1x64xf32>
    %256 = vector.shape_cast %255 : vector<1x1x64xf32> to vector<1x64xf32>
    %257 = vector.broadcast %256 : vector<1x64xf32> to vector<4x64xf32>
    %258 = arith.addf %254, %257 : vector<4x64xf32>
    %c0_204 = arith.constant 0 : index
    %c0_205 = arith.constant 0 : index
    %259 = vector.load %arg9[%c0_204, %c0_205] : memref<128x64xf32, #tpu.memory_space<vmem>>, vector<4x64xf32>
    tpu.vector_store %arg9[%c0_204, %c0_205], %258 {strides = array<i32>} : memref<128x64xf32, #tpu.memory_space<vmem>>, vector<4x64xf32>,
    %c0_206 = arith.constant 0 : index
    %c0_207 = arith.constant 0 : index
    %260 = tpu.strided_load %arg9[%c0_206, %c0_207] {strides = array<i32: 2, 1>} : memref<128x64xf32, #tpu.memory_space<vmem>>, vector<2x64xf32>
    %c1_208 = arith.constant 1 : index
    %c0_209 = arith.constant 0 : index
    %261 = tpu.strided_load %arg9[%c1_208, %c0_209] {strides = array<i32: 2, 1>} : memref<128x64xf32, #tpu.memory_space<vmem>>, vector<2x64xf32>
    %262 = arith.maximumf %260, %261 : vector<2x64xf32>
    %cst_210 = arith.constant 0.000000e+00 : f32
    %263 = vector.broadcast %cst_210 : f32 to vector<2x64xf32>
    %264 = arith.maximumf %262, %263 : vector<2x64xf32>
    %c0_211 = arith.constant 0 : index
    %c0_212 = arith.constant 0 : index
    %265 = vector.load %arg6[%c0_211, %c0_212] : memref<64x128xf32, #tpu.memory_space<vmem>>, vector<64x128xf32>
    %cst_213 = arith.constant dense<0.000000e+00> : vector<2x128xf32>
    %266 = tpu.matmul %264, %265, %cst_213 {dimension_numbers = #tpu.dot_dimension_numbers<[1], [0], [0], [1], [0, 0, 1, 1], [], []>} : vector<2x64xf32>, vector<64x128xf32>, vector<2x128xf32> -> vector<2x128xf32>
    %c0_214 = arith.constant 0 : index
    %c0_215 = arith.constant 0 : index
    %267 = vector.load %arg7[%c0_214, %c0_215] : memref<1x128xf32, #tpu.memory_space<vmem>>, vector<1x128xf32>
    %268 = vector.broadcast %267 : vector<1x128xf32> to vector<2x128xf32>
    %269 = arith.addf %266, %268 : vector<2x128xf32>
    %c0_216 = arith.constant 0 : index
    %c0_217 = arith.constant 0 : index
    %c0_218 = arith.constant 0 : index
    %270 = vector.load %arg8[%c0_216, %c0_217, %c0_218] : memref<1x2x128xf32, #tpu.memory_space<vmem>>, vector<1x2x128xf32>
    %271 = vector.shape_cast %270 : vector<1x2x128xf32> to vector<2x128xf32>
    %272 = vector.shape_cast %269 : vector<2x128xf32> to vector<1x2x128xf32>
    tpu.vector_store %arg8[%c0_216, %c0_217, %c0_218], %272 {strides = array<i32>} : memref<1x2x128xf32, #tpu.memory_space<vmem>>, vector<1x2x128xf32>,
    return
  }
  func.func @transform_0(%arg0: i32) -> (i32, i32, i32) {
    %c0_i32 = arith.constant 0 : i32
    %c0_i32_0 = arith.constant 0 : i32
    %c0_i32_1 = arith.constant 0 : i32
    return %arg0, %c0_i32, %c0_i32_0 : i32, i32, i32
  }
  func.func @transform_1(%arg0: i32) -> (i32, i32) {
    %c0_i32 = arith.constant 0 : i32
    %c0_i32_0 = arith.constant 0 : i32
    %c0_i32_1 = arith.constant 0 : i32
    return %c0_i32, %c0_i32_0 : i32, i32
  }
  func.func @transform_2(%arg0: i32) -> (i32, i32) {
    %c0_i32 = arith.constant 0 : i32
    %c0_i32_0 = arith.constant 0 : i32
    %c0_i32_1 = arith.constant 0 : i32
    return %c0_i32, %c0_i32_0 : i32, i32
  }
  func.func @transform_3(%arg0: i32) -> (i32, i32, i32, i32) {
    %c0_i32 = arith.constant 0 : i32
    %c0_i32_0 = arith.constant 0 : i32
    %c0_i32_1 = arith.constant 0 : i32
    %c0_i32_2 = arith.constant 0 : i32
    %c0_i32_3 = arith.constant 0 : i32
    return %c0_i32, %c0_i32_0, %c0_i32_1, %c0_i32_2 : i32, i32, i32, i32
  }
  func.func @transform_4(%arg0: i32) -> (i32, i32, i32) {
    %c0_i32 = arith.constant 0 : i32
    %c0_i32_0 = arith.constant 0 : i32
    %c0_i32_1 = arith.constant 0 : i32
    %c0_i32_2 = arith.constant 0 : i32
    return %c0_i32, %c0_i32_0, %c0_i32_1 : i32, i32, i32
  }
  func.func @transform_5(%arg0: i32) -> (i32, i32) {
    %c0_i32 = arith.constant 0 : i32
    %c0_i32_0 = arith.constant 0 : i32
    %c0_i32_1 = arith.constant 0 : i32
    return %c0_i32, %c0_i32_0 : i32, i32
  }
  func.func @transform_6(%arg0: i32) -> (i32, i32) {
    %c0_i32 = arith.constant 0 : i32
    %c0_i32_0 = arith.constant 0 : i32
    %c0_i32_1 = arith.constant 0 : i32
    return %c0_i32, %c0_i32_0 : i32, i32
  }
  func.func @transform_7(%arg0: i32) -> (i32, i32, i32) {
    %c0_i32 = arith.constant 0 : i32
    %c0_i32_0 = arith.constant 0 : i32
    %c0_i32_1 = arith.constant 0 : i32
    return %arg0, %c0_i32, %c0_i32_0 : i32, i32, i32
  }
}

</mosaic_0001>

<llo_original>
// kernel: wdcnn1_forward.1
$region0: #{wdcnn1_forward.1}
  #allocation0 [shape = 'u32[]', space=smem, size = 0x4, offset = 0x4, fixed_abs, tag = 'smem constant byte address 0x4 - core index']
  #allocation1 [shape = 'u32[144,128]{1,0:T(1,128)}', space=vmem, size = 0x12000, scoped, tag = 'internal scratch']
  #allocation2 [shape = 'f32[128,64]{1,0:T(8,128)}', space=vmem, size = 0x10000, scoped, tag = 'scratch operand']
  #allocation3 [shape = 'f32[72,64]{1,0:T(8,128)}', space=vmem, size = 0x9000, scoped, tag = 'scratch operand']
  %s0 = inlined_call_operand.vmem [shape: f32[1,128,64], index: 0, kind: input, shape index: {}]
  %s1 = inlined_call_operand.vmem [shape: f32[64,64], index: 1, kind: input, shape index: {}]
  %s2 = inlined_call_operand.vmem [shape: f32[1,64], index: 2, kind: input, shape index: {}]
  %s3 = inlined_call_operand.vmem [shape: f32[5,3,64,64], index: 3, kind: input, shape index: {}]
  %s4 = inlined_call_operand.vmem [shape: f32[5,1,64], index: 4, kind: input, shape index: {}]
  %s5 = inlined_call_operand.vmem [shape: f32[64,128], index: 5, kind: input, shape index: {}]
  %s6 = inlined_call_operand.vmem [shape: f32[1,128], index: 6, kind: input, shape index: {}]
  %s7 = inlined_call_operand.hbm [shape: f32[1,2,128], index: 7, kind: output, shape index: {}]
  %s8 = sld [smem:[#allocation0]]
  $region38: #{wdcnn1_forward.1} parent=0
    _
  %s10 = ssub.s32 1, %s8
  %s11 = scalar_select 0, %s10, %s8
  $region1: #{wdcnn1_forward.1} parent=0
    #allocation4 [shape = 'u8[1024]{0}', space=vmem, size = 0x400, scoped, tag = 'output window, operand 0, single buffered']
    #allocation5 [shape = 's32[1]{0}', space=sflag, size = 0x4, scoped, tag = 'scoped memory for wdcnn1_forward.1']
    %12 = vsyncpa [#allocation5], 0
    // Predicated region
    $region2: #{wdcnn1_forward.1} parent=1 // pred_check
      _
    $region3: #{wdcnn1_forward.1} parent=1 // pred_check_branch
      %14 = sbr.rel (0) target = $region5
    $region4: #{wdcnn1_forward.1} parent=1 // pred_region
      _
    $region5: #{wdcnn1_forward.1} parent=1 // pred_fallthru
      _
    // Predicated region
    $region6: #{wdcnn1_forward.1} parent=1 // pred_check
      _
    $region7: #{wdcnn1_forward.1} parent=1 // pred_check_branch
      %16 = sbr.rel (0) target = $region9
    $region8: #{wdcnn1_forward.1} parent=1 // pred_region
      _
    $region9: #{wdcnn1_forward.1} parent=1 // pred_fallthru
      _
    // Predicated region
    $region10: #{wdcnn1_forward.1} parent=1 // pred_check
      _
    $region11: #{wdcnn1_forward.1} parent=1 // pred_check_branch
      %18 = sbr.rel (0) target = $region13
    $region12: #{wdcnn1_forward.1} parent=1 // pred_region
      _
    $region13: #{wdcnn1_forward.1} parent=1 // pred_fallthru
      _
    // Predicated region
    $region14: #{wdcnn1_forward.1} parent=1 // pred_check
      _
    $region15: #{wdcnn1_forward.1} parent=1 // pred_check_branch
      %20 = sbr.rel (0) target = $region17
    $region16: #{wdcnn1_forward.1} parent=1 // pred_region
      _
    $region17: #{wdcnn1_forward.1} parent=1 // pred_fallthru
      _
    // Predicated region
    $region18: #{wdcnn1_forward.1} parent=1 // pred_check
      _
    $region19: #{wdcnn1_forward.1} parent=1 // pred_check_branch
      %22 = sbr.rel (0) target = $region21
    $region20: #{wdcnn1_forward.1} parent=1 // pred_region
      _
    $region21: #{wdcnn1_forward.1} parent=1 // pred_fallthru
      _
    // Predicated region
    $region22: #{wdcnn1_forward.1} parent=1 // pred_check
      _
    $region23: #{wdcnn1_forward.1} parent=1 // pred_check_branch
      %24 = sbr.rel (0) target = $region25
    $region24: #{wdcnn1_forward.1} parent=1 // pred_region
      _
    $region25: #{wdcnn1_forward.1} parent=1 // pred_fallthru
      _
    // Predicated region
    $region26: #{wdcnn1_forward.1} parent=1 // pred_check
      _
    $region27: #{wdcnn1_forward.1} parent=1 // pred_check_branch
      %26 = sbr.rel (0) target = $region29
    $region28: #{wdcnn1_forward.1} parent=1 // pred_region
      _
    $region29: #{wdcnn1_forward.1} parent=1 // pred_fallthru
      _
    %v27 = vld [vmem:[%s0] sm:$0xff]
    %v28 = vld [vmem:[%s0 + $0x8] sm:$0xff]
    %v29 = vld [vmem:[%s0 + $0x10] sm:$0xff]
    %v30 = vld [vmem:[%s0 + $0x18] sm:$0xff]
    %v31 = vld [vmem:[%s0 + $0x20] sm:$0xff]
    %v32 = vld [vmem:[%s0 + $0x28] sm:$0xff]
    %v33 = vld [vmem:[%s0 + $0x30] sm:$0xff]
    %v34 = vld [vmem:[%s0 + $0x38] sm:$0xff]
    %v35 = vld [vmem:[%s0 + $0x40] sm:$0xff]
    %v36 = vld [vmem:[%s0 + $0x48] sm:$0xff]
    %v37 = vld [vmem:[%s0 + $0x50] sm:$0xff]
    %v38 = vld [vmem:[%s0 + $0x58] sm:$0xff]
    %v39 = vld [vmem:[%s0 + $0x60] sm:$0xff]
    %v40 = vld [vmem:[%s0 + $0x68] sm:$0xff]
    %v41 = vld [vmem:[%s0 + $0x70] sm:$0xff]
    %v42 = vld [vmem:[%s0 + $0x78] sm:$0xff]
    %v43 = vld [vmem:[%s1] sm:$0xff]
    %v44 = vld [vmem:[%s1 + $0x8] sm:$0xff]
    %v45 = vld [vmem:[%s1 + $0x10] sm:$0xff]
    %v46 = vld [vmem:[%s1 + $0x18] sm:$0xff]
    %v47 = vld [vmem:[%s1 + $0x20] sm:$0xff]
    %v48 = vld [vmem:[%s1 + $0x28] sm:$0xff]
    %v49 = vld [vmem:[%s1 + $0x30] sm:$0xff]
    %v50 = vld [vmem:[%s1 + $0x38] sm:$0xff]
    %v51 = vld [vmem:[%s2] sm:$0x1]
    %v53 = vlaneseq
    %v54 = vshrl.u32 %v53, 7
    %v55 = vsub.s32 0, %v54
    %v56 = vrot.slane %v51, %v55
    %vm58 = vcmask 523264
    %v60 = vsel %vm58, %v27, 0
    %v63 = vsel %vm58, %v28, 0
    %v66 = vsel %vm58, %v29, 0
    %v69 = vsel %vm58, %v30, 0
    %v72 = vsel %vm58, %v31, 0
    %v75 = vsel %vm58, %v32, 0
    %v78 = vsel %vm58, %v33, 0
    %v81 = vsel %vm58, %v34, 0
    %v84 = vsel %vm58, %v35, 0
    %v87 = vsel %vm58, %v36, 0
    %v90 = vsel %vm58, %v37, 0
    %v93 = vsel %vm58, %v38, 0
    %v96 = vsel %vm58, %v39, 0
    %v99 = vsel %vm58, %v40, 0
    %v102 = vsel %vm58, %v41, 0
    %v105 = vsel %vm58, %v42, 0
    %107 = vmatprep.subr.mxu0 0.0
    %108 = vmatpush1.msra.mxu0 %v43
    %109 = vmatprep.subr.mxu0 0.0
    %110 = vmatpush1.msra.mxu0 %v44
    %111 = vmatprep.subr.mxu0 0.0
    %112 = vmatpush1.msra.mxu0 %v45
    %113 = vmatprep.subr.mxu0 0.0
    %114 = vmatpush1.msra.mxu0 %v46
    %115 = vmatprep.subr.mxu0 0.0
    %116 = vmatpush1.msra.mxu0 %v47
    %117 = vmatprep.subr.mxu0 0.0
    %118 = vmatpush1.msra.mxu0 %v48
    %119 = vmatprep.subr.mxu0 0.0
    %120 = vmatpush1.msra.mxu0 %v49
    %121 = vmatprep.subr.mxu0 0.0
    %122 = vmatpush1.msra.mxu0 %v50
    %123 = vmatprep.subr.mxu0 0.0
    %124 = vmatpush1.msra.mxu0 0.0
    %125 = vmatprep.subr.mxu0 0.0
    %126 = vmatpush1.msra.mxu0 0.0
    %127 = vmatprep.subr.mxu0 0.0
    %128 = vmatpush1.msra.mxu0 0.0
    %129 = vmatprep.subr.mxu0 0.0
    %130 = vmatpush1.msra.mxu0 0.0
    %131 = vmatprep.subr.mxu0 0.0
    %132 = vmatpush1.msra.mxu0 0.0
    %133 = vmatprep.subr.mxu0 0.0
    %134 = vmatpush1.msra.mxu0 0.0
    %135 = vmatprep.subr.mxu0 0.0
    %136 = vmatpush1.msra.mxu0 0.0
    %137 = vmatprep.subr.mxu0 0.0
    %138 = vmatpush1.msra.mxu0 0.0
    %139 = vmatprep.subr.mxu0 0.0
    %140 = vmatpush1.msra.mxu0 0.0
    %141 = vmatprep.subr.mxu0 0.0
    %142 = vmatpush1.msra.mxu0 0.0
    %143 = vmatprep.subr.mxu0 0.0
    %144 = vmatpush1.msra.mxu0 0.0
    %145 = vmatprep.subr.mxu0 0.0
    %146 = vmatpush1.msra.mxu0 0.0
    %147 = vmatprep.subr.mxu0 0.0
    %148 = vmatpush1.msra.mxu0 0.0
    %149 = vmatprep.subr.mxu0 0.0
    %150 = vmatpush1.msra.mxu0 0.0
    %151 = vmatprep.subr.mxu0 0.0
    %152 = vmatpush1.msra.mxu0 0.0
    %153 = vmatprep.subr.mxu0 0.0
    %154 = vmatpush1.msra.mxu0 0.0
    %155 = vmatprep.subr.mxu0 0.0
    %156 = vmatpush1.msra.mxu0 0.0
    %157 = vmatprep.subr.mxu0 0.0
    %158 = vmatpush1.msra.mxu0 0.0
    %159 = vmatprep.subr.mxu0 0.0
    %160 = vmatpush1.msra.mxu0 0.0
    %161 = vmatprep.subr.mxu0 0.0
    %162 = vmatpush1.msra.mxu0 0.0
    %163 = vmatprep.subr.mxu0 0.0
    %164 = vmatpush1.msra.mxu0 0.0
    %165 = vmatprep.subr.mxu0 0.0
    %166 = vmatpush1.msra.mxu0 0.0
    %167 = vmatprep.subr.mxu0 0.0
    %168 = vmatpush1.msra.mxu0 0.0
    %169 = vmatprep.subr.mxu0 0.0
    %170 = vmatpush1.msra.mxu0 0.0
    %171 = vmatprep.mubr.f32.mxu0 0.0
    %172 = vmatmul.mubr.f32.gmra.mrb[0].mxu0 %v60
    %v173 = vpop.f32.mrb[0].mxu0
    %v174 = vadd.f32 %v56, %v173
    %v175 = vpop.f32.mrb[0].mxu0
    %176 = vmatprep.mubr.f32.mxu0 0.0
    %177 = vmatmul.mubr.f32.gmra.mrb[0].mxu0 %v63
    %v178 = vpop.f32.mrb[0].mxu0
    %v179 = vadd.f32 %v56, %v178
    %v180 = vpop.f32.mrb[0].mxu0
    %181 = vmatprep.mubr.f32.mxu0 0.0
    %182 = vmatmul.mubr.f32.gmra.mrb[0].mxu0 %v66
    %v183 = vpop.f32.mrb[0].mxu0
    %v184 = vadd.f32 %v56, %v183
    %v185 = vpop.f32.mrb[0].mxu0
    %186 = vmatprep.mubr.f32.mxu0 0.0
    %187 = vmatmul.mubr.f32.gmra.mrb[0].mxu0 %v69
    %v188 = vpop.f32.mrb[0].mxu0
    %v189 = vadd.f32 %v56, %v188
    %v190 = vpop.f32.mrb[0].mxu0
    %191 = vmatprep.mubr.f32.mxu0 0.0
    %192 = vmatmul.mubr.f32.gmra.mrb[0].mxu0 %v72
    %v193 = vpop.f32.mrb[0].mxu0
    %v194 = vadd.f32 %v56, %v193
    %v195 = vpop.f32.mrb[0].mxu0
    %196 = vmatprep.mubr.f32.mxu0 0.0
    %197 = vmatmul.mubr.f32.gmra.mrb[0].mxu0 %v75
    %v198 = vpop.f32.mrb[0].mxu0
    %v199 = vadd.f32 %v56, %v198
    %v200 = vpop.f32.mrb[0].mxu0
    %201 = vmatprep.mubr.f32.mxu0 0.0
    %202 = vmatmul.mubr.f32.gmra.mrb[0].mxu0 %v78
    %v203 = vpop.f32.mrb[0].mxu0
    %v204 = vadd.f32 %v56, %v203
    %v205 = vpop.f32.mrb[0].mxu0
    %206 = vmatprep.mubr.f32.mxu0 0.0
    %207 = vmatmul.mubr.f32.gmra.mrb[0].mxu0 %v81
    %v208 = vpop.f32.mrb[0].mxu0
    %v209 = vadd.f32 %v56, %v208
    %v210 = vpop.f32.mrb[0].mxu0
    %211 = vmatprep.mubr.f32.mxu0 0.0
    %212 = vmatmul.mubr.f32.gmra.mrb[0].mxu0 %v84
    %v213 = vpop.f32.mrb[0].mxu0
    %v214 = vadd.f32 %v56, %v213
    %v215 = vpop.f32.mrb[0].mxu0
    %216 = vmatprep.mubr.f32.mxu0 0.0
    %217 = vmatmul.mubr.f32.gmra.mrb[0].mxu0 %v87
    %v218 = vpop.f32.mrb[0].mxu0
    %v219 = vadd.f32 %v56, %v218
    %v220 = vpop.f32.mrb[0].mxu0
    %221 = vmatprep.mubr.f32.mxu0 0.0
    %222 = vmatmul.mubr.f32.gmra.mrb[0].mxu0 %v90
    %v223 = vpop.f32.mrb[0].mxu0
    %v224 = vadd.f32 %v56, %v223
    %v225 = vpop.f32.mrb[0].mxu0
    %226 = vmatprep.mubr.f32.mxu0 0.0
    %227 = vmatmul.mubr.f32.gmra.mrb[0].mxu0 %v93
    %v228 = vpop.f32.mrb[0].mxu0
    %v229 = vadd.f32 %v56, %v228
    %v230 = vpop.f32.mrb[0].mxu0
    %231 = vmatprep.mubr.f32.mxu0 0.0
    %232 = vmatmul.mubr.f32.gmra.mrb[0].mxu0 %v96
    %v233 = vpop.f32.mrb[0].mxu0
    %v234 = vadd.f32 %v56, %v233
    %v235 = vpop.f32.mrb[0].mxu0
    %236 = vmatprep.mubr.f32.mxu0 0.0
    %237 = vmatmul.mubr.f32.gmra.mrb[0].mxu0 %v99
    %v238 = vpop.f32.mrb[0].mxu0
    %v239 = vadd.f32 %v56, %v238
    %v240 = vpop.f32.mrb[0].mxu0
    %241 = vmatprep.mubr.f32.mxu0 0.0
    %242 = vmatmul.mubr.f32.gmra.mrb[0].mxu0 %v102
    %v243 = vpop.f32.mrb[0].mxu0
    %v244 = vadd.f32 %v56, %v243
    %v245 = vpop.f32.mrb[0].mxu0
    %246 = vmatprep.mubr.f32.mxu0 0.0
    %247 = vmatmul.mubr.f32.gmra.mrb[0].mxu0 %v105
    %v248 = vpop.f32.mrb[0].mxu0
    %v249 = vadd.f32 %v56, %v248
    %v250 = vpop.f32.mrb[0].mxu0
    %251 = vdwg.mxu0
    %252 = vst.msk [vmem:[#allocation2] sm:$0xff] %vm58, %v174
    %253 = vst.msk [vmem:[#allocation2 + $0x8] sm:$0xff] %vm58, %v179
    %254 = vst.msk [vmem:[#allocation2 + $0x10] sm:$0xff] %vm58, %v184
    %255 = vst.msk [vmem:[#allocation2 + $0x18] sm:$0xff] %vm58, %v189
    %256 = vst.msk [vmem:[#allocation2 + $0x20] sm:$0xff] %vm58, %v194
    %257 = vst.msk [vmem:[#allocation2 + $0x28] sm:$0xff] %vm58, %v199
    %258 = vst.msk [vmem:[#allocation2 + $0x30] sm:$0xff] %vm58, %v204
    %259 = vst.msk [vmem:[#allocation2 + $0x38] sm:$0xff] %vm58, %v209
    %260 = vst.msk [vmem:[#allocation2 + $0x40] sm:$0xff] %vm58, %v214
    %261 = vst.msk [vmem:[#allocation2 + $0x48] sm:$0xff] %vm58, %v219
    %262 = vst.msk [vmem:[#allocation2 + $0x50] sm:$0xff] %vm58, %v224
    %263 = vst.msk [vmem:[#allocation2 + $0x58] sm:$0xff] %vm58, %v229
    %264 = vst.msk [vmem:[#allocation2 + $0x60] sm:$0xff] %vm58, %v234
    %265 = vst.msk [vmem:[#allocation2 + $0x68] sm:$0xff] %vm58, %v239
    %266 = vst.msk [vmem:[#allocation2 + $0x70] sm:$0xff] %vm58, %v244
    %267 = vst.msk [vmem:[#allocation2 + $0x78] sm:$0xff] %vm58, %v249
    %v268 = vld [vmem:[#allocation2] ss:$2 sm:$0xff]
    %s269 = scalar_lea.vmem [#allocation2], 16
    %v270 = vld [vmem:[%s269] ss:$2 sm:$0xff]
    %s271 = scalar_lea.vmem [#allocation2], 32
    %v272 = vld [vmem:[%s271] ss:$2 sm:$0xff]
    %s273 = scalar_lea.vmem [#allocation2], 48
    %v274 = vld [vmem:[%s273] ss:$2 sm:$0xff]
    %s275 = scalar_lea.vmem [#allocation2], 64
    %v276 = vld [vmem:[%s275] ss:$2 sm:$0xff]
    %s277 = scalar_lea.vmem [#allocation2], 80
    %v278 = vld [vmem:[%s277] ss:$2 sm:$0xff]
    %s279 = scalar_lea.vmem [#allocation2], 96
    %v280 = vld [vmem:[%s279] ss:$2 sm:$0xff]
    %s281 = scalar_lea.vmem [#allocation2], 112
    %v282 = vld [vmem:[%s281] ss:$2 sm:$0xff]
    %s283 = scalar_lea.vmem [#allocation2], 1
    %v284 = vld [vmem:[%s283] ss:$2 sm:$0xff]
    %s285 = scalar_lea.vmem [#allocation2], 17
    %v286 = vld [vmem:[%s285] ss:$2 sm:$0xff]
    %s287 = scalar_lea.vmem [#allocation2], 33
    %v288 = vld [vmem:[%s287] ss:$2 sm:$0xff]
    %s289 = scalar_lea.vmem [#allocation2], 49
    %v290 = vld [vmem:[%s289] ss:$2 sm:$0xff]
    %s291 = scalar_lea.vmem [#allocation2], 65
    %v292 = vld [vmem:[%s291] ss:$2 sm:$0xff]
    %s293 = scalar_lea.vmem [#allocation2], 81
    %v294 = vld [vmem:[%s293] ss:$2 sm:$0xff]
    %s295 = scalar_lea.vmem [#allocation2], 97
    %v296 = vld [vmem:[%s295] ss:$2 sm:$0xff]
    %s297 = scalar_lea.vmem [#allocation2], 113
    %v298 = vld [vmem:[%s297] ss:$2 sm:$0xff]
    %v299 = vmax.f32 %v268, %v284
    %v300 = vmax.f32 %v270, %v286
    %v301 = vmax.f32 %v272, %v288
    %v302 = vmax.f32 %v274, %v290
    %v303 = vmax.f32 %v276, %v292
    %v304 = vmax.f32 %v278, %v294
    %v305 = vmax.f32 %v280, %v296
    %v306 = vmax.f32 %v282, %v298
    %v307 = vmax.f32 %v299, 0.0
    %v308 = vmax.f32 %v300, 0.0
    %v309 = vmax.f32 %v301, 0.0
    %v310 = vmax.f32 %v302, 0.0
    %v311 = vmax.f32 %v303, 0.0
    %v312 = vmax.f32 %v304, 0.0
    %v313 = vmax.f32 %v305, 0.0
    %v314 = vmax.f32 %v306, 0.0
    %vm315 = vcmask 516096
    %316 = vst.msk [vmem:[#allocation3] sm:$0x1] %vm315, 0.0
    %317 = vst.msk [vmem:[#allocation3 + $0x1] sm:$0xff] %vm58, %v307
    %318 = vst.msk [vmem:[#allocation3 + $0x9] sm:$0xff] %vm58, %v308
    %319 = vst.msk [vmem:[#allocation3 + $0x11] sm:$0xff] %vm58, %v309
    %320 = vst.msk [vmem:[#allocation3 + $0x19] sm:$0xff] %vm58, %v310
    %321 = vst.msk [vmem:[#allocation3 + $0x21] sm:$0xff] %vm58, %v311
    %322 = vst.msk [vmem:[#allocation3 + $0x29] sm:$0xff] %vm58, %v312
    %323 = vst.msk [vmem:[#allocation3 + $0x31] sm:$0xff] %vm58, %v313
    %324 = vst.msk [vmem:[#allocation3 + $0x39] sm:$0xff] %vm58, %v314
    %325 = vst.msk [vmem:[#allocation3 + $0x41] sm:$0x1] %vm315, 0.0
    %v326 = vlaneseq
    %v327 = vshrl.u32 %v326, 7
    %v328 = vadd.s32 %v327, 8
    %v329 = vadd.s32 %v327, 16
    %v330 = vadd.s32 %v327, 24
    %v331 = vadd.s32 %v327, 32
    %v332 = vadd.s32 %v327, 40
    %v333 = vadd.s32 %v327, 48
    %v334 = vadd.s32 %v327, 56
    %vm335 = vcmp.lt.s32.totalorder %v327, 0
    %v336 = vsub.s32 0, %v327
    %v337 = vsel %vm335, %v336, %v327
    %v338 = vshrl.u32 %v337, 5
    %v339 = vand.u32 %v337, 31
    %v340 = vsub.s32 0, %v339
    %v341 = vsel %vm335, %v340, %v339
    %vm342 = vcmp.lt.s32.totalorder %v328, 0
    %v343 = vsub.s32 0, %v328
    %v344 = vsel %vm342, %v343, %v328
    %v345 = vshrl.u32 %v344, 5
    %v346 = vand.u32 %v344, 31
    %v347 = vsub.s32 0, %v346
    %v348 = vsel %vm342, %v347, %v346
    %vm349 = vcmp.lt.s32.totalorder %v329, 0
    %v350 = vsub.s32 0, %v329
    %v351 = vsel %vm349, %v350, %v329
    %v352 = vshrl.u32 %v351, 5
    %v353 = vand.u32 %v351, 31
    %v354 = vsub.s32 0, %v353
    %v355 = vsel %vm349, %v354, %v353
    %vm356 = vcmp.lt.s32.totalorder %v330, 0
    %v357 = vsub.s32 0, %v330
    %v358 = vsel %vm356, %v357, %v330
    %v359 = vshrl.u32 %v358, 5
    %v360 = vand.u32 %v358, 31
    %v361 = vsub.s32 0, %v360
    %v362 = vsel %vm356, %v361, %v360
    %vm363 = vcmp.lt.s32.totalorder %v331, 0
    %v364 = vsub.s32 0, %v331
    %v365 = vsel %vm363, %v364, %v331
    %v366 = vshrl.u32 %v365, 5
    %v367 = vand.u32 %v365, 31
    %v368 = vsub.s32 0, %v367
    %v369 = vsel %vm363, %v368, %v367
    %vm370 = vcmp.lt.s32.totalorder %v332, 0
    %v371 = vsub.s32 0, %v332
    %v372 = vsel %vm370, %v371, %v332
    %v373 = vshrl.u32 %v372, 5
    %v374 = vand.u32 %v372, 31
    %v375 = vsub.s32 0, %v374
    %v376 = vsel %vm370, %v375, %v374
    %vm377 = vcmp.lt.s32.totalorder %v333, 0
    %v378 = vsub.s32 0, %v333
    %v379 = vsel %vm377, %v378, %v333
    %v380 = vshrl.u32 %v379, 5
    %v381 = vand.u32 %v379, 31
    %v382 = vsub.s32 0, %v381
    %v383 = vsel %vm377, %v382, %v381
    %vm384 = vcmp.lt.s32.totalorder %v334, 0
    %v385 = vsub.s32 0, %v334
    %v386 = vsel %vm384, %v385, %v334
    %v387 = vshrl.u32 %v386, 5
    %v388 = vand.u32 %v386, 31
    %v389 = vsub.s32 0, %v388
    %v390 = vsel %vm384, %v389, %v388
    %vm391 = vcmp.ne.s32.totalorder %v341, 0
    %vm392 = vcmp.ne.s32.totalorder %v348, 0
    %vm393 = vcmp.ne.s32.totalorder %v355, 0
    %vm394 = vcmp.ne.s32.totalorder %v362, 0
    %vm395 = vcmp.ne.s32.totalorder %v369, 0
    %vm396 = vcmp.ne.s32.totalorder %v376, 0
    %vm397 = vcmp.ne.s32.totalorder %v383, 0
    %vm398 = vcmp.ne.s32.totalorder %v390, 0
    %vm399 = vcmp.lt.s32.totalorder %v341, 0
    %vm400 = vcmp.lt.s32.totalorder %v348, 0
    %vm401 = vcmp.lt.s32.totalorder %v355, 0
    %vm402 = vcmp.lt.s32.totalorder %v362, 0
    %vm403 = vcmp.lt.s32.totalorder %v369, 0
    %vm404 = vcmp.lt.s32.totalorder %v376, 0
    %vm405 = vcmp.lt.s32.totalorder %v383, 0
    %vm406 = vcmp.lt.s32.totalorder %v390, 0
    %vm407 = vmand %vm399, %vm391
    %vm408 = vmand %vm400, %vm392
    %vm409 = vmand %vm401, %vm393
    %vm410 = vmand %vm402, %vm394
    %vm411 = vmand %vm403, %vm395
    %vm412 = vmand %vm404, %vm396
    %vm413 = vmand %vm405, %vm397
    %vm414 = vmand %vm406, %vm398
    %v415 = vadd.s32 %v341, 32
    %v416 = vadd.s32 %v348, 32
    %v417 = vadd.s32 %v355, 32
    %v418 = vadd.s32 %v362, 32
    %v419 = vadd.s32 %v369, 32
    %v420 = vadd.s32 %v376, 32
    %v421 = vadd.s32 %v383, 32
    %v422 = vadd.s32 %v390, 32
    %v423 = vsel %vm407, %v415, %v341
    %v424 = vsel %vm408, %v416, %v348
    %v425 = vsel %vm409, %v417, %v355
    %v426 = vsel %vm410, %v418, %v362
    %v427 = vsel %vm411, %v419, %v369
    %v428 = vsel %vm412, %v420, %v376
    %v429 = vsel %vm413, %v421, %v383
    %v430 = vsel %vm414, %v422, %v390
    %vm431 = vcmp.eq.s32.totalorder %v423, 0
    %vm432 = vcmp.eq.s32.totalorder %v424, 0
    %vm433 = vcmp.eq.s32.totalorder %v425, 0
    %vm434 = vcmp.eq.s32.totalorder %v426, 0
    %vm435 = vcmp.eq.s32.totalorder %v427, 0
    %vm436 = vcmp.eq.s32.totalorder %v428, 0
    %vm437 = vcmp.eq.s32.totalorder %v429, 0
    %vm438 = vcmp.eq.s32.totalorder %v430, 0
    %v439 = vld [vmem:[#allocation3] sm:$0xff]
    %v440 = vld [vmem:[#allocation3 + $0x8] sm:$0xff]
    %v441 = vld [vmem:[#allocation3 + $0x10] sm:$0xff]
    %v442 = vld [vmem:[#allocation3 + $0x18] sm:$0xff]
    %v443 = vld [vmem:[#allocation3 + $0x20] sm:$0xff]
    %v444 = vld [vmem:[#allocation3 + $0x28] sm:$0xff]
    %v445 = vld [vmem:[#allocation3 + $0x30] sm:$0xff]
    %v446 = vld [vmem:[#allocation3 + $0x38] sm:$0xff]
    %v447 = vsel %vm431, 0.0, %v439
    %v448 = vsel %vm432, 0.0, %v440
    %v449 = vsel %vm433, 0.0, %v441
    %v450 = vsel %vm434, 0.0, %v442
    %v451 = vsel %vm435, 0.0, %v443
    %v452 = vsel %vm436, 0.0, %v444
    %v453 = vsel %vm437, 0.0, %v445
    %v454 = vsel %vm438, 0.0, %v446
    %vm455 = vcmp.eq.s32.totalorder %v423, 31
    %vm456 = vcmp.eq.s32.totalorder %v424, 31
    %vm457 = vcmp.eq.s32.totalorder %v425, 31
    %vm458 = vcmp.eq.s32.totalorder %v426, 31
    %vm459 = vcmp.eq.s32.totalorder %v427, 31
    %vm460 = vcmp.eq.s32.totalorder %v428, 31
    %vm461 = vcmp.eq.s32.totalorder %v429, 31
    %vm462 = vcmp.eq.s32.totalorder %v430, 31
    %v463 = vld [vmem:[#allocation3 + $0x2] sm:$0xff]
    %v464 = vld [vmem:[#allocation3 + $0xa] sm:$0xff]
    %v465 = vld [vmem:[#allocation3 + $0x12] sm:$0xff]
    %v466 = vld [vmem:[#allocation3 + $0x1a] sm:$0xff]
    %v467 = vld [vmem:[#allocation3 + $0x22] sm:$0xff]
    %v468 = vld [vmem:[#allocation3 + $0x2a] sm:$0xff]
    %v469 = vld [vmem:[#allocation3 + $0x32] sm:$0xff]
    %v470 = vld [vmem:[#allocation3 + $0x3a] sm:$0xff]
    %v471 = vsel %vm455, 0.0, %v463
    %v472 = vsel %vm456, 0.0, %v464
    %v473 = vsel %vm457, 0.0, %v465
    %v474 = vsel %vm458, 0.0, %v466
    %v475 = vsel %vm459, 0.0, %v467
    %v476 = vsel %vm460, 0.0, %v468
    %v477 = vsel %vm461, 0.0, %v469
    %v478 = vsel %vm462, 0.0, %v470
    %v479 = vld [vmem:[%s3] sm:$0xff]
    %v480 = vld [vmem:[%s3 + $0x8] sm:$0xff]
    %v481 = vld [vmem:[%s3 + $0x10] sm:$0xff]
    %v482 = vld [vmem:[%s3 + $0x18] sm:$0xff]
    %v483 = vld [vmem:[%s3 + $0x20] sm:$0xff]
    %v484 = vld [vmem:[%s3 + $0x28] sm:$0xff]
    %v485 = vld [vmem:[%s3 + $0x30] sm:$0xff]
    %v486 = vld [vmem:[%s3 + $0x38] sm:$0xff]
    %s487 = scalar_lea.vmem %s3, 64
    %v488 = vld [vmem:[%s487] sm:$0xff]
    %v489 = vld [vmem:[%s487 + $0x8] sm:$0xff]
    %v490 = vld [vmem:[%s487 + $0x10] sm:$0xff]
    %v491 = vld [vmem:[%s487 + $0x18] sm:$0xff]
    %v492 = vld [vmem:[%s487 + $0x20] sm:$0xff]
    %v493 = vld [vmem:[%s487 + $0x28] sm:$0xff]
    %v494 = vld [vmem:[%s487 + $0x30] sm:$0xff]
    %v495 = vld [vmem:[%s487 + $0x38] sm:$0xff]
    %v497 = vsel %vm58, %v307, 0
    %v500 = vsel %vm58, %v308, 0
    %v503 = vsel %vm58, %v309, 0
    %v506 = vsel %vm58, %v310, 0
    %v509 = vsel %vm58, %v311, 0
    %v512 = vsel %vm58, %v312, 0
    %v515 = vsel %vm58, %v313, 0
    %v518 = vsel %vm58, %v314, 0
    %520 = vmatprep.subr.mxu0 0.0
    %521 = vmatpush1.msra.mxu0 %v488
    %522 = vmatprep.subr.mxu0 0.0
    %523 = vmatpush1.msra.mxu0 %v489
    %524 = vmatprep.subr.mxu0 0.0
    %525 = vmatpush1.msra.mxu0 %v490
    %526 = vmatprep.subr.mxu0 0.0
    %527 = vmatpush1.msra.mxu0 %v491
    %528 = vmatprep.subr.mxu0 0.0
    %529 = vmatpush1.msra.mxu0 %v492
    %530 = vmatprep.subr.mxu0 0.0
    %531 = vmatpush1.msra.mxu0 %v493
    %532 = vmatprep.subr.mxu0 0.0
    %533 = vmatpush1.msra.mxu0 %v494
    %534 = vmatprep.subr.mxu0 0.0
    %535 = vmatpush1.msra.mxu0 %v495
    %536 = vmatprep.subr.mxu0 0.0
    %537 = vmatpush1.msra.mxu0 0.0
    %538 = vmatprep.subr.mxu0 0.0
    %539 = vmatpush1.msra.mxu0 0.0
    %540 = vmatprep.subr.mxu0 0.0
    %541 = vmatpush1.msra.mxu0 0.0
    %542 = vmatprep.subr.mxu0 0.0
    %543 = vmatpush1.msra.mxu0 0.0
    %544 = vmatprep.subr.mxu0 0.0
    %545 = vmatpush1.msra.mxu0 0.0
    %546 = vmatprep.subr.mxu0 0.0
    %547 = vmatpush1.msra.mxu0 0.0
    %548 = vmatprep.subr.mxu0 0.0
    %549 = vmatpush1.msra.mxu0 0.0
    %550 = vmatprep.subr.mxu0 0.0
    %551 = vmatpush1.msra.mxu0 0.0
    %552 = vmatprep.subr.mxu0 0.0
    %553 = vmatpush1.msra.mxu0 0.0
    %554 = vmatprep.subr.mxu0 0.0
    %555 = vmatpush1.msra.mxu0 0.0
    %556 = vmatprep.subr.mxu0 0.0
    %557 = vmatpush1.msra.mxu0 0.0
    %558 = vmatprep.subr.mxu0 0.0
    %559 = vmatpush1.msra.mxu0 0.0
    %560 = vmatprep.subr.mxu0 0.0
    %561 = vmatpush1.msra.mxu0 0.0
    %562 = vmatprep.subr.mxu0 0.0
    %563 = vmatpush1.msra.mxu0 0.0
    %564 = vmatprep.subr.mxu0 0.0
    %565 = vmatpush1.msra.mxu0 0.0
    %566 = vmatprep.subr.mxu0 0.0
    %567 = vmatpush1.msra.mxu0 0.0
    %568 = vmatprep.subr.mxu0 0.0
    %569 = vmatpush1.msra.mxu0 0.0
    %570 = vmatprep.subr.mxu0 0.0
    %571 = vmatpush1.msra.mxu0 0.0
    %572 = vmatprep.subr.mxu0 0.0
    %573 = vmatpush1.msra.mxu0 0.0
    %574 = vmatprep.subr.mxu0 0.0
    %575 = vmatpush1.msra.mxu0 0.0
    %576 = vmatprep.subr.mxu0 0.0
    %577 = vmatpush1.msra.mxu0 0.0
    %578 = vmatprep.subr.mxu0 0.0
    %579 = vmatpush1.msra.mxu0 0.0
    %580 = vmatprep.subr.mxu0 0.0
    %581 = vmatpush1.msra.mxu0 0.0
    %582 = vmatprep.subr.mxu0 0.0
    %583 = vmatpush1.msra.mxu0 0.0
    %584 = vmatprep.mubr.f32.mxu0 0.0
    %585 = vmatmul.mubr.f32.gmra.mrb[0].mxu0 %v497
    %v586 = vpop.f32.mrb[0].mxu0
    %v587 = vadd.f32 0.0, %v586
    %v588 = vpop.f32.mrb[0].mxu0
    %589 = vmatprep.mubr.f32.mxu0 0.0
    %590 = vmatmul.mubr.f32.gmra.mrb[0].mxu0 %v500
    %v591 = vpop.f32.mrb[0].mxu0
    %v592 = vadd.f32 0.0, %v591
    %v593 = vpop.f32.mrb[0].mxu0
    %594 = vmatprep.mubr.f32.mxu0 0.0
    %595 = vmatmul.mubr.f32.gmra.mrb[0].mxu0 %v503
    %v596 = vpop.f32.mrb[0].mxu0
    %v597 = vadd.f32 0.0, %v596
    %v598 = vpop.f32.mrb[0].mxu0
    %599 = vmatprep.mubr.f32.mxu0 0.0
    %600 = vmatmul.mubr.f32.gmra.mrb[0].mxu0 %v506
    %v601 = vpop.f32.mrb[0].mxu0
    %v602 = vadd.f32 0.0, %v601
    %v603 = vpop.f32.mrb[0].mxu0
    %604 = vmatprep.mubr.f32.mxu0 0.0
    %605 = vmatmul.mubr.f32.gmra.mrb[0].mxu0 %v509
    %v606 = vpop.f32.mrb[0].mxu0
    %v607 = vadd.f32 0.0, %v606
    %v608 = vpop.f32.mrb[0].mxu0
    %609 = vmatprep.mubr.f32.mxu0 0.0
    %610 = vmatmul.mubr.f32.gmra.mrb[0].mxu0 %v512
    %v611 = vpop.f32.mrb[0].mxu0
    %v612 = vadd.f32 0.0, %v611
    %v613 = vpop.f32.mrb[0].mxu0
    %614 = vmatprep.mubr.f32.mxu0 0.0
    %615 = vmatmul.mubr.f32.gmra.mrb[0].mxu0 %v515
    %v616 = vpop.f32.mrb[0].mxu0
    %v617 = vadd.f32 0.0, %v616
    %v618 = vpop.f32.mrb[0].mxu0
    %619 = vmatprep.mubr.f32.mxu0 0.0
    %620 = vmatmul.mubr.f32.gmra.mrb[0].mxu0 %v518
    %v621 = vpop.f32.mrb[0].mxu0
    %v622 = vadd.f32 0.0, %v621
    %v623 = vpop.f32.mrb[0].mxu0
    %624 = vdwg.mxu0
    %v626 = vsel %vm58, %v447, 0
    %v629 = vsel %vm58, %v448, 0
    %v632 = vsel %vm58, %v449, 0
    %v635 = vsel %vm58, %v450, 0
    %v638 = vsel %vm58, %v451, 0
    %v641 = vsel %vm58, %v452, 0
    %v644 = vsel %vm58, %v453, 0
    %v647 = vsel %vm58, %v454, 0
    %649 = vmatprep.subr.mxu0 0.0
    %650 = vmatpush1.msra.mxu0 %v479
    %651 = vmatprep.subr.mxu0 0.0
    %652 = vmatpush1.msra.mxu0 %v480
    %653 = vmatprep.subr.mxu0 0.0
    %654 = vmatpush1.msra.mxu0 %v481
    %655 = vmatprep.subr.mxu0 0.0
    %656 = vmatpush1.msra.mxu0 %v482
    %657 = vmatprep.subr.mxu0 0.0
    %658 = vmatpush1.msra.mxu0 %v483
    %659 = vmatprep.subr.mxu0 0.0
    %660 = vmatpush1.msra.mxu0 %v484
    %661 = vmatprep.subr.mxu0 0.0
    %662 = vmatpush1.msra.mxu0 %v485
    %663 = vmatprep.subr.mxu0 0.0
    %664 = vmatpush1.msra.mxu0 %v486
    %665 = vmatprep.subr.mxu0 0.0
    %666 = vmatpush1.msra.mxu0 0.0
    %667 = vmatprep.subr.mxu0 0.0
    %668 = vmatpush1.msra.mxu0 0.0
    %669 = vmatprep.subr.mxu0 0.0
    %670 = vmatpush1.msra.mxu0 0.0
    %671 = vmatprep.subr.mxu0 0.0
    %672 = vmatpush1.msra.mxu0 0.0
    %673 = vmatprep.subr.mxu0 0.0
    %674 = vmatpush1.msra.mxu0 0.0
    %675 = vmatprep.subr.mxu0 0.0
    %676 = vmatpush1.msra.mxu0 0.0
    %677 = vmatprep.subr.mxu0 0.0
    %678 = vmatpush1.msra.mxu0 0.0
    %679 = vmatprep.subr.mxu0 0.0
    %680 = vmatpush1.msra.mxu0 0.0
    %681 = vmatprep.subr.mxu0 0.0
    %682 = vmatpush1.msra.mxu0 0.0
    %683 = vmatprep.subr.mxu0 0.0
    %684 = vmatpush1.msra.mxu0 0.0
    %685 = vmatprep.subr.mxu0 0.0
    %686 = vmatpush1.msra.mxu0 0.0
    %687 = vmatprep.subr.mxu0 0.0
    %688 = vmatpush1.msra.mxu0 0.0
    %689 = vmatprep.subr.mxu0 0.0
    %690 = vmatpush1.msra.mxu0 0.0
    %691 = vmatprep.subr.mxu0 0.0
    %692 = vmatpush1.msra.mxu0 0.0
    %693 = vmatprep.subr.mxu0 0.0
    %694 = vmatpush1.msra.mxu0 0.0
    %695 = vmatprep.subr.mxu0 0.0
    %696 = vmatpush1.msra.mxu0 0.0
    %697 = vmatprep.subr.mxu0 0.0
    %698 = vmatpush1.msra.mxu0 0.0
    %699 = vmatprep.subr.mxu0 0.0
    %700 = vmatpush1.msra.mxu0 0.0
    %701 = vmatprep.subr.mxu0 0.0
    %702 = vmatpush1.msra.mxu0 0.0
    %703 = vmatprep.subr.mxu0 0.0
    %704 = vmatpush1.msra.mxu0 0.0
    %705 = vmatprep.subr.mxu0 0.0
    %706 = vmatpush1.msra.mxu0 0.0
    %707 = vmatprep.subr.mxu0 0.0
    %708 = vmatpush1.msra.mxu0 0.0
    %709 = vmatprep.subr.mxu0 0.0
    %710 = vmatpush1.msra.mxu0 0.0
    %711 = vmatprep.subr.mxu0 0.0
    %712 = vmatpush1.msra.mxu0 0.0
    %713 = vmatprep.mubr.f32.mxu0 0.0
    %714 = vmatmul.mubr.f32.gmra.mrb[0].mxu0 %v626
    %v715 = vpop.f32.mrb[0].mxu0
    %v716 = vadd.f32 %v587, %v715
    %v717 = vpop.f32.mrb[0].mxu0
    %718 = vmatprep.mubr.f32.mxu0 0.0
    %719 = vmatmul.mubr.f32.gmra.mrb[0].mxu0 %v629
    %v720 = vpop.f32.mrb[0].mxu0
    %v721 = vadd.f32 %v592, %v720
    %v722 = vpop.f32.mrb[0].mxu0
    %723 = vmatprep.mubr.f32.mxu0 0.0
    %724 = vmatmul.mubr.f32.gmra.mrb[0].mxu0 %v632
    %v725 = vpop.f32.mrb[0].mxu0
    %v726 = vadd.f32 %v597, %v725
    %v727 = vpop.f32.mrb[0].mxu0
    %728 = vmatprep.mubr.f32.mxu0 0.0
    %729 = vmatmul.mubr.f32.gmra.mrb[0].mxu0 %v635
    %v730 = vpop.f32.mrb[0].mxu0
    %v731 = vadd.f32 %v602, %v730
    %v732 = vpop.f32.mrb[0].mxu0
    %733 = vmatprep.mubr.f32.mxu0 0.0
    %734 = vmatmul.mubr.f32.gmra.mrb[0].mxu0 %v638
    %v735 = vpop.f32.mrb[0].mxu0
    %v736 = vadd.f32 %v607, %v735
    %v737 = vpop.f32.mrb[0].mxu0
    %738 = vmatprep.mubr.f32.mxu0 0.0
    %739 = vmatmul.mubr.f32.gmra.mrb[0].mxu0 %v641
    %v740 = vpop.f32.mrb[0].mxu0
    %v741 = vadd.f32 %v612, %v740
    %v742 = vpop.f32.mrb[0].mxu0
    %743 = vmatprep.mubr.f32.mxu0 0.0
    %744 = vmatmul.mubr.f32.gmra.mrb[0].mxu0 %v644
    %v745 = vpop.f32.mrb[0].mxu0
    %v746 = vadd.f32 %v617, %v745
    %v747 = vpop.f32.mrb[0].mxu0
    %748 = vmatprep.mubr.f32.mxu0 0.0
    %749 = vmatmul.mubr.f32.gmra.mrb[0].mxu0 %v647
    %v750 = vpop.f32.mrb[0].mxu0
    %v751 = vadd.f32 %v622, %v750
    %v752 = vpop.f32.mrb[0].mxu0
    %753 = vdwg.mxu0
    %s754 = scalar_lea.vmem %s3, 128
    %v755 = vld [vmem:[%s754] sm:$0xff]
    %v756 = vld [vmem:[%s754 + $0x8] sm:$0xff]
    %v757 = vld [vmem:[%s754 + $0x10] sm:$0xff]
    %v758 = vld [vmem:[%s754 + $0x18] sm:$0xff]
    %v759 = vld [vmem:[%s754 + $0x20] sm:$0xff]
    %v760 = vld [vmem:[%s754 + $0x28] sm:$0xff]
    %v761 = vld [vmem:[%s754 + $0x30] sm:$0xff]
    %v762 = vld [vmem:[%s754 + $0x38] sm:$0xff]
    %v764 = vsel %vm58, %v471, 0
    %v767 = vsel %vm58, %v472, 0
    %v770 = vsel %vm58, %v473, 0
    %v773 = vsel %vm58, %v474, 0
    %v776 = vsel %vm58, %v475, 0
    %v779 = vsel %vm58, %v476, 0
    %v782 = vsel %vm58, %v477, 0
    %v785 = vsel %vm58, %v478, 0
    %787 = vmatprep.subr.mxu0 0.0
    %788 = vmatpush1.msra.mxu0 %v755
    %789 = vmatprep.subr.mxu0 0.0
    %790 = vmatpush1.msra.mxu0 %v756
    %791 = vmatprep.subr.mxu0 0.0
    %792 = vmatpush1.msra.mxu0 %v757
    %793 = vmatprep.subr.mxu0 0.0
    %794 = vmatpush1.msra.mxu0 %v758
    %795 = vmatprep.subr.mxu0 0.0
    %796 = vmatpush1.msra.mxu0 %v759
    %797 = vmatprep.subr.mxu0 0.0
    %798 = vmatpush1.msra.mxu0 %v760
    %799 = vmatprep.subr.mxu0 0.0
    %800 = vmatpush1.msra.mxu0 %v761
    %801 = vmatprep.subr.mxu0 0.0
    %802 = vmatpush1.msra.mxu0 %v762
    %803 = vmatprep.subr.mxu0 0.0
    %804 = vmatpush1.msra.mxu0 0.0
    %805 = vmatprep.subr.mxu0 0.0
    %806 = vmatpush1.msra.mxu0 0.0
    %807 = vmatprep.subr.mxu0 0.0
    %808 = vmatpush1.msra.mxu0 0.0
    %809 = vmatprep.subr.mxu0 0.0
    %810 = vmatpush1.msra.mxu0 0.0
    %811 = vmatprep.subr.mxu0 0.0
    %812 = vmatpush1.msra.mxu0 0.0
    %813 = vmatprep.subr.mxu0 0.0
    %814 = vmatpush1.msra.mxu0 0.0
    %815 = vmatprep.subr.mxu0 0.0
    %816 = vmatpush1.msra.mxu0 0.0
    %817 = vmatprep.subr.mxu0 0.0
    %818 = vmatpush1.msra.mxu0 0.0
    %819 = vmatprep.subr.mxu0 0.0
    %820 = vmatpush1.msra.mxu0 0.0
    %821 = vmatprep.subr.mxu0 0.0
    %822 = vmatpush1.msra.mxu0 0.0
    %823 = vmatprep.subr.mxu0 0.0
    %824 = vmatpush1.msra.mxu0 0.0
    %825 = vmatprep.subr.mxu0 0.0
    %826 = vmatpush1.msra.mxu0 0.0
    %827 = vmatprep.subr.mxu0 0.0
    %828 = vmatpush1.msra.mxu0 0.0
    %829 = vmatprep.subr.mxu0 0.0
    %830 = vmatpush1.msra.mxu0 0.0
    %831 = vmatprep.subr.mxu0 0.0
    %832 = vmatpush1.msra.mxu0 0.0
    %833 = vmatprep.subr.mxu0 0.0
    %834 = vmatpush1.msra.mxu0 0.0
    %835 = vmatprep.subr.mxu0 0.0
    %836 = vmatpush1.msra.mxu0 0.0
    %837 = vmatprep.subr.mxu0 0.0
    %838 = vmatpush1.msra.mxu0 0.0
    %839 = vmatprep.subr.mxu0 0.0
    %840 = vmatpush1.msra.mxu0 0.0
    %841 = vmatprep.subr.mxu0 0.0
    %842 = vmatpush1.msra.mxu0 0.0
    %843 = vmatprep.subr.mxu0 0.0
    %844 = vmatpush1.msra.mxu0 0.0
    %845 = vmatprep.subr.mxu0 0.0
    %846 = vmatpush1.msra.mxu0 0.0
    %847 = vmatprep.subr.mxu0 0.0
    %848 = vmatpush1.msra.mxu0 0.0
    %849 = vmatprep.subr.mxu0 0.0
    %850 = vmatpush1.msra.mxu0 0.0
    %851 = vmatprep.mubr.f32.mxu0 0.0
    %852 = vmatmul.mubr.f32.gmra.mrb[0].mxu0 %v764
    %v853 = vpop.f32.mrb[0].mxu0
    %v854 = vadd.f32 0.0, %v853
    %v855 = vpop.f32.mrb[0].mxu0
    %856 = vmatprep.mubr.f32.mxu0 0.0
    %857 = vmatmul.mubr.f32.gmra.mrb[0].mxu0 %v767
    %v858 = vpop.f32.mrb[0].mxu0
    %v859 = vadd.f32 0.0, %v858
    %v860 = vpop.f32.mrb[0].mxu0
    %861 = vmatprep.mubr.f32.mxu0 0.0
    %862 = vmatmul.mubr.f32.gmra.mrb[0].mxu0 %v770
    %v863 = vpop.f32.mrb[0].mxu0
    %v864 = vadd.f32 0.0, %v863
    %v865 = vpop.f32.mrb[0].mxu0
    %866 = vmatprep.mubr.f32.mxu0 0.0
    %867 = vmatmul.mubr.f32.gmra.mrb[0].mxu0 %v773
    %v868 = vpop.f32.mrb[0].mxu0
    %v869 = vadd.f32 0.0, %v868
    %v870 = vpop.f32.mrb[0].mxu0
    %871 = vmatprep.mubr.f32.mxu0 0.0
    %872 = vmatmul.mubr.f32.gmra.mrb[0].mxu0 %v776
    %v873 = vpop.f32.mrb[0].mxu0
    %v874 = vadd.f32 0.0, %v873
    %v875 = vpop.f32.mrb[0].mxu0
    %876 = vmatprep.mubr.f32.mxu0 0.0
    %877 = vmatmul.mubr.f32.gmra.mrb[0].mxu0 %v779
    %v878 = vpop.f32.mrb[0].mxu0
    %v879 = vadd.f32 0.0, %v878
    %v880 = vpop.f32.mrb[0].mxu0
    %881 = vmatprep.mubr.f32.mxu0 0.0
    %882 = vmatmul.mubr.f32.gmra.mrb[0].mxu0 %v782
    %v883 = vpop.f32.mrb[0].mxu0
    %v884 = vadd.f32 0.0, %v883
    %v885 = vpop.f32.mrb[0].mxu0
    %886 = vmatprep.mubr.f32.mxu0 0.0
    %887 = vmatmul.mubr.f32.gmra.mrb[0].mxu0 %v785
    %v888 = vpop.f32.mrb[0].mxu0
    %v889 = vadd.f32 0.0, %v888
    %v890 = vpop.f32.mrb[0].mxu0
    %891 = vdwg.mxu0
    %v892 = vadd.f32 %v716, %v854
    %v893 = vadd.f32 %v721, %v859
    %v894 = vadd.f32 %v726, %v864
    %v895 = vadd.f32 %v731, %v869
    %v896 = vadd.f32 %v736, %v874
    %v897 = vadd.f32 %v741, %v879
    %v898 = vadd.f32 %v746, %v884
    %v899 = vadd.f32 %v751, %v889
    %v900 = vld [vmem:[%s4] sm:$0x1]
    %v902 = vlaneseq
    %v903 = vshrl.u32 %v902, 7
    %v904 = vsub.s32 0, %v903
    %v905 = vrot.slane %v900, %v904
    %v907 = vadd.f32 %v892, %v905
    %v908 = vadd.f32 %v893, %v905
    %v909 = vadd.f32 %v894, %v905
    %v910 = vadd.f32 %v895, %v905
    %v911 = vadd.f32 %v896, %v905
    %v912 = vadd.f32 %v897, %v905
    %v913 = vadd.f32 %v898, %v905
    %v914 = vadd.f32 %v899, %v905
    %915 = vst.msk [vmem:[#allocation2] sm:$0xff] %vm58, %v907
    %916 = vst.msk [vmem:[#allocation2 + $0x8] sm:$0xff] %vm58, %v908
    %917 = vst.msk [vmem:[#allocation2 + $0x10] sm:$0xff] %vm58, %v909
    %918 = vst.msk [vmem:[#allocation2 + $0x18] sm:$0xff] %vm58, %v910
    %919 = vst.msk [vmem:[#allocation2 + $0x20] sm:$0xff] %vm58, %v911
    %920 = vst.msk [vmem:[#allocation2 + $0x28] sm:$0xff] %vm58, %v912
    %921 = vst.msk [vmem:[#allocation2 + $0x30] sm:$0xff] %vm58, %v913
    %922 = vst.msk [vmem:[#allocation2 + $0x38] sm:$0xff] %vm58, %v914
    %v923 = vld [vmem:[#allocation2] ss:$2 sm:$0xff]
    %v924 = vld [vmem:[%s269] ss:$2 sm:$0xff]
    %v925 = vld [vmem:[%s271] ss:$2 sm:$0xff]
    %v926 = vld [vmem:[%s273] ss:$2 sm:$0xff]
    %v927 = vld [vmem:[%s283] ss:$2 sm:$0xff]
    %v928 = vld [vmem:[%s285] ss:$2 sm:$0xff]
    %v929 = vld [vmem:[%s287] ss:$2 sm:$0xff]
    %v930 = vld [vmem:[%s289] ss:$2 sm:$0xff]
    %v931 = vmax.f32 %v923, %v927
    %v932 = vmax.f32 %v924, %v928
    %v933 = vmax.f32 %v925, %v929
    %v934 = vmax.f32 %v926, %v930
    %v935 = vmax.f32 %v931, 0.0
    %v936 = vmax.f32 %v932, 0.0
    %v937 = vmax.f32 %v933, 0.0
    %v938 = vmax.f32 %v934, 0.0
    %939 = vst.msk [vmem:[#allocation3 + $0x1] sm:$0xff] %vm58, %v935
    %940 = vst.msk [vmem:[#allocation3 + $0x9] sm:$0xff] %vm58, %v936
    %941 = vst.msk [vmem:[#allocation3 + $0x11] sm:$0xff] %vm58, %v937
    %942 = vst.msk [vmem:[#allocation3 + $0x19] sm:$0xff] %vm58, %v938
    %943 = vst.msk [vmem:[#allocation3 + $0x21] sm:$0x1] %vm315, 0.0
    %vm944 = vcmp.lt.s32.totalorder %v327, 0
    %v945 = vsub.s32 0, %v327
    %v946 = vsel %vm944, %v945, %v327
    %v947 = vshrl.u32 %v946, 4
    %v948 = vand.u32 %v946, 15
    %v949 = vsub.s32 0, %v948
    %v950 = vsel %vm944, %v949, %v948
    %vm951 = vcmp.lt.s32.totalorder %v328, 0
    %v952 = vsub.s32 0, %v328
    %v953 = vsel %vm951, %v952, %v328
    %v954 = vshrl.u32 %v953, 4
    %v955 = vand.u32 %v953, 15
    %v956 = vsub.s32 0, %v955
    %v957 = vsel %vm951, %v956, %v955
    %vm958 = vcmp.lt.s32.totalorder %v329, 0
    %v959 = vsub.s32 0, %v329
    %v960 = vsel %vm958, %v959, %v329
    %v961 = vshrl.u32 %v960, 4
    %v962 = vand.u32 %v960, 15
    %v963 = vsub.s32 0, %v962
    %v964 = vsel %vm958, %v963, %v962
    %vm965 = vcmp.lt.s32.totalorder %v330, 0
    %v966 = vsub.s32 0, %v330
    %v967 = vsel %vm965, %v966, %v330
    %v968 = vshrl.u32 %v967, 4
    %v969 = vand.u32 %v967, 15
    %v970 = vsub.s32 0, %v969
    %v971 = vsel %vm965, %v970, %v969
    %vm972 = vcmp.ne.s32.totalorder %v950, 0
    %vm973 = vcmp.ne.s32.totalorder %v957, 0
    %vm974 = vcmp.ne.s32.totalorder %v964, 0
    %vm975 = vcmp.ne.s32.totalorder %v971, 0
    %vm976 = vcmp.lt.s32.totalorder %v950, 0
    %vm977 = vcmp.lt.s32.totalorder %v957, 0
    %vm978 = vcmp.lt.s32.totalorder %v964, 0
    %vm979 = vcmp.lt.s32.totalorder %v971, 0
    %vm980 = vmand %vm976, %vm972
    %vm981 = vmand %vm977, %vm973
    %vm982 = vmand %vm978, %vm974
    %vm983 = vmand %vm979, %vm975
    %v984 = vadd.s32 %v950, 16
    %v985 = vadd.s32 %v957, 16
    %v986 = vadd.s32 %v964, 16
    %v987 = vadd.s32 %v971, 16
    %v988 = vsel %vm980, %v984, %v950
    %v989 = vsel %vm981, %v985, %v957
    %v990 = vsel %vm982, %v986, %v964
    %v991 = vsel %vm983, %v987, %v971
    %vm992 = vcmp.eq.s32.totalorder %v988, 0
    %vm993 = vcmp.eq.s32.totalorder %v989, 0
    %vm994 = vcmp.eq.s32.totalorder %v990, 0
    %vm995 = vcmp.eq.s32.totalorder %v991, 0
    %v996 = vld [vmem:[#allocation3] sm:$0xff]
    %v997 = vld [vmem:[#allocation3 + $0x8] sm:$0xff]
    %v998 = vld [vmem:[#allocation3 + $0x10] sm:$0xff]
    %v999 = vld [vmem:[#allocation3 + $0x18] sm:$0xff]
    %v1000 = vsel %vm992, 0.0, %v996
    %v1001 = vsel %vm993, 0.0, %v997
    %v1002 = vsel %vm994, 0.0, %v998
    %v1003 = vsel %vm995, 0.0, %v999
    %vm1004 = vcmp.eq.s32.totalorder %v988, 15
    %vm1005 = vcmp.eq.s32.totalorder %v989, 15
    %vm1006 = vcmp.eq.s32.totalorder %v990, 15
    %vm1007 = vcmp.eq.s32.totalorder %v991, 15
    %v1008 = vld [vmem:[#allocation3 + $0x2] sm:$0xff]
    %v1009 = vld [vmem:[#allocation3 + $0xa] sm:$0xff]
    %v1010 = vld [vmem:[#allocation3 + $0x12] sm:$0xff]
    %v1011 = vld [vmem:[#allocation3 + $0x1a] sm:$0xff]
    %v1012 = vsel %vm1004, 0.0, %v1008
    %v1013 = vsel %vm1005, 0.0, %v1009
    %v1014 = vsel %vm1006, 0.0, %v1010
    %v1015 = vsel %vm1007, 0.0, %v1011
    %s1016 = scalar_lea.vmem %s3, 192
    %v1017 = vld [vmem:[%s1016] sm:$0xff]
    %v1018 = vld [vmem:[%s1016 + $0x8] sm:$0xff]
    %v1019 = vld [vmem:[%s1016 + $0x10] sm:$0xff]
    %v1020 = vld [vmem:[%s1016 + $0x18] sm:$0xff]
    %v1021 = vld [vmem:[%s1016 + $0x20] sm:$0xff]
    %v1022 = vld [vmem:[%s1016 + $0x28] sm:$0xff]
    %v1023 = vld [vmem:[%s1016 + $0x30] sm:$0xff]
    %v1024 = vld [vmem:[%s1016 + $0x38] sm:$0xff]
    %s1025 = scalar_lea.vmem %s3, 256
    %v1026 = vld [vmem:[%s1025] sm:$0xff]
    %v1027 = vld [vmem:[%s1025 + $0x8] sm:$0xff]
    %v1028 = vld [vmem:[%s1025 + $0x10] sm:$0xff]
    %v1029 = vld [vmem:[%s1025 + $0x18] sm:$0xff]
    %v1030 = vld [vmem:[%s1025 + $0x20] sm:$0xff]
    %v1031 = vld [vmem:[%s1025 + $0x28] sm:$0xff]
    %v1032 = vld [vmem:[%s1025 + $0x30] sm:$0xff]
    %v1033 = vld [vmem:[%s1025 + $0x38] sm:$0xff]
    %v1035 = vsel %vm58, %v935, 0
    %v1038 = vsel %vm58, %v936, 0
    %v1041 = vsel %vm58, %v937, 0
    %v1044 = vsel %vm58, %v938, 0
    %1046 = vmatprep.subr.mxu0 0.0
    %1047 = vmatpush1.msra.mxu0 %v1026
    %1048 = vmatprep.subr.mxu0 0.0
    %1049 = vmatpush1.msra.mxu0 %v1027
    %1050 = vmatprep.subr.mxu0 0.0
    %1051 = vmatpush1.msra.mxu0 %v1028
    %1052 = vmatprep.subr.mxu0 0.0
    %1053 = vmatpush1.msra.mxu0 %v1029
    %1054 = vmatprep.subr.mxu0 0.0
    %1055 = vmatpush1.msra.mxu0 %v1030
    %1056 = vmatprep.subr.mxu0 0.0
    %1057 = vmatpush1.msra.mxu0 %v1031
    %1058 = vmatprep.subr.mxu0 0.0
    %1059 = vmatpush1.msra.mxu0 %v1032
    %1060 = vmatprep.subr.mxu0 0.0
    %1061 = vmatpush1.msra.mxu0 %v1033
    %1062 = vmatprep.subr.mxu0 0.0
    %1063 = vmatpush1.msra.mxu0 0.0
    %1064 = vmatprep.subr.mxu0 0.0
    %1065 = vmatpush1.msra.mxu0 0.0
    %1066 = vmatprep.subr.mxu0 0.0
    %1067 = vmatpush1.msra.mxu0 0.0
    %1068 = vmatprep.subr.mxu0 0.0
    %1069 = vmatpush1.msra.mxu0 0.0
    %1070 = vmatprep.subr.mxu0 0.0
    %1071 = vmatpush1.msra.mxu0 0.0
    %1072 = vmatprep.subr.mxu0 0.0
    %1073 = vmatpush1.msra.mxu0 0.0
    %1074 = vmatprep.subr.mxu0 0.0
    %1075 = vmatpush1.msra.mxu0 0.0
    %1076 = vmatprep.subr.mxu0 0.0
    %1077 = vmatpush1.msra.mxu0 0.0
    %1078 = vmatprep.subr.mxu0 0.0
    %1079 = vmatpush1.msra.mxu0 0.0
    %1080 = vmatprep.subr.mxu0 0.0
    %1081 = vmatpush1.msra.mxu0 0.0
    %1082 = vmatprep.subr.mxu0 0.0
    %1083 = vmatpush1.msra.mxu0 0.0
    %1084 = vmatprep.subr.mxu0 0.0
    %1085 = vmatpush1.msra.mxu0 0.0
    %1086 = vmatprep.subr.mxu0 0.0
    %1087 = vmatpush1.msra.mxu0 0.0
    %1088 = vmatprep.subr.mxu0 0.0
    %1089 = vmatpush1.msra.mxu0 0.0
    %1090 = vmatprep.subr.mxu0 0.0
    %1091 = vmatpush1.msra.mxu0 0.0
    %1092 = vmatprep.subr.mxu0 0.0
    %1093 = vmatpush1.msra.mxu0 0.0
    %1094 = vmatprep.subr.mxu0 0.0
    %1095 = vmatpush1.msra.mxu0 0.0
    %1096 = vmatprep.subr.mxu0 0.0
    %1097 = vmatpush1.msra.mxu0 0.0
    %1098 = vmatprep.subr.mxu0 0.0
    %1099 = vmatpush1.msra.mxu0 0.0
    %1100 = vmatprep.subr.mxu0 0.0
    %1101 = vmatpush1.msra.mxu0 0.0
    %1102 = vmatprep.subr.mxu0 0.0
    %1103 = vmatpush1.msra.mxu0 0.0
    %1104 = vmatprep.subr.mxu0 0.0
    %1105 = vmatpush1.msra.mxu0 0.0
    %1106 = vmatprep.subr.mxu0 0.0
    %1107 = vmatpush1.msra.mxu0 0.0
    %1108 = vmatprep.subr.mxu0 0.0
    %1109 = vmatpush1.msra.mxu0 0.0
    %1110 = vmatprep.mubr.f32.mxu0 0.0
    %1111 = vmatmul.mubr.f32.gmra.mrb[0].mxu0 %v1035
    %v1112 = vpop.f32.mrb[0].mxu0
    %v1113 = vadd.f32 0.0, %v1112
    %v1114 = vpop.f32.mrb[0].mxu0
    %1115 = vmatprep.mubr.f32.mxu0 0.0
    %1116 = vmatmul.mubr.f32.gmra.mrb[0].mxu0 %v1038
    %v1117 = vpop.f32.mrb[0].mxu0
    %v1118 = vadd.f32 0.0, %v1117
    %v1119 = vpop.f32.mrb[0].mxu0
    %1120 = vmatprep.mubr.f32.mxu0 0.0
    %1121 = vmatmul.mubr.f32.gmra.mrb[0].mxu0 %v1041
    %v1122 = vpop.f32.mrb[0].mxu0
    %v1123 = vadd.f32 0.0, %v1122
    %v1124 = vpop.f32.mrb[0].mxu0
    %1125 = vmatprep.mubr.f32.mxu0 0.0
    %1126 = vmatmul.mubr.f32.gmra.mrb[0].mxu0 %v1044
    %v1127 = vpop.f32.mrb[0].mxu0
    %v1128 = vadd.f32 0.0, %v1127
    %v1129 = vpop.f32.mrb[0].mxu0
    %1130 = vdwg.mxu0
    %v1132 = vsel %vm58, %v1000, 0
    %v1135 = vsel %vm58, %v1001, 0
    %v1138 = vsel %vm58, %v1002, 0
    %v1141 = vsel %vm58, %v1003, 0
    %1143 = vmatprep.subr.mxu0 0.0
    %1144 = vmatpush1.msra.mxu0 %v1017
    %1145 = vmatprep.subr.mxu0 0.0
    %1146 = vmatpush1.msra.mxu0 %v1018
    %1147 = vmatprep.subr.mxu0 0.0
    %1148 = vmatpush1.msra.mxu0 %v1019
    %1149 = vmatprep.subr.mxu0 0.0
    %1150 = vmatpush1.msra.mxu0 %v1020
    %1151 = vmatprep.subr.mxu0 0.0
    %1152 = vmatpush1.msra.mxu0 %v1021
    %1153 = vmatprep.subr.mxu0 0.0
    %1154 = vmatpush1.msra.mxu0 %v1022
    %1155 = vmatprep.subr.mxu0 0.0
    %1156 = vmatpush1.msra.mxu0 %v1023
    %1157 = vmatprep.subr.mxu0 0.0
    %1158 = vmatpush1.msra.mxu0 %v1024
    %1159 = vmatprep.subr.mxu0 0.0
    %1160 = vmatpush1.msra.mxu0 0.0
    %1161 = vmatprep.subr.mxu0 0.0
    %1162 = vmatpush1.msra.mxu0 0.0
    %1163 = vmatprep.subr.mxu0 0.0
    %1164 = vmatpush1.msra.mxu0 0.0
    %1165 = vmatprep.subr.mxu0 0.0
    %1166 = vmatpush1.msra.mxu0 0.0
    %1167 = vmatprep.subr.mxu0 0.0
    %1168 = vmatpush1.msra.mxu0 0.0
    %1169 = vmatprep.subr.mxu0 0.0
    %1170 = vmatpush1.msra.mxu0 0.0
    %1171 = vmatprep.subr.mxu0 0.0
    %1172 = vmatpush1.msra.mxu0 0.0
    %1173 = vmatprep.subr.mxu0 0.0
    %1174 = vmatpush1.msra.mxu0 0.0
    %1175 = vmatprep.subr.mxu0 0.0
    %1176 = vmatpush1.msra.mxu0 0.0
    %1177 = vmatprep.subr.mxu0 0.0
    %1178 = vmatpush1.msra.mxu0 0.0
    %1179 = vmatprep.subr.mxu0 0.0
    %1180 = vmatpush1.msra.mxu0 0.0
    %1181 = vmatprep.subr.mxu0 0.0
    %1182 = vmatpush1.msra.mxu0 0.0
    %1183 = vmatprep.subr.mxu0 0.0
    %1184 = vmatpush1.msra.mxu0 0.0
    %1185 = vmatprep.subr.mxu0 0.0
    %1186 = vmatpush1.msra.mxu0 0.0
    %1187 = vmatprep.subr.mxu0 0.0
    %1188 = vmatpush1.msra.mxu0 0.0
    %1189 = vmatprep.subr.mxu0 0.0
    %1190 = vmatpush1.msra.mxu0 0.0
    %1191 = vmatprep.subr.mxu0 0.0
    %1192 = vmatpush1.msra.mxu0 0.0
    %1193 = vmatprep.subr.mxu0 0.0
    %1194 = vmatpush1.msra.mxu0 0.0
    %1195 = vmatprep.subr.mxu0 0.0
    %1196 = vmatpush1.msra.mxu0 0.0
    %1197 = vmatprep.subr.mxu0 0.0
    %1198 = vmatpush1.msra.mxu0 0.0
    %1199 = vmatprep.subr.mxu0 0.0
    %1200 = vmatpush1.msra.mxu0 0.0
    %1201 = vmatprep.subr.mxu0 0.0
    %1202 = vmatpush1.msra.mxu0 0.0
    %1203 = vmatprep.subr.mxu0 0.0
    %1204 = vmatpush1.msra.mxu0 0.0
    %1205 = vmatprep.subr.mxu0 0.0
    %1206 = vmatpush1.msra.mxu0 0.0
    %1207 = vmatprep.mubr.f32.mxu0 0.0
    %1208 = vmatmul.mubr.f32.gmra.mrb[0].mxu0 %v1132
    %v1209 = vpop.f32.mrb[0].mxu0
    %v1210 = vadd.f32 %v1113, %v1209
    %v1211 = vpop.f32.mrb[0].mxu0
    %1212 = vmatprep.mubr.f32.mxu0 0.0
    %1213 = vmatmul.mubr.f32.gmra.mrb[0].mxu0 %v1135
    %v1214 = vpop.f32.mrb[0].mxu0
    %v1215 = vadd.f32 %v1118, %v1214
    %v1216 = vpop.f32.mrb[0].mxu0
    %1217 = vmatprep.mubr.f32.mxu0 0.0
    %1218 = vmatmul.mubr.f32.gmra.mrb[0].mxu0 %v1138
    %v1219 = vpop.f32.mrb[0].mxu0
    %v1220 = vadd.f32 %v1123, %v1219
    %v1221 = vpop.f32.mrb[0].mxu0
    %1222 = vmatprep.mubr.f32.mxu0 0.0
    %1223 = vmatmul.mubr.f32.gmra.mrb[0].mxu0 %v1141
    %v1224 = vpop.f32.mrb[0].mxu0
    %v1225 = vadd.f32 %v1128, %v1224
    %v1226 = vpop.f32.mrb[0].mxu0
    %1227 = vdwg.mxu0
    %s1228 = scalar_lea.vmem %s3, 320
    %v1229 = vld [vmem:[%s1228] sm:$0xff]
    %v1230 = vld [vmem:[%s1228 + $0x8] sm:$0xff]
    %v1231 = vld [vmem:[%s1228 + $0x10] sm:$0xff]
    %v1232 = vld [vmem:[%s1228 + $0x18] sm:$0xff]
    %v1233 = vld [vmem:[%s1228 + $0x20] sm:$0xff]
    %v1234 = vld [vmem:[%s1228 + $0x28] sm:$0xff]
    %v1235 = vld [vmem:[%s1228 + $0x30] sm:$0xff]
    %v1236 = vld [vmem:[%s1228 + $0x38] sm:$0xff]
    %v1238 = vsel %vm58, %v1012, 0
    %v1241 = vsel %vm58, %v1013, 0
    %v1244 = vsel %vm58, %v1014, 0
    %v1247 = vsel %vm58, %v1015, 0
    %1249 = vmatprep.subr.mxu0 0.0
    %1250 = vmatpush1.msra.mxu0 %v1229
    %1251 = vmatprep.subr.mxu0 0.0
    %1252 = vmatpush1.msra.mxu0 %v1230
    %1253 = vmatprep.subr.mxu0 0.0
    %1254 = vmatpush1.msra.mxu0 %v1231
    %1255 = vmatprep.subr.mxu0 0.0
    %1256 = vmatpush1.msra.mxu0 %v1232
    %1257 = vmatprep.subr.mxu0 0.0
    %1258 = vmatpush1.msra.mxu0 %v1233
    %1259 = vmatprep.subr.mxu0 0.0
    %1260 = vmatpush1.msra.mxu0 %v1234
    %1261 = vmatprep.subr.mxu0 0.0
    %1262 = vmatpush1.msra.mxu0 %v1235
    %1263 = vmatprep.subr.mxu0 0.0
    %1264 = vmatpush1.msra.mxu0 %v1236
    %1265 = vmatprep.subr.mxu0 0.0
    %1266 = vmatpush1.msra.mxu0 0.0
    %1267 = vmatprep.subr.mxu0 0.0
    %1268 = vmatpush1.msra.mxu0 0.0
    %1269 = vmatprep.subr.mxu0 0.0
    %1270 = vmatpush1.msra.mxu0 0.0
    %1271 = vmatprep.subr.mxu0 0.0
    %1272 = vmatpush1.msra.mxu0 0.0
    %1273 = vmatprep.subr.mxu0 0.0
    %1274 = vmatpush1.msra.mxu0 0.0
    %1275 = vmatprep.subr.mxu0 0.0
    %1276 = vmatpush1.msra.mxu0 0.0
    %1277 = vmatprep.subr.mxu0 0.0
    %1278 = vmatpush1.msra.mxu0 0.0
    %1279 = vmatprep.subr.mxu0 0.0
    %1280 = vmatpush1.msra.mxu0 0.0
    %1281 = vmatprep.subr.mxu0 0.0
    %1282 = vmatpush1.msra.mxu0 0.0
    %1283 = vmatprep.subr.mxu0 0.0
    %1284 = vmatpush1.msra.mxu0 0.0
    %1285 = vmatprep.subr.mxu0 0.0
    %1286 = vmatpush1.msra.mxu0 0.0
    %1287 = vmatprep.subr.mxu0 0.0
    %1288 = vmatpush1.msra.mxu0 0.0
    %1289 = vmatprep.subr.mxu0 0.0
    %1290 = vmatpush1.msra.mxu0 0.0
    %1291 = vmatprep.subr.mxu0 0.0
    %1292 = vmatpush1.msra.mxu0 0.0
    %1293 = vmatprep.subr.mxu0 0.0
    %1294 = vmatpush1.msra.mxu0 0.0
    %1295 = vmatprep.subr.mxu0 0.0
    %1296 = vmatpush1.msra.mxu0 0.0
    %1297 = vmatprep.subr.mxu0 0.0
    %1298 = vmatpush1.msra.mxu0 0.0
    %1299 = vmatprep.subr.mxu0 0.0
    %1300 = vmatpush1.msra.mxu0 0.0
    %1301 = vmatprep.subr.mxu0 0.0
    %1302 = vmatpush1.msra.mxu0 0.0
    %1303 = vmatprep.subr.mxu0 0.0
    %1304 = vmatpush1.msra.mxu0 0.0
    %1305 = vmatprep.subr.mxu0 0.0
    %1306 = vmatpush1.msra.mxu0 0.0
    %1307 = vmatprep.subr.mxu0 0.0
    %1308 = vmatpush1.msra.mxu0 0.0
    %1309 = vmatprep.subr.mxu0 0.0
    %1310 = vmatpush1.msra.mxu0 0.0
    %1311 = vmatprep.subr.mxu0 0.0
    %1312 = vmatpush1.msra.mxu0 0.0
    %1313 = vmatprep.mubr.f32.mxu0 0.0
    %1314 = vmatmul.mubr.f32.gmra.mrb[0].mxu0 %v1238
    %v1315 = vpop.f32.mrb[0].mxu0
    %v1316 = vadd.f32 0.0, %v1315
    %v1317 = vpop.f32.mrb[0].mxu0
    %1318 = vmatprep.mubr.f32.mxu0 0.0
    %1319 = vmatmul.mubr.f32.gmra.mrb[0].mxu0 %v1241
    %v1320 = vpop.f32.mrb[0].mxu0
    %v1321 = vadd.f32 0.0, %v1320
    %v1322 = vpop.f32.mrb[0].mxu0
    %1323 = vmatprep.mubr.f32.mxu0 0.0
    %1324 = vmatmul.mubr.f32.gmra.mrb[0].mxu0 %v1244
    %v1325 = vpop.f32.mrb[0].mxu0
    %v1326 = vadd.f32 0.0, %v1325
    %v1327 = vpop.f32.mrb[0].mxu0
    %1328 = vmatprep.mubr.f32.mxu0 0.0
    %1329 = vmatmul.mubr.f32.gmra.mrb[0].mxu0 %v1247
    %v1330 = vpop.f32.mrb[0].mxu0
    %v1331 = vadd.f32 0.0, %v1330
    %v1332 = vpop.f32.mrb[0].mxu0
    %1333 = vdwg.mxu0
    %v1334 = vadd.f32 %v1210, %v1316
    %v1335 = vadd.f32 %v1215, %v1321
    %v1336 = vadd.f32 %v1220, %v1326
    %v1337 = vadd.f32 %v1225, %v1331
    %s1338 = scalar_lea.vmem %s4, 1
    %v1339 = vld [vmem:[%s1338] sm:$0x1]
    %v1341 = vlaneseq
    %v1342 = vshrl.u32 %v1341, 7
    %v1343 = vsub.s32 0, %v1342
    %v1344 = vrot.slane %v1339, %v1343
    %v1346 = vadd.f32 %v1334, %v1344
    %v1347 = vadd.f32 %v1335, %v1344
    %v1348 = vadd.f32 %v1336, %v1344
    %v1349 = vadd.f32 %v1337, %v1344
    %1350 = vst.msk [vmem:[#allocation2] sm:$0xff] %vm58, %v1346
    %1351 = vst.msk [vmem:[#allocation2 + $0x8] sm:$0xff] %vm58, %v1347
    %1352 = vst.msk [vmem:[#allocation2 + $0x10] sm:$0xff] %vm58, %v1348
    %1353 = vst.msk [vmem:[#allocation2 + $0x18] sm:$0xff] %vm58, %v1349
    %v1354 = vld [vmem:[#allocation2] ss:$2 sm:$0xff]
    %v1355 = vld [vmem:[%s269] ss:$2 sm:$0xff]
    %v1356 = vld [vmem:[%s283] ss:$2 sm:$0xff]
    %v1357 = vld [vmem:[%s285] ss:$2 sm:$0xff]
    %v1358 = vmax.f32 %v1354, %v1356
    %v1359 = vmax.f32 %v1355, %v1357
    %v1360 = vmax.f32 %v1358, 0.0
    %v1361 = vmax.f32 %v1359, 0.0
    %1362 = vst.msk [vmem:[#allocation3 + $0x1] sm:$0xff] %vm58, %v1360
    %1363 = vst.msk [vmem:[#allocation3 + $0x9] sm:$0xff] %vm58, %v1361
    %1364 = vst.msk [vmem:[#allocation3 + $0x11] sm:$0x1] %vm315, 0.0
    %vm1365 = vcmp.lt.s32.totalorder %v327, 0
    %v1366 = vsub.s32 0, %v327
    %v1367 = vsel %vm1365, %v1366, %v327
    %v1368 = vshrl.u32 %v1367, 3
    %v1369 = vand.u32 %v1367, 7
    %v1370 = vsub.s32 0, %v1369
    %v1371 = vsel %vm1365, %v1370, %v1369
    %vm1372 = vcmp.lt.s32.totalorder %v328, 0
    %v1373 = vsub.s32 0, %v328
    %v1374 = vsel %vm1372, %v1373, %v328
    %v1375 = vshrl.u32 %v1374, 3
    %v1376 = vand.u32 %v1374, 7
    %v1377 = vsub.s32 0, %v1376
    %v1378 = vsel %vm1372, %v1377, %v1376
    %vm1379 = vcmp.ne.s32.totalorder %v1371, 0
    %vm1380 = vcmp.ne.s32.totalorder %v1378, 0
    %vm1381 = vcmp.lt.s32.totalorder %v1371, 0
    %vm1382 = vcmp.lt.s32.totalorder %v1378, 0
    %vm1383 = vmand %vm1381, %vm1379
    %vm1384 = vmand %vm1382, %vm1380
    %v1385 = vadd.s32 %v1371, 8
    %v1386 = vadd.s32 %v1378, 8
    %v1387 = vsel %vm1383, %v1385, %v1371
    %v1388 = vsel %vm1384, %v1386, %v1378
    %vm1389 = vcmp.eq.s32.totalorder %v1387, 0
    %vm1390 = vcmp.eq.s32.totalorder %v1388, 0
    %v1391 = vld [vmem:[#allocation3] sm:$0xff]
    %v1392 = vld [vmem:[#allocation3 + $0x8] sm:$0xff]
    %v1393 = vsel %vm1389, 0.0, %v1391
    %v1394 = vsel %vm1390, 0.0, %v1392
    %vm1395 = vcmp.eq.s32.totalorder %v1387, 7
    %vm1396 = vcmp.eq.s32.totalorder %v1388, 7
    %v1397 = vld [vmem:[#allocation3 + $0x2] sm:$0xff]
    %v1398 = vld [vmem:[#allocation3 + $0xa] sm:$0xff]
    %v1399 = vsel %vm1395, 0.0, %v1397
    %v1400 = vsel %vm1396, 0.0, %v1398
    %s1401 = scalar_lea.vmem %s3, 384
    %v1402 = vld [vmem:[%s1401] sm:$0xff]
    %v1403 = vld [vmem:[%s1401 + $0x8] sm:$0xff]
    %v1404 = vld [vmem:[%s1401 + $0x10] sm:$0xff]
    %v1405 = vld [vmem:[%s1401 + $0x18] sm:$0xff]
    %v1406 = vld [vmem:[%s1401 + $0x20] sm:$0xff]
    %v1407 = vld [vmem:[%s1401 + $0x28] sm:$0xff]
    %v1408 = vld [vmem:[%s1401 + $0x30] sm:$0xff]
    %v1409 = vld [vmem:[%s1401 + $0x38] sm:$0xff]
    %s1410 = scalar_lea.vmem %s3, 448
    %v1411 = vld [vmem:[%s1410] sm:$0xff]
    %v1412 = vld [vmem:[%s1410 + $0x8] sm:$0xff]
    %v1413 = vld [vmem:[%s1410 + $0x10] sm:$0xff]
    %v1414 = vld [vmem:[%s1410 + $0x18] sm:$0xff]
    %v1415 = vld [vmem:[%s1410 + $0x20] sm:$0xff]
    %v1416 = vld [vmem:[%s1410 + $0x28] sm:$0xff]
    %v1417 = vld [vmem:[%s1410 + $0x30] sm:$0xff]
    %v1418 = vld [vmem:[%s1410 + $0x38] sm:$0xff]
    %v1420 = vsel %vm58, %v1360, 0
    %v1423 = vsel %vm58, %v1361, 0
    %1425 = vmatprep.subr.mxu0 0.0
    %1426 = vmatpush1.msra.mxu0 %v1411
    %1427 = vmatprep.subr.mxu0 0.0
    %1428 = vmatpush1.msra.mxu0 %v1412
    %1429 = vmatprep.subr.mxu0 0.0
    %1430 = vmatpush1.msra.mxu0 %v1413
    %1431 = vmatprep.subr.mxu0 0.0
    %1432 = vmatpush1.msra.mxu0 %v1414
    %1433 = vmatprep.subr.mxu0 0.0
    %1434 = vmatpush1.msra.mxu0 %v1415
    %1435 = vmatprep.subr.mxu0 0.0
    %1436 = vmatpush1.msra.mxu0 %v1416
    %1437 = vmatprep.subr.mxu0 0.0
    %1438 = vmatpush1.msra.mxu0 %v1417
    %1439 = vmatprep.subr.mxu0 0.0
    %1440 = vmatpush1.msra.mxu0 %v1418
    %1441 = vmatprep.subr.mxu0 0.0
    %1442 = vmatpush1.msra.mxu0 0.0
    %1443 = vmatprep.subr.mxu0 0.0
    %1444 = vmatpush1.msra.mxu0 0.0
    %1445 = vmatprep.subr.mxu0 0.0
    %1446 = vmatpush1.msra.mxu0 0.0
    %1447 = vmatprep.subr.mxu0 0.0
    %1448 = vmatpush1.msra.mxu0 0.0
    %1449 = vmatprep.subr.mxu0 0.0
    %1450 = vmatpush1.msra.mxu0 0.0
    %1451 = vmatprep.subr.mxu0 0.0
    %1452 = vmatpush1.msra.mxu0 0.0
    %1453 = vmatprep.subr.mxu0 0.0
    %1454 = vmatpush1.msra.mxu0 0.0
    %1455 = vmatprep.subr.mxu0 0.0
    %1456 = vmatpush1.msra.mxu0 0.0
    %1457 = vmatprep.subr.mxu0 0.0
    %1458 = vmatpush1.msra.mxu0 0.0
    %1459 = vmatprep.subr.mxu0 0.0
    %1460 = vmatpush1.msra.mxu0 0.0
    %1461 = vmatprep.subr.mxu0 0.0
    %1462 = vmatpush1.msra.mxu0 0.0
    %1463 = vmatprep.subr.mxu0 0.0
    %1464 = vmatpush1.msra.mxu0 0.0
    %1465 = vmatprep.subr.mxu0 0.0
    %1466 = vmatpush1.msra.mxu0 0.0
    %1467 = vmatprep.subr.mxu0 0.0
    %1468 = vmatpush1.msra.mxu0 0.0
    %1469 = vmatprep.subr.mxu0 0.0
    %1470 = vmatpush1.msra.mxu0 0.0
    %1471 = vmatprep.subr.mxu0 0.0
    %1472 = vmatpush1.msra.mxu0 0.0
    %1473 = vmatprep.subr.mxu0 0.0
    %1474 = vmatpush1.msra.mxu0 0.0
    %1475 = vmatprep.subr.mxu0 0.0
    %1476 = vmatpush1.msra.mxu0 0.0
    %1477 = vmatprep.subr.mxu0 0.0
    %1478 = vmatpush1.msra.mxu0 0.0
    %1479 = vmatprep.subr.mxu0 0.0
    %1480 = vmatpush1.msra.mxu0 0.0
    %1481 = vmatprep.subr.mxu0 0.0
    %1482 = vmatpush1.msra.mxu0 0.0
    %1483 = vmatprep.subr.mxu0 0.0
    %1484 = vmatpush1.msra.mxu0 0.0
    %1485 = vmatprep.subr.mxu0 0.0
    %1486 = vmatpush1.msra.mxu0 0.0
    %1487 = vmatprep.subr.mxu0 0.0
    %1488 = vmatpush1.msra.mxu0 0.0
    %1489 = vmatprep.mubr.f32.mxu0 0.0
    %1490 = vmatmul.mubr.f32.gmra.mrb[0].mxu0 %v1420
    %v1491 = vpop.f32.mrb[0].mxu0
    %v1492 = vadd.f32 0.0, %v1491
    %v1493 = vpop.f32.mrb[0].mxu0
    %1494 = vmatprep.mubr.f32.mxu0 0.0
    %1495 = vmatmul.mubr.f32.gmra.mrb[0].mxu0 %v1423
    %v1496 = vpop.f32.mrb[0].mxu0
    %v1497 = vadd.f32 0.0, %v1496
    %v1498 = vpop.f32.mrb[0].mxu0
    %1499 = vdwg.mxu0
    %v1501 = vsel %vm58, %v1393, 0
    %v1504 = vsel %vm58, %v1394, 0
    %1506 = vmatprep.subr.mxu0 0.0
    %1507 = vmatpush1.msra.mxu0 %v1402
    %1508 = vmatprep.subr.mxu0 0.0
    %1509 = vmatpush1.msra.mxu0 %v1403
    %1510 = vmatprep.subr.mxu0 0.0
    %1511 = vmatpush1.msra.mxu0 %v1404
    %1512 = vmatprep.subr.mxu0 0.0
    %1513 = vmatpush1.msra.mxu0 %v1405
    %1514 = vmatprep.subr.mxu0 0.0
    %1515 = vmatpush1.msra.mxu0 %v1406
    %1516 = vmatprep.subr.mxu0 0.0
    %1517 = vmatpush1.msra.mxu0 %v1407
    %1518 = vmatprep.subr.mxu0 0.0
    %1519 = vmatpush1.msra.mxu0 %v1408
    %1520 = vmatprep.subr.mxu0 0.0
    %1521 = vmatpush1.msra.mxu0 %v1409
    %1522 = vmatprep.subr.mxu0 0.0
    %1523 = vmatpush1.msra.mxu0 0.0
    %1524 = vmatprep.subr.mxu0 0.0
    %1525 = vmatpush1.msra.mxu0 0.0
    %1526 = vmatprep.subr.mxu0 0.0
    %1527 = vmatpush1.msra.mxu0 0.0
    %1528 = vmatprep.subr.mxu0 0.0
    %1529 = vmatpush1.msra.mxu0 0.0
    %1530 = vmatprep.subr.mxu0 0.0
    %1531 = vmatpush1.msra.mxu0 0.0
    %1532 = vmatprep.subr.mxu0 0.0
    %1533 = vmatpush1.msra.mxu0 0.0
    %1534 = vmatprep.subr.mxu0 0.0
    %1535 = vmatpush1.msra.mxu0 0.0
    %1536 = vmatprep.subr.mxu0 0.0
    %1537 = vmatpush1.msra.mxu0 0.0
    %1538 = vmatprep.subr.mxu0 0.0
    %1539 = vmatpush1.msra.mxu0 0.0
    %1540 = vmatprep.subr.mxu0 0.0
    %1541 = vmatpush1.msra.mxu0 0.0
    %1542 = vmatprep.subr.mxu0 0.0
    %1543 = vmatpush1.msra.mxu0 0.0
    %1544 = vmatprep.subr.mxu0 0.0
    %1545 = vmatpush1.msra.mxu0 0.0
    %1546 = vmatprep.subr.mxu0 0.0
    %1547 = vmatpush1.msra.mxu0 0.0
    %1548 = vmatprep.subr.mxu0 0.0
    %1549 = vmatpush1.msra.mxu0 0.0
    %1550 = vmatprep.subr.mxu0 0.0
    %1551 = vmatpush1.msra.mxu0 0.0
    %1552 = vmatprep.subr.mxu0 0.0
    %1553 = vmatpush1.msra.mxu0 0.0
    %1554 = vmatprep.subr.mxu0 0.0
    %1555 = vmatpush1.msra.mxu0 0.0
    %1556 = vmatprep.subr.mxu0 0.0
    %1557 = vmatpush1.msra.mxu0 0.0
    %1558 = vmatprep.subr.mxu0 0.0
    %1559 = vmatpush1.msra.mxu0 0.0
    %1560 = vmatprep.subr.mxu0 0.0
    %1561 = vmatpush1.msra.mxu0 0.0
    %1562 = vmatprep.subr.mxu0 0.0
    %1563 = vmatpush1.msra.mxu0 0.0
    %1564 = vmatprep.subr.mxu0 0.0
    %1565 = vmatpush1.msra.mxu0 0.0
    %1566 = vmatprep.subr.mxu0 0.0
    %1567 = vmatpush1.msra.mxu0 0.0
    %1568 = vmatprep.subr.mxu0 0.0
    %1569 = vmatpush1.msra.mxu0 0.0
    %1570 = vmatprep.mubr.f32.mxu0 0.0
    %1571 = vmatmul.mubr.f32.gmra.mrb[0].mxu0 %v1501
    %v1572 = vpop.f32.mrb[0].mxu0
    %v1573 = vadd.f32 %v1492, %v1572
    %v1574 = vpop.f32.mrb[0].mxu0
    %1575 = vmatprep.mubr.f32.mxu0 0.0
    %1576 = vmatmul.mubr.f32.gmra.mrb[0].mxu0 %v1504
    %v1577 = vpop.f32.mrb[0].mxu0
    %v1578 = vadd.f32 %v1497, %v1577
    %v1579 = vpop.f32.mrb[0].mxu0
    %1580 = vdwg.mxu0
    %s1581 = scalar_lea.vmem %s3, 512
    %v1582 = vld [vmem:[%s1581] sm:$0xff]
    %v1583 = vld [vmem:[%s1581 + $0x8] sm:$0xff]
    %v1584 = vld [vmem:[%s1581 + $0x10] sm:$0xff]
    %v1585 = vld [vmem:[%s1581 + $0x18] sm:$0xff]
    %v1586 = vld [vmem:[%s1581 + $0x20] sm:$0xff]
    %v1587 = vld [vmem:[%s1581 + $0x28] sm:$0xff]
    %v1588 = vld [vmem:[%s1581 + $0x30] sm:$0xff]
    %v1589 = vld [vmem:[%s1581 + $0x38] sm:$0xff]
    %v1591 = vsel %vm58, %v1399, 0
    %v1594 = vsel %vm58, %v1400, 0
    %1596 = vmatprep.subr.mxu0 0.0
    %1597 = vmatpush1.msra.mxu0 %v1582
    %1598 = vmatprep.subr.mxu0 0.0
    %1599 = vmatpush1.msra.mxu0 %v1583
    %1600 = vmatprep.subr.mxu0 0.0
    %1601 = vmatpush1.msra.mxu0 %v1584
    %1602 = vmatprep.subr.mxu0 0.0
    %1603 = vmatpush1.msra.mxu0 %v1585
    %1604 = vmatprep.subr.mxu0 0.0
    %1605 = vmatpush1.msra.mxu0 %v1586
    %1606 = vmatprep.subr.mxu0 0.0
    %1607 = vmatpush1.msra.mxu0 %v1587
    %1608 = vmatprep.subr.mxu0 0.0
    %1609 = vmatpush1.msra.mxu0 %v1588
    %1610 = vmatprep.subr.mxu0 0.0
    %1611 = vmatpush1.msra.mxu0 %v1589
    %1612 = vmatprep.subr.mxu0 0.0
    %1613 = vmatpush1.msra.mxu0 0.0
    %1614 = vmatprep.subr.mxu0 0.0
    %1615 = vmatpush1.msra.mxu0 0.0
    %1616 = vmatprep.subr.mxu0 0.0
    %1617 = vmatpush1.msra.mxu0 0.0
    %1618 = vmatprep.subr.mxu0 0.0
    %1619 = vmatpush1.msra.mxu0 0.0
    %1620 = vmatprep.subr.mxu0 0.0
    %1621 = vmatpush1.msra.mxu0 0.0
    %1622 = vmatprep.subr.mxu0 0.0
    %1623 = vmatpush1.msra.mxu0 0.0
    %1624 = vmatprep.subr.mxu0 0.0
    %1625 = vmatpush1.msra.mxu0 0.0
    %1626 = vmatprep.subr.mxu0 0.0
    %1627 = vmatpush1.msra.mxu0 0.0
    %1628 = vmatprep.subr.mxu0 0.0
    %1629 = vmatpush1.msra.mxu0 0.0
    %1630 = vmatprep.subr.mxu0 0.0
    %1631 = vmatpush1.msra.mxu0 0.0
    %1632 = vmatprep.subr.mxu0 0.0
    %1633 = vmatpush1.msra.mxu0 0.0
    %1634 = vmatprep.subr.mxu0 0.0
    %1635 = vmatpush1.msra.mxu0 0.0
    %1636 = vmatprep.subr.mxu0 0.0
    %1637 = vmatpush1.msra.mxu0 0.0
    %1638 = vmatprep.subr.mxu0 0.0
    %1639 = vmatpush1.msra.mxu0 0.0
    %1640 = vmatprep.subr.mxu0 0.0
    %1641 = vmatpush1.msra.mxu0 0.0
    %1642 = vmatprep.subr.mxu0 0.0
    %1643 = vmatpush1.msra.mxu0 0.0
    %1644 = vmatprep.subr.mxu0 0.0
    %1645 = vmatpush1.msra.mxu0 0.0
    %1646 = vmatprep.subr.mxu0 0.0
    %1647 = vmatpush1.msra.mxu0 0.0
    %1648 = vmatprep.subr.mxu0 0.0
    %1649 = vmatpush1.msra.mxu0 0.0
    %1650 = vmatprep.subr.mxu0 0.0
    %1651 = vmatpush1.msra.mxu0 0.0
    %1652 = vmatprep.subr.mxu0 0.0
    %1653 = vmatpush1.msra.mxu0 0.0
    %1654 = vmatprep.subr.mxu0 0.0
    %1655 = vmatpush1.msra.mxu0 0.0
    %1656 = vmatprep.subr.mxu0 0.0
    %1657 = vmatpush1.msra.mxu0 0.0
    %1658 = vmatprep.subr.mxu0 0.0
    %1659 = vmatpush1.msra.mxu0 0.0
    %1660 = vmatprep.mubr.f32.mxu0 0.0
    %1661 = vmatmul.mubr.f32.gmra.mrb[0].mxu0 %v1591
    %v1662 = vpop.f32.mrb[0].mxu0
    %v1663 = vadd.f32 0.0, %v1662
    %v1664 = vpop.f32.mrb[0].mxu0
    %1665 = vmatprep.mubr.f32.mxu0 0.0
    %1666 = vmatmul.mubr.f32.gmra.mrb[0].mxu0 %v1594
    %v1667 = vpop.f32.mrb[0].mxu0
    %v1668 = vadd.f32 0.0, %v1667
    %v1669 = vpop.f32.mrb[0].mxu0
    %1670 = vdwg.mxu0
    %v1671 = vadd.f32 %v1573, %v1663
    %v1672 = vadd.f32 %v1578, %v1668
    %s1673 = scalar_lea.vmem %s4, 2
    %v1674 = vld [vmem:[%s1673] sm:$0x1]
    %v1676 = vlaneseq
    %v1677 = vshrl.u32 %v1676, 7
    %v1678 = vsub.s32 0, %v1677
    %v1679 = vrot.slane %v1674, %v1678
    %v1681 = vadd.f32 %v1671, %v1679
    %v1682 = vadd.f32 %v1672, %v1679
    %1683 = vst.msk [vmem:[#allocation2] sm:$0xff] %vm58, %v1681
    %1684 = vst.msk [vmem:[#allocation2 + $0x8] sm:$0xff] %vm58, %v1682
    %v1685 = vld [vmem:[#allocation2] ss:$2 sm:$0xff]
    %v1686 = vld [vmem:[%s283] ss:$2 sm:$0xff]
    %v1687 = vmax.f32 %v1685, %v1686
    %v1688 = vmax.f32 %v1687, 0.0
    %1689 = vst.msk [vmem:[#allocation3 + $0x1] sm:$0xff] %vm58, %v1688
    %1690 = vst.msk [vmem:[#allocation3 + $0x9] sm:$0x1] %vm315, 0.0
    %vm1691 = vcmp.lt.s32.totalorder %v327, 0
    %v1692 = vsub.s32 0, %v327
    %v1693 = vsel %vm1691, %v1692, %v327
    %v1694 = vshrl.u32 %v1693, 2
    %v1695 = vand.u32 %v1693, 3
    %v1696 = vsub.s32 0, %v1695
    %v1697 = vsel %vm1691, %v1696, %v1695
    %vm1698 = vcmp.ne.s32.totalorder %v1697, 0
    %vm1699 = vcmp.lt.s32.totalorder %v1697, 0
    %vm1700 = vmand %vm1699, %vm1698
    %v1701 = vadd.s32 %v1697, 4
    %v1702 = vsel %vm1700, %v1701, %v1697
    %vm1703 = vcmp.eq.s32.totalorder %v1702, 0
    %v1704 = vld [vmem:[#allocation3] sm:$0xff]
    %v1705 = vsel %vm1703, 0.0, %v1704
    %vm1706 = vcmp.eq.s32.totalorder %v1702, 3
    %v1707 = vld [vmem:[#allocation3 + $0x2] sm:$0xff]
    %v1708 = vsel %vm1706, 0.0, %v1707
    %s1709 = scalar_lea.vmem %s3, 576
    %v1710 = vld [vmem:[%s1709] sm:$0xff]
    %v1711 = vld [vmem:[%s1709 + $0x8] sm:$0xff]
    %v1712 = vld [vmem:[%s1709 + $0x10] sm:$0xff]
    %v1713 = vld [vmem:[%s1709 + $0x18] sm:$0xff]
    %v1714 = vld [vmem:[%s1709 + $0x20] sm:$0xff]
    %v1715 = vld [vmem:[%s1709 + $0x28] sm:$0xff]
    %v1716 = vld [vmem:[%s1709 + $0x30] sm:$0xff]
    %v1717 = vld [vmem:[%s1709 + $0x38] sm:$0xff]
    %s1718 = scalar_lea.vmem %s3, 640
    %v1719 = vld [vmem:[%s1718] sm:$0xff]
    %v1720 = vld [vmem:[%s1718 + $0x8] sm:$0xff]
    %v1721 = vld [vmem:[%s1718 + $0x10] sm:$0xff]
    %v1722 = vld [vmem:[%s1718 + $0x18] sm:$0xff]
    %v1723 = vld [vmem:[%s1718 + $0x20] sm:$0xff]
    %v1724 = vld [vmem:[%s1718 + $0x28] sm:$0xff]
    %v1725 = vld [vmem:[%s1718 + $0x30] sm:$0xff]
    %v1726 = vld [vmem:[%s1718 + $0x38] sm:$0xff]
    %v1728 = vsel %vm58, %v1688, 0
    %1730 = vmatprep.subr.mxu0 0.0
    %1731 = vmatpush1.msra.mxu0 %v1719
    %1732 = vmatprep.subr.mxu0 0.0
    %1733 = vmatpush1.msra.mxu0 %v1720
    %1734 = vmatprep.subr.mxu0 0.0
    %1735 = vmatpush1.msra.mxu0 %v1721
    %1736 = vmatprep.subr.mxu0 0.0
    %1737 = vmatpush1.msra.mxu0 %v1722
    %1738 = vmatprep.subr.mxu0 0.0
    %1739 = vmatpush1.msra.mxu0 %v1723
    %1740 = vmatprep.subr.mxu0 0.0
    %1741 = vmatpush1.msra.mxu0 %v1724
    %1742 = vmatprep.subr.mxu0 0.0
    %1743 = vmatpush1.msra.mxu0 %v1725
    %1744 = vmatprep.subr.mxu0 0.0
    %1745 = vmatpush1.msra.mxu0 %v1726
    %1746 = vmatprep.subr.mxu0 0.0
    %1747 = vmatpush1.msra.mxu0 0.0
    %1748 = vmatprep.subr.mxu0 0.0
    %1749 = vmatpush1.msra.mxu0 0.0
    %1750 = vmatprep.subr.mxu0 0.0
    %1751 = vmatpush1.msra.mxu0 0.0
    %1752 = vmatprep.subr.mxu0 0.0
    %1753 = vmatpush1.msra.mxu0 0.0
    %1754 = vmatprep.subr.mxu0 0.0
    %1755 = vmatpush1.msra.mxu0 0.0
    %1756 = vmatprep.subr.mxu0 0.0
    %1757 = vmatpush1.msra.mxu0 0.0
    %1758 = vmatprep.subr.mxu0 0.0
    %1759 = vmatpush1.msra.mxu0 0.0
    %1760 = vmatprep.subr.mxu0 0.0
    %1761 = vmatpush1.msra.mxu0 0.0
    %1762 = vmatprep.subr.mxu0 0.0
    %1763 = vmatpush1.msra.mxu0 0.0
    %1764 = vmatprep.subr.mxu0 0.0
    %1765 = vmatpush1.msra.mxu0 0.0
    %1766 = vmatprep.subr.mxu0 0.0
    %1767 = vmatpush1.msra.mxu0 0.0
    %1768 = vmatprep.subr.mxu0 0.0
    %1769 = vmatpush1.msra.mxu0 0.0
    %1770 = vmatprep.subr.mxu0 0.0
    %1771 = vmatpush1.msra.mxu0 0.0
    %1772 = vmatprep.subr.mxu0 0.0
    %1773 = vmatpush1.msra.mxu0 0.0
    %1774 = vmatprep.subr.mxu0 0.0
    %1775 = vmatpush1.msra.mxu0 0.0
    %1776 = vmatprep.subr.mxu0 0.0
    %1777 = vmatpush1.msra.mxu0 0.0
    %1778 = vmatprep.subr.mxu0 0.0
    %1779 = vmatpush1.msra.mxu0 0.0
    %1780 = vmatprep.subr.mxu0 0.0
    %1781 = vmatpush1.msra.mxu0 0.0
    %1782 = vmatprep.subr.mxu0 0.0
    %1783 = vmatpush1.msra.mxu0 0.0
    %1784 = vmatprep.subr.mxu0 0.0
    %1785 = vmatpush1.msra.mxu0 0.0
    %1786 = vmatprep.subr.mxu0 0.0
    %1787 = vmatpush1.msra.mxu0 0.0
    %1788 = vmatprep.subr.mxu0 0.0
    %1789 = vmatpush1.msra.mxu0 0.0
    %1790 = vmatprep.subr.mxu0 0.0
    %1791 = vmatpush1.msra.mxu0 0.0
    %1792 = vmatprep.subr.mxu0 0.0
    %1793 = vmatpush1.msra.mxu0 0.0
    %1794 = vmatprep.mubr.f32.mxu0 0.0
    %1795 = vmatmul.mubr.f32.gmra.mrb[0].mxu0 %v1728
    %v1796 = vpop.f32.mrb[0].mxu0
    %v1797 = vadd.f32 0.0, %v1796
    %v1798 = vpop.f32.mrb[0].mxu0
    %1799 = vdwg.mxu0
    %v1801 = vsel %vm58, %v1705, 0
    %1803 = vmatprep.subr.mxu0 0.0
    %1804 = vmatpush1.msra.mxu0 %v1710
    %1805 = vmatprep.subr.mxu0 0.0
    %1806 = vmatpush1.msra.mxu0 %v1711
    %1807 = vmatprep.subr.mxu0 0.0
    %1808 = vmatpush1.msra.mxu0 %v1712
    %1809 = vmatprep.subr.mxu0 0.0
    %1810 = vmatpush1.msra.mxu0 %v1713
    %1811 = vmatprep.subr.mxu0 0.0
    %1812 = vmatpush1.msra.mxu0 %v1714
    %1813 = vmatprep.subr.mxu0 0.0
    %1814 = vmatpush1.msra.mxu0 %v1715
    %1815 = vmatprep.subr.mxu0 0.0
    %1816 = vmatpush1.msra.mxu0 %v1716
    %1817 = vmatprep.subr.mxu0 0.0
    %1818 = vmatpush1.msra.mxu0 %v1717
    %1819 = vmatprep.subr.mxu0 0.0
    %1820 = vmatpush1.msra.mxu0 0.0
    %1821 = vmatprep.subr.mxu0 0.0
    %1822 = vmatpush1.msra.mxu0 0.0
    %1823 = vmatprep.subr.mxu0 0.0
    %1824 = vmatpush1.msra.mxu0 0.0
    %1825 = vmatprep.subr.mxu0 0.0
    %1826 = vmatpush1.msra.mxu0 0.0
    %1827 = vmatprep.subr.mxu0 0.0
    %1828 = vmatpush1.msra.mxu0 0.0
    %1829 = vmatprep.subr.mxu0 0.0
    %1830 = vmatpush1.msra.mxu0 0.0
    %1831 = vmatprep.subr.mxu0 0.0
    %1832 = vmatpush1.msra.mxu0 0.0
    %1833 = vmatprep.subr.mxu0 0.0
    %1834 = vmatpush1.msra.mxu0 0.0
    %1835 = vmatprep.subr.mxu0 0.0
    %1836 = vmatpush1.msra.mxu0 0.0
    %1837 = vmatprep.subr.mxu0 0.0
    %1838 = vmatpush1.msra.mxu0 0.0
    %1839 = vmatprep.subr.mxu0 0.0
    %1840 = vmatpush1.msra.mxu0 0.0
    %1841 = vmatprep.subr.mxu0 0.0
    %1842 = vmatpush1.msra.mxu0 0.0
    %1843 = vmatprep.subr.mxu0 0.0
    %1844 = vmatpush1.msra.mxu0 0.0
    %1845 = vmatprep.subr.mxu0 0.0
    %1846 = vmatpush1.msra.mxu0 0.0
    %1847 = vmatprep.subr.mxu0 0.0
    %1848 = vmatpush1.msra.mxu0 0.0
    %1849 = vmatprep.subr.mxu0 0.0
    %1850 = vmatpush1.msra.mxu0 0.0
    %1851 = vmatprep.subr.mxu0 0.0
    %1852 = vmatpush1.msra.mxu0 0.0
    %1853 = vmatprep.subr.mxu0 0.0
    %1854 = vmatpush1.msra.mxu0 0.0
    %1855 = vmatprep.subr.mxu0 0.0
    %1856 = vmatpush1.msra.mxu0 0.0
    %1857 = vmatprep.subr.mxu0 0.0
    %1858 = vmatpush1.msra.mxu0 0.0
    %1859 = vmatprep.subr.mxu0 0.0
    %1860 = vmatpush1.msra.mxu0 0.0
    %1861 = vmatprep.subr.mxu0 0.0
    %1862 = vmatpush1.msra.mxu0 0.0
    %1863 = vmatprep.subr.mxu0 0.0
    %1864 = vmatpush1.msra.mxu0 0.0
    %1865 = vmatprep.subr.mxu0 0.0
    %1866 = vmatpush1.msra.mxu0 0.0
    %1867 = vmatprep.mubr.f32.mxu0 0.0
    %1868 = vmatmul.mubr.f32.gmra.mrb[0].mxu0 %v1801
    %v1869 = vpop.f32.mrb[0].mxu0
    %v1870 = vadd.f32 %v1797, %v1869
    %v1871 = vpop.f32.mrb[0].mxu0
    %1872 = vdwg.mxu0
    %s1873 = scalar_lea.vmem %s3, 704
    %v1874 = vld [vmem:[%s1873] sm:$0xff]
    %v1875 = vld [vmem:[%s1873 + $0x8] sm:$0xff]
    %v1876 = vld [vmem:[%s1873 + $0x10] sm:$0xff]
    %v1877 = vld [vmem:[%s1873 + $0x18] sm:$0xff]
    %v1878 = vld [vmem:[%s1873 + $0x20] sm:$0xff]
    %v1879 = vld [vmem:[%s1873 + $0x28] sm:$0xff]
    %v1880 = vld [vmem:[%s1873 + $0x30] sm:$0xff]
    %v1881 = vld [vmem:[%s1873 + $0x38] sm:$0xff]
    %v1883 = vsel %vm58, %v1708, 0
    %1885 = vmatprep.subr.mxu0 0.0
    %1886 = vmatpush1.msra.mxu0 %v1874
    %1887 = vmatprep.subr.mxu0 0.0
    %1888 = vmatpush1.msra.mxu0 %v1875
    %1889 = vmatprep.subr.mxu0 0.0
    %1890 = vmatpush1.msra.mxu0 %v1876
    %1891 = vmatprep.subr.mxu0 0.0
    %1892 = vmatpush1.msra.mxu0 %v1877
    %1893 = vmatprep.subr.mxu0 0.0
    %1894 = vmatpush1.msra.mxu0 %v1878
    %1895 = vmatprep.subr.mxu0 0.0
    %1896 = vmatpush1.msra.mxu0 %v1879
    %1897 = vmatprep.subr.mxu0 0.0
    %1898 = vmatpush1.msra.mxu0 %v1880
    %1899 = vmatprep.subr.mxu0 0.0
    %1900 = vmatpush1.msra.mxu0 %v1881
    %1901 = vmatprep.subr.mxu0 0.0
    %1902 = vmatpush1.msra.mxu0 0.0
    %1903 = vmatprep.subr.mxu0 0.0
    %1904 = vmatpush1.msra.mxu0 0.0
    %1905 = vmatprep.subr.mxu0 0.0
    %1906 = vmatpush1.msra.mxu0 0.0
    %1907 = vmatprep.subr.mxu0 0.0
    %1908 = vmatpush1.msra.mxu0 0.0
    %1909 = vmatprep.subr.mxu0 0.0
    %1910 = vmatpush1.msra.mxu0 0.0
    %1911 = vmatprep.subr.mxu0 0.0
    %1912 = vmatpush1.msra.mxu0 0.0
    %1913 = vmatprep.subr.mxu0 0.0
    %1914 = vmatpush1.msra.mxu0 0.0
    %1915 = vmatprep.subr.mxu0 0.0
    %1916 = vmatpush1.msra.mxu0 0.0
    %1917 = vmatprep.subr.mxu0 0.0
    %1918 = vmatpush1.msra.mxu0 0.0
    %1919 = vmatprep.subr.mxu0 0.0
    %1920 = vmatpush1.msra.mxu0 0.0
    %1921 = vmatprep.subr.mxu0 0.0
    %1922 = vmatpush1.msra.mxu0 0.0
    %1923 = vmatprep.subr.mxu0 0.0
    %1924 = vmatpush1.msra.mxu0 0.0
    %1925 = vmatprep.subr.mxu0 0.0
    %1926 = vmatpush1.msra.mxu0 0.0
    %1927 = vmatprep.subr.mxu0 0.0
    %1928 = vmatpush1.msra.mxu0 0.0
    %1929 = vmatprep.subr.mxu0 0.0
    %1930 = vmatpush1.msra.mxu0 0.0
    %1931 = vmatprep.subr.mxu0 0.0
    %1932 = vmatpush1.msra.mxu0 0.0
    %1933 = vmatprep.subr.mxu0 0.0
    %1934 = vmatpush1.msra.mxu0 0.0
    %1935 = vmatprep.subr.mxu0 0.0
    %1936 = vmatpush1.msra.mxu0 0.0
    %1937 = vmatprep.subr.mxu0 0.0
    %1938 = vmatpush1.msra.mxu0 0.0
    %1939 = vmatprep.subr.mxu0 0.0
    %1940 = vmatpush1.msra.mxu0 0.0
    %1941 = vmatprep.subr.mxu0 0.0
    %1942 = vmatpush1.msra.mxu0 0.0
    %1943 = vmatprep.subr.mxu0 0.0
    %1944 = vmatpush1.msra.mxu0 0.0
    %1945 = vmatprep.subr.mxu0 0.0
    %1946 = vmatpush1.msra.mxu0 0.0
    %1947 = vmatprep.subr.mxu0 0.0
    %1948 = vmatpush1.msra.mxu0 0.0
    %1949 = vmatprep.mubr.f32.mxu0 0.0
    %1950 = vmatmul.mubr.f32.gmra.mrb[0].mxu0 %v1883
    %v1951 = vpop.f32.mrb[0].mxu0
    %v1952 = vadd.f32 0.0, %v1951
    %v1953 = vpop.f32.mrb[0].mxu0
    %1954 = vdwg.mxu0
    %v1955 = vadd.f32 %v1870, %v1952
    %s1956 = scalar_lea.vmem %s4, 3
    %v1957 = vld [vmem:[%s1956] sm:$0x1]
    %v1959 = vlaneseq
    %v1960 = vshrl.u32 %v1959, 7
    %v1961 = vsub.s32 0, %v1960
    %v1962 = vrot.slane %v1957, %v1961
    %v1964 = vadd.f32 %v1955, %v1962
    %1965 = vst.msk [vmem:[#allocation2] sm:$0xff] %vm58, %v1964
    %v1966 = vld [vmem:[#allocation2] ss:$2 sm:$0xf]
    %v1967 = vld [vmem:[%s283] ss:$2 sm:$0xf]
    %v1968 = vmax.f32 %v1966, %v1967
    %v1969 = vmax.f32 %v1968, 0.0
    %vm1970 = vcmask 519168
    %1971 = vst.msk [vmem:[#allocation3 + $0x1] sm:$0xf] %vm1970, %v1969
    %1972 = vst.msk [vmem:[#allocation3 + $0x5] sm:$0x1] %vm315, 0.0
    %vm1973 = vcmp.lt.s32.totalorder %v327, 0
    %v1974 = vsub.s32 0, %v327
    %v1975 = vsel %vm1973, %v1974, %v327
    %v1976 = vshrl.u32 %v1975, 1
    %v1977 = vand.u32 %v1975, 1
    %v1978 = vsub.s32 0, %v1977
    %v1979 = vsel %vm1973, %v1978, %v1977
    %vm1980 = vcmp.ne.s32.totalorder %v1979, 0
    %vm1981 = vcmp.lt.s32.totalorder %v1979, 0
    %vm1982 = vmand %vm1981, %vm1980
    %v1983 = vadd.s32 %v1979, 2
    %v1984 = vsel %vm1982, %v1983, %v1979
    %vm1985 = vcmp.eq.s32.totalorder %v1984, 0
    %v1986 = vld [vmem:[#allocation3] sm:$0xf]
    %v1987 = vsel %vm1985, 0.0, %v1986
    %vm1988 = vcmp.eq.s32.totalorder %v1984, 1
    %v1989 = vld [vmem:[#allocation3 + $0x2] sm:$0xf]
    %v1990 = vsel %vm1988, 0.0, %v1989
    %s1991 = scalar_lea.vmem %s3, 768
    %v1992 = vld [vmem:[%s1991] sm:$0xff]
    %v1993 = vld [vmem:[%s1991 + $0x8] sm:$0xff]
    %v1994 = vld [vmem:[%s1991 + $0x10] sm:$0xff]
    %v1995 = vld [vmem:[%s1991 + $0x18] sm:$0xff]
    %v1996 = vld [vmem:[%s1991 + $0x20] sm:$0xff]
    %v1997 = vld [vmem:[%s1991 + $0x28] sm:$0xff]
    %v1998 = vld [vmem:[%s1991 + $0x30] sm:$0xff]
    %v1999 = vld [vmem:[%s1991 + $0x38] sm:$0xff]
    %s2000 = scalar_lea.vmem %s3, 832
    %v2001 = vld [vmem:[%s2000] sm:$0xff]
    %v2002 = vld [vmem:[%s2000 + $0x8] sm:$0xff]
    %v2003 = vld [vmem:[%s2000 + $0x10] sm:$0xff]
    %v2004 = vld [vmem:[%s2000 + $0x18] sm:$0xff]
    %v2005 = vld [vmem:[%s2000 + $0x20] sm:$0xff]
    %v2006 = vld [vmem:[%s2000 + $0x28] sm:$0xff]
    %v2007 = vld [vmem:[%s2000 + $0x30] sm:$0xff]
    %v2008 = vld [vmem:[%s2000 + $0x38] sm:$0xff]
    %v2010 = vsel %vm58, %v1969, 0
    %2012 = vmatprep.subr.mxu0 0.0
    %2013 = vmatpush1.msra.mxu0 %v2001
    %2014 = vmatprep.subr.mxu0 0.0
    %2015 = vmatpush1.msra.mxu0 %v2002
    %2016 = vmatprep.subr.mxu0 0.0
    %2017 = vmatpush1.msra.mxu0 %v2003
    %2018 = vmatprep.subr.mxu0 0.0
    %2019 = vmatpush1.msra.mxu0 %v2004
    %2020 = vmatprep.subr.mxu0 0.0
    %2021 = vmatpush1.msra.mxu0 %v2005
    %2022 = vmatprep.subr.mxu0 0.0
    %2023 = vmatpush1.msra.mxu0 %v2006
    %2024 = vmatprep.subr.mxu0 0.0
    %2025 = vmatpush1.msra.mxu0 %v2007
    %2026 = vmatprep.subr.mxu0 0.0
    %2027 = vmatpush1.msra.mxu0 %v2008
    %2028 = vmatprep.subr.mxu0 0.0
    %2029 = vmatpush1.msra.mxu0 0.0
    %2030 = vmatprep.subr.mxu0 0.0
    %2031 = vmatpush1.msra.mxu0 0.0
    %2032 = vmatprep.subr.mxu0 0.0
    %2033 = vmatpush1.msra.mxu0 0.0
    %2034 = vmatprep.subr.mxu0 0.0
    %2035 = vmatpush1.msra.mxu0 0.0
    %2036 = vmatprep.subr.mxu0 0.0
    %2037 = vmatpush1.msra.mxu0 0.0
    %2038 = vmatprep.subr.mxu0 0.0
    %2039 = vmatpush1.msra.mxu0 0.0
    %2040 = vmatprep.subr.mxu0 0.0
    %2041 = vmatpush1.msra.mxu0 0.0
    %2042 = vmatprep.subr.mxu0 0.0
    %2043 = vmatpush1.msra.mxu0 0.0
    %2044 = vmatprep.subr.mxu0 0.0
    %2045 = vmatpush1.msra.mxu0 0.0
    %2046 = vmatprep.subr.mxu0 0.0
    %2047 = vmatpush1.msra.mxu0 0.0
    %2048 = vmatprep.subr.mxu0 0.0
    %2049 = vmatpush1.msra.mxu0 0.0
    %2050 = vmatprep.subr.mxu0 0.0
    %2051 = vmatpush1.msra.mxu0 0.0
    %2052 = vmatprep.subr.mxu0 0.0
    %2053 = vmatpush1.msra.mxu0 0.0
    %2054 = vmatprep.subr.mxu0 0.0
    %2055 = vmatpush1.msra.mxu0 0.0
    %2056 = vmatprep.subr.mxu0 0.0
    %2057 = vmatpush1.msra.mxu0 0.0
    %2058 = vmatprep.subr.mxu0 0.0
    %2059 = vmatpush1.msra.mxu0 0.0
    %2060 = vmatprep.subr.mxu0 0.0
    %2061 = vmatpush1.msra.mxu0 0.0
    %2062 = vmatprep.subr.mxu0 0.0
    %2063 = vmatpush1.msra.mxu0 0.0
    %2064 = vmatprep.subr.mxu0 0.0
    %2065 = vmatpush1.msra.mxu0 0.0
    %2066 = vmatprep.subr.mxu0 0.0
    %2067 = vmatpush1.msra.mxu0 0.0
    %2068 = vmatprep.subr.mxu0 0.0
    %2069 = vmatpush1.msra.mxu0 0.0
    %2070 = vmatprep.subr.mxu0 0.0
    %2071 = vmatpush1.msra.mxu0 0.0
    %2072 = vmatprep.subr.mxu0 0.0
    %2073 = vmatpush1.msra.mxu0 0.0
    %2074 = vmatprep.subr.mxu0 0.0
    %2075 = vmatpush1.msra.mxu0 0.0
    %2076 = vmatprep.mubr.f32.mxu0 0.0
    %2077 = vmatmul.mubr.f32.gmra.mrb[0].mxu0 %v2010
    %v2078 = vpop.f32.mrb[0].mxu0
    %v2079 = vadd.f32 0.0, %v2078
    %v2080 = vpop.f32.mrb[0].mxu0
    %2081 = vdwg.mxu0
    %v2083 = vsel %vm58, %v1987, 0
    %2085 = vmatprep.subr.mxu0 0.0
    %2086 = vmatpush1.msra.mxu0 %v1992
    %2087 = vmatprep.subr.mxu0 0.0
    %2088 = vmatpush1.msra.mxu0 %v1993
    %2089 = vmatprep.subr.mxu0 0.0
    %2090 = vmatpush1.msra.mxu0 %v1994
    %2091 = vmatprep.subr.mxu0 0.0
    %2092 = vmatpush1.msra.mxu0 %v1995
    %2093 = vmatprep.subr.mxu0 0.0
    %2094 = vmatpush1.msra.mxu0 %v1996
    %2095 = vmatprep.subr.mxu0 0.0
    %2096 = vmatpush1.msra.mxu0 %v1997
    %2097 = vmatprep.subr.mxu0 0.0
    %2098 = vmatpush1.msra.mxu0 %v1998
    %2099 = vmatprep.subr.mxu0 0.0
    %2100 = vmatpush1.msra.mxu0 %v1999
    %2101 = vmatprep.subr.mxu0 0.0
    %2102 = vmatpush1.msra.mxu0 0.0
    %2103 = vmatprep.subr.mxu0 0.0
    %2104 = vmatpush1.msra.mxu0 0.0
    %2105 = vmatprep.subr.mxu0 0.0
    %2106 = vmatpush1.msra.mxu0 0.0
    %2107 = vmatprep.subr.mxu0 0.0
    %2108 = vmatpush1.msra.mxu0 0.0
    %2109 = vmatprep.subr.mxu0 0.0
    %2110 = vmatpush1.msra.mxu0 0.0
    %2111 = vmatprep.subr.mxu0 0.0
    %2112 = vmatpush1.msra.mxu0 0.0
    %2113 = vmatprep.subr.mxu0 0.0
    %2114 = vmatpush1.msra.mxu0 0.0
    %2115 = vmatprep.subr.mxu0 0.0
    %2116 = vmatpush1.msra.mxu0 0.0
    %2117 = vmatprep.subr.mxu0 0.0
    %2118 = vmatpush1.msra.mxu0 0.0
    %2119 = vmatprep.subr.mxu0 0.0
    %2120 = vmatpush1.msra.mxu0 0.0
    %2121 = vmatprep.subr.mxu0 0.0
    %2122 = vmatpush1.msra.mxu0 0.0
    %2123 = vmatprep.subr.mxu0 0.0
    %2124 = vmatpush1.msra.mxu0 0.0
    %2125 = vmatprep.subr.mxu0 0.0
    %2126 = vmatpush1.msra.mxu0 0.0
    %2127 = vmatprep.subr.mxu0 0.0
    %2128 = vmatpush1.msra.mxu0 0.0
    %2129 = vmatprep.subr.mxu0 0.0
    %2130 = vmatpush1.msra.mxu0 0.0
    %2131 = vmatprep.subr.mxu0 0.0
    %2132 = vmatpush1.msra.mxu0 0.0
    %2133 = vmatprep.subr.mxu0 0.0
    %2134 = vmatpush1.msra.mxu0 0.0
    %2135 = vmatprep.subr.mxu0 0.0
    %2136 = vmatpush1.msra.mxu0 0.0
    %2137 = vmatprep.subr.mxu0 0.0
    %2138 = vmatpush1.msra.mxu0 0.0
    %2139 = vmatprep.subr.mxu0 0.0
    %2140 = vmatpush1.msra.mxu0 0.0
    %2141 = vmatprep.subr.mxu0 0.0
    %2142 = vmatpush1.msra.mxu0 0.0
    %2143 = vmatprep.subr.mxu0 0.0
    %2144 = vmatpush1.msra.mxu0 0.0
    %2145 = vmatprep.subr.mxu0 0.0
    %2146 = vmatpush1.msra.mxu0 0.0
    %2147 = vmatprep.subr.mxu0 0.0
    %2148 = vmatpush1.msra.mxu0 0.0
    %2149 = vmatprep.mubr.f32.mxu0 0.0
    %2150 = vmatmul.mubr.f32.gmra.mrb[0].mxu0 %v2083
    %v2151 = vpop.f32.mrb[0].mxu0
    %v2152 = vadd.f32 %v2079, %v2151
    %v2153 = vpop.f32.mrb[0].mxu0
    %2154 = vdwg.mxu0
    %s2155 = scalar_lea.vmem %s3, 896
    %v2156 = vld [vmem:[%s2155] sm:$0xff]
    %v2157 = vld [vmem:[%s2155 + $0x8] sm:$0xff]
    %v2158 = vld [vmem:[%s2155 + $0x10] sm:$0xff]
    %v2159 = vld [vmem:[%s2155 + $0x18] sm:$0xff]
    %v2160 = vld [vmem:[%s2155 + $0x20] sm:$0xff]
    %v2161 = vld [vmem:[%s2155 + $0x28] sm:$0xff]
    %v2162 = vld [vmem:[%s2155 + $0x30] sm:$0xff]
    %v2163 = vld [vmem:[%s2155 + $0x38] sm:$0xff]
    %v2165 = vsel %vm58, %v1990, 0
    %2167 = vmatprep.subr.mxu0 0.0
    %2168 = vmatpush1.msra.mxu0 %v2156
    %2169 = vmatprep.subr.mxu0 0.0
    %2170 = vmatpush1.msra.mxu0 %v2157
    %2171 = vmatprep.subr.mxu0 0.0
    %2172 = vmatpush1.msra.mxu0 %v2158
    %2173 = vmatprep.subr.mxu0 0.0
    %2174 = vmatpush1.msra.mxu0 %v2159
    %2175 = vmatprep.subr.mxu0 0.0
    %2176 = vmatpush1.msra.mxu0 %v2160
    %2177 = vmatprep.subr.mxu0 0.0
    %2178 = vmatpush1.msra.mxu0 %v2161
    %2179 = vmatprep.subr.mxu0 0.0
    %2180 = vmatpush1.msra.mxu0 %v2162
    %2181 = vmatprep.subr.mxu0 0.0
    %2182 = vmatpush1.msra.mxu0 %v2163
    %2183 = vmatprep.subr.mxu0 0.0
    %2184 = vmatpush1.msra.mxu0 0.0
    %2185 = vmatprep.subr.mxu0 0.0
    %2186 = vmatpush1.msra.mxu0 0.0
    %2187 = vmatprep.subr.mxu0 0.0
    %2188 = vmatpush1.msra.mxu0 0.0
    %2189 = vmatprep.subr.mxu0 0.0
    %2190 = vmatpush1.msra.mxu0 0.0
    %2191 = vmatprep.subr.mxu0 0.0
    %2192 = vmatpush1.msra.mxu0 0.0
    %2193 = vmatprep.subr.mxu0 0.0
    %2194 = vmatpush1.msra.mxu0 0.0
    %2195 = vmatprep.subr.mxu0 0.0
    %2196 = vmatpush1.msra.mxu0 0.0
    %2197 = vmatprep.subr.mxu0 0.0
    %2198 = vmatpush1.msra.mxu0 0.0
    %2199 = vmatprep.subr.mxu0 0.0
    %2200 = vmatpush1.msra.mxu0 0.0
    %2201 = vmatprep.subr.mxu0 0.0
    %2202 = vmatpush1.msra.mxu0 0.0
    %2203 = vmatprep.subr.mxu0 0.0
    %2204 = vmatpush1.msra.mxu0 0.0
    %2205 = vmatprep.subr.mxu0 0.0
    %2206 = vmatpush1.msra.mxu0 0.0
    %2207 = vmatprep.subr.mxu0 0.0
    %2208 = vmatpush1.msra.mxu0 0.0
    %2209 = vmatprep.subr.mxu0 0.0
    %2210 = vmatpush1.msra.mxu0 0.0
    %2211 = vmatprep.subr.mxu0 0.0
    %2212 = vmatpush1.msra.mxu0 0.0
    %2213 = vmatprep.subr.mxu0 0.0
    %2214 = vmatpush1.msra.mxu0 0.0
    %2215 = vmatprep.subr.mxu0 0.0
    %2216 = vmatpush1.msra.mxu0 0.0
    %2217 = vmatprep.subr.mxu0 0.0
    %2218 = vmatpush1.msra.mxu0 0.0
    %2219 = vmatprep.subr.mxu0 0.0
    %2220 = vmatpush1.msra.mxu0 0.0
    %2221 = vmatprep.subr.mxu0 0.0
    %2222 = vmatpush1.msra.mxu0 0.0
    %2223 = vmatprep.subr.mxu0 0.0
    %2224 = vmatpush1.msra.mxu0 0.0
    %2225 = vmatprep.subr.mxu0 0.0
    %2226 = vmatpush1.msra.mxu0 0.0
    %2227 = vmatprep.subr.mxu0 0.0
    %2228 = vmatpush1.msra.mxu0 0.0
    %2229 = vmatprep.subr.mxu0 0.0
    %2230 = vmatpush1.msra.mxu0 0.0
    %2231 = vmatprep.mubr.f32.mxu0 0.0
    %2232 = vmatmul.mubr.f32.gmra.mrb[0].mxu0 %v2165
    %v2233 = vpop.f32.mrb[0].mxu0
    %v2234 = vadd.f32 0.0, %v2233
    %v2235 = vpop.f32.mrb[0].mxu0
    %2236 = vdwg.mxu0
    %v2237 = vadd.f32 %v2152, %v2234
    %s2238 = scalar_lea.vmem %s4, 4
    %v2239 = vld [vmem:[%s2238] sm:$0x1]
    %v2241 = vlaneseq
    %v2242 = vshrl.u32 %v2241, 7
    %v2243 = vsub.s32 0, %v2242
    %v2244 = vrot.slane %v2239, %v2243
    %v2246 = vadd.f32 %v2237, %v2244
    %2247 = vst.msk [vmem:[#allocation2] sm:$0xf] %vm1970, %v2246
    %v2248 = vld [vmem:[#allocation2] ss:$2 sm:$0x3]
    %v2249 = vld [vmem:[%s283] ss:$2 sm:$0x3]
    %v2250 = vmax.f32 %v2248, %v2249
    %v2251 = vmax.f32 %v2250, 0.0
    %v2252 = vld [vmem:[%s5] sm:$0xff]
    %v2253 = vld [vmem:[%s5 + $0x8] sm:$0xff]
    %v2254 = vld [vmem:[%s5 + $0x10] sm:$0xff]
    %v2255 = vld [vmem:[%s5 + $0x18] sm:$0xff]
    %v2256 = vld [vmem:[%s5 + $0x20] sm:$0xff]
    %v2257 = vld [vmem:[%s5 + $0x28] sm:$0xff]
    %v2258 = vld [vmem:[%s5 + $0x30] sm:$0xff]
    %v2259 = vld [vmem:[%s5 + $0x38] sm:$0xff]
    %v2260 = vld [vmem:[%s6] sm:$0x1]
    %v2262 = vlaneseq
    %v2263 = vshrl.u32 %v2262, 7
    %v2264 = vsub.s32 0, %v2263
    %v2265 = vrot.slane %v2260, %v2264
    %v2268 = vsel %vm58, %v2251, 0
    %2270 = vmatprep.subr.mxu0 0.0
    %2271 = vmatpush1.msra.mxu0 %v2252
    %2272 = vmatprep.subr.mxu0 0.0
    %2273 = vmatpush1.msra.mxu0 %v2253
    %2274 = vmatprep.subr.mxu0 0.0
    %2275 = vmatpush1.msra.mxu0 %v2254
    %2276 = vmatprep.subr.mxu0 0.0
    %2277 = vmatpush1.msra.mxu0 %v2255
    %2278 = vmatprep.subr.mxu0 0.0
    %2279 = vmatpush1.msra.mxu0 %v2256
    %2280 = vmatprep.subr.mxu0 0.0
    %2281 = vmatpush1.msra.mxu0 %v2257
    %2282 = vmatprep.subr.mxu0 0.0
    %2283 = vmatpush1.msra.mxu0 %v2258
    %2284 = vmatprep.subr.mxu0 0.0
    %2285 = vmatpush1.msra.mxu0 %v2259
    %2286 = vmatprep.subr.mxu0 0.0
    %2287 = vmatpush1.msra.mxu0 0.0
    %2288 = vmatprep.subr.mxu0 0.0
    %2289 = vmatpush1.msra.mxu0 0.0
    %2290 = vmatprep.subr.mxu0 0.0
    %2291 = vmatpush1.msra.mxu0 0.0
    %2292 = vmatprep.subr.mxu0 0.0
    %2293 = vmatpush1.msra.mxu0 0.0
    %2294 = vmatprep.subr.mxu0 0.0
    %2295 = vmatpush1.msra.mxu0 0.0
    %2296 = vmatprep.subr.mxu0 0.0
    %2297 = vmatpush1.msra.mxu0 0.0
    %2298 = vmatprep.subr.mxu0 0.0
    %2299 = vmatpush1.msra.mxu0 0.0
    %2300 = vmatprep.subr.mxu0 0.0
    %2301 = vmatpush1.msra.mxu0 0.0
    %2302 = vmatprep.subr.mxu0 0.0
    %2303 = vmatpush1.msra.mxu0 0.0
    %2304 = vmatprep.subr.mxu0 0.0
    %2305 = vmatpush1.msra.mxu0 0.0
    %2306 = vmatprep.subr.mxu0 0.0
    %2307 = vmatpush1.msra.mxu0 0.0
    %2308 = vmatprep.subr.mxu0 0.0
    %2309 = vmatpush1.msra.mxu0 0.0
    %2310 = vmatprep.subr.mxu0 0.0
    %2311 = vmatpush1.msra.mxu0 0.0
    %2312 = vmatprep.subr.mxu0 0.0
    %2313 = vmatpush1.msra.mxu0 0.0
    %2314 = vmatprep.subr.mxu0 0.0
    %2315 = vmatpush1.msra.mxu0 0.0
    %2316 = vmatprep.subr.mxu0 0.0
    %2317 = vmatpush1.msra.mxu0 0.0
    %2318 = vmatprep.subr.mxu0 0.0
    %2319 = vmatpush1.msra.mxu0 0.0
    %2320 = vmatprep.subr.mxu0 0.0
    %2321 = vmatpush1.msra.mxu0 0.0
    %2322 = vmatprep.subr.mxu0 0.0
    %2323 = vmatpush1.msra.mxu0 0.0
    %2324 = vmatprep.subr.mxu0 0.0
    %2325 = vmatpush1.msra.mxu0 0.0
    %2326 = vmatprep.subr.mxu0 0.0
    %2327 = vmatpush1.msra.mxu0 0.0
    %2328 = vmatprep.subr.mxu0 0.0
    %2329 = vmatpush1.msra.mxu0 0.0
    %2330 = vmatprep.subr.mxu0 0.0
    %2331 = vmatpush1.msra.mxu0 0.0
    %2332 = vmatprep.subr.mxu0 0.0
    %2333 = vmatpush1.msra.mxu0 0.0
    %2334 = vmatprep.mubr.f32.mxu0 0.0
    %2335 = vmatmul.mubr.f32.gmra.mrb[0].mxu0 %v2268
    %v2336 = vpop.f32.mrb[0].mxu0
    %v2337 = vadd.f32 %v2265, %v2336
    %v2338 = vpop.f32.mrb[0].mxu0
    %2339 = vdwg.mxu0
    %2340 = vst [vmem:[#allocation4] sm:$0x3] %v2337
    // Predicated region
    $region30: #{wdcnn1_forward.1} parent=1 // pred_check
      _
    $region31: #{wdcnn1_forward.1} parent=1 // pred_check_branch
      %2342 = sbr.rel (0) target = $region33
    $region32: #{wdcnn1_forward.1} parent=1 // pred_region
      %s2344 = ssub.s32 32, 32
      %2345 = vsyncadd [#allocation5], %s2344
      %s2347 = sshll.u32 [#allocation4], 4
      %s2348 = int_to_ptr.vmem [resolvable:$true] %s2347
      %2350 = dma.vmem_to_hbm [thread:$0]  %s2348, 32, %s7, [#allocation5]
    $region33: #{wdcnn1_forward.1} parent=1 // pred_fallthru
      _
    // Predicated region
    $region34: #{wdcnn1_forward.1} parent=1 // pred_check
      _
    $region35: #{wdcnn1_forward.1} parent=1 // pred_check_branch
      %2352 = sbr.rel (0) target = $region37
    $region36: #{wdcnn1_forward.1} parent=1 // pred_region
      %2353 = dma.done [#allocation5], 32
    $region37: #{wdcnn1_forward.1} parent=1 // pred_fallthru
      _
    %2354 = vsyncpa [#allocation5], 1

</llo_original>
